<compile_context>
chip_gen: v7x
topology: tpu7x:2x2x1
jax: 0.10.0
libtpu: 0.0.40
codegen_flags: <defaults>
</compile_context>

<pallas_src>
import functools

import jax
import jax.numpy as jnp
from jax.experimental import pallas as pl
from jax.experimental.pallas import tpu as pltpu


def _vmem_limit_bytes():
    """~75% of the chip's physical VMEM (headroom for compiler scratch / buffers)."""
    try:
        info = pltpu.get_tpu_info()
        cap = getattr(info, "vmem_capacity_bytes", None)
        if cap:
            return int(int(cap) * 3 // 4)
    except Exception:
        pass
    return 48 * 1024 * 1024  # safe default (fits v7x's 64 MiB physical VMEM)


# --------------------------------------------------------------------------
# Fused conv(kh x kw, stride 1, pad p, no bias) + InstanceNorm2d + LeakyReLU(0.2)
# for one batch image per grid step.  Flat-spatial (H*W, C) in / (Ho*Wo, C) out.
# --------------------------------------------------------------------------

def _fused_layer_kernel(x_ref, w_ref, o_ref, col_ref, *,
                        hin, win, cin, cout, kh, kw, pad, eps, slope):
    """x_ref   : (hin*win, cin)      bf16  flat-spatial input (channels last)
       w_ref   : (kh*kw*cin, cout)   bf16  weights, rows ordered (di, dj, cin)
       o_ref   : (ho*wo, cout)       bf16  flat-spatial output
       col_ref : (ho*wo, kh*kw*cin)  bf16  VMEM im2col scratch
    """
    ho = hin + 2 * pad - kh + 1
    wo = win + 2 * pad - kw + 1

    # ---- build im2col in VMEM; zero first so clipped (zero-padded) taps read 0.
    if pad > 0:
        col_ref[...] = jnp.zeros_like(col_ref)
    for t in range(ho):                       # output row   (static)
        for di in range(kh):                  # kernel row   (static)
            r = t + di - pad                  # input row
            if r < 0 or r >= hin:
                continue                      # whole row falls in the zero pad
            for dj in range(kw):              # kernel col   (static)
                c0 = dj - pad                 # input col for output col 0
                lo = max(0, c0)
                hi = min(win, c0 + wo)
                if hi <= lo:
                    continue
                n = hi - lo
                col_ref[pl.ds(t * wo + (lo - c0), n),
                        pl.ds((di * kw + dj) * cin, cin)] = \
                    x_ref[pl.ds(r * win + lo, n), :]

    # ---- single MXU matmul: (ho*wo, kh*kw*cin) x (kh*kw*cin, cout) -> f32 acc
    acc = jnp.dot(col_ref[...], w_ref[...], preferred_element_type=jnp.float32)

    # ---- InstanceNorm2d (biased variance, eps) + LeakyReLU(slope), f32 stats
    inv_hw = 1.0 / (ho * wo)
    mean = jnp.sum(acc, axis=0, keepdims=True) * inv_hw
    cent = acc - mean
    var = jnp.sum(cent * cent, axis=0, keepdims=True) * inv_hw
    y = cent * jax.lax.rsqrt(var + eps)
    y = jnp.where(y > 0, y, slope * y)
    o_ref[...] = y.astype(o_ref.dtype)


def fused_conv_in_lrelu(x_flat, w_flat, *, hin, win, cin, cout, kh, kw, pad):
    """x_flat: (N, hin*win, cin) bf16, w_flat: (kh*kw*cin, cout) bf16.
    Returns (N, ho*wo, cout) bf16 = LeakyReLU(InstanceNorm(conv(x, w)))."""
    N = x_flat.shape[0]
    assert x_flat.shape == (N, hin * win, cin), x_flat.shape
    assert w_flat.shape == (kh * kw * cin, cout), w_flat.shape
    ho = hin + 2 * pad - kh + 1
    wo = win + 2 * pad - kw + 1
    assert ho >= 1 and wo >= 1

    kernel = functools.partial(_fused_layer_kernel, hin=hin, win=win, cin=cin,
                               cout=cout, kh=kh, kw=kw, pad=pad,
                               eps=1e-5, slope=0.2)
    return pl.pallas_call(
        kernel,
        out_shape=jax.ShapeDtypeStruct((N, ho * wo, cout), jnp.bfloat16),
        grid_spec=pltpu.PrefetchScalarGridSpec(
            num_scalar_prefetch=0,
            grid=(N,),  # >= 2 grid steps at N=2 -> both v7x TensorCores busy
            in_specs=[
                pl.BlockSpec((None, hin * win, cin), lambda n: (n, 0, 0)),
                pl.BlockSpec((kh * kw * cin, cout), lambda n: (0, 0)),
            ],
            out_specs=pl.BlockSpec((None, ho * wo, cout), lambda n: (n, 0, 0)),
            scratch_shapes=[pltpu.VMEM((ho * wo, kh * kw * cin), jnp.bfloat16)],
        ),
        compiler_params=pltpu.CompilerParams(
            dimension_semantics=("parallel",),
            vmem_limit_bytes=_vmem_limit_bytes()),
    )(x_flat, w_flat)


# --------------------------------------------------------------------------
# Weight preparation (tap-major (di, dj) then input-channel, matching im2col).
# --------------------------------------------------------------------------

def _prep_w_s2_4x4(w_oihw):
    """(Cout, Cin, 4, 4) stride-2 weights -> (2*2*4*Cin, Cout) flat weights for
    the equivalent 2x2 stride-1 conv on the space-to-depth input (channel order
    = (row parity, col parity, Cin))."""
    cout, cin = w_oihw.shape[0], w_oihw.shape[1]
    w = jnp.transpose(w_oihw, (2, 3, 1, 0))            # (4,4,Cin,Cout)  HWIO
    w = w.reshape(2, 2, 2, 2, cin, cout)               # (di, pr, dj, pc, c, co)
    w = w.transpose(0, 2, 1, 3, 4, 5)                  # (di, dj, pr, pc, c, co)
    return w.reshape(4 * 4 * cin, cout).astype(jnp.bfloat16)


def _prep_w_3x3(w_oihw):
    """(Cout, Cin, 3, 3) -> (9*Cin, Cout), rows ordered (di, dj, cin)."""
    cout, cin = w_oihw.shape[0], w_oihw.shape[1]
    w = jnp.transpose(w_oihw, (2, 3, 1, 0))            # (3,3,Cin,Cout)  HWIO
    return w.reshape(9 * cin, cout).astype(jnp.bfloat16)


# --------------------------------------------------------------------------
# Trans_UNetDown forward
# --------------------------------------------------------------------------

def init_params(key, in_size=4, out_size=32):
    k1, k2, k3 = jax.random.split(key, 3)
    s = 0.05
    return {
        "w1": s * jax.random.normal(k1, (out_size, in_size, 4, 4), jnp.float32),
        "w2": s * jax.random.normal(k2, (out_size, out_size, 3, 3), jnp.float32),
        "w3": s * jax.random.normal(k3, (out_size, out_size, 3, 3), jnp.float32),
    }


def trans_unet_down_forward(params, x_nchw):
    x = jnp.transpose(x_nchw, (0, 2, 3, 1))            # NCHW -> NHWC (f32)
    N, H, W, cin = x.shape
    cout = params["w1"].shape[0]
    assert H % 2 == 0 and W % 2 == 0, "spatial dims must be even for the stride-2 conv"

    # -- layer 1: Conv2d(cin, cout, 4, 2, 1) as 2x2/s1/p0 on a space-to-depth
    #    input.  The pad + parity gather stays in XLA (Cin=4 -> negligible).
    xp = jnp.pad(x, ((0, 0), (1, 1), (1, 1), (0, 0)))
    hs, ws = (H + 2) // 2, (W + 2) // 2
    xs = xp.reshape(N, hs, 2, ws, 2, cin).transpose(0, 1, 3, 2, 4, 5)
    xs = xs.reshape(N, hs * ws, 4 * cin).astype(jnp.bfloat16)
    h = fused_conv_in_lrelu(xs, _prep_w_s2_4x4(params["w1"]),
                            hin=hs, win=ws, cin=4 * cin, cout=cout,
                            kh=2, kw=2, pad=0)
    ho, wo = hs - 1, ws - 1                             # == H//2, W//2

    # -- layers 2 & 3: Conv2d(cout, cout, 3, 1, 1) + IN + LReLU, fully fused,
    #    flat (N, H*W, C) bf16 activations between the pallas_calls (no pads,
    #    no transposes, no separate normalization pass).
    h = fused_conv_in_lrelu(h, _prep_w_3x3(params["w2"]),
                            hin=ho, win=wo, cin=cout, cout=cout, kh=3, kw=3, pad=1)
    h = fused_conv_in_lrelu(h, _prep_w_3x3(params["w3"]),
                            hin=ho, win=wo, cin=cout, cout=cout, kh=3, kw=3, pad=1)

    h = h.reshape(N, ho, wo, cout)
    return jnp.transpose(h, (0, 3, 1, 2)).astype(jnp.float32)   # NHWC -> NCHW


# f32 pure-JAX reference (same math, no Pallas) for a sanity check.
def _reference_forward(params, x_nchw):
    x = jnp.transpose(x_nchw, (0, 2, 3, 1)).astype(jnp.float32)

    def conv(h, w_oihw, stride, pad):
        return jax.lax.conv_general_dilated(
            h, w_oihw, window_strides=(stride, stride),
            padding=[(pad, pad), (pad, pad)],
            dimension_numbers=("NHWC", "OIHW", "NHWC"))

    def in_lrelu(h):
        mean = jnp.mean(h, axis=(1, 2), keepdims=True)
        var = jnp.mean((h - mean) ** 2, axis=(1, 2), keepdims=True)
        y = (h - mean) * jax.lax.rsqrt(var + 1e-5)
        return jnp.where(y > 0, y, 0.2 * y)

    x = in_lrelu(conv(x, params["w1"], 2, 1))
    x = in_lrelu(conv(x, params["w2"], 1, 1))
    x = in_lrelu(conv(x, params["w3"], 1, 1))
    return jnp.transpose(x, (0, 3, 1, 2))


if __name__ == "__main__":
    key = jax.random.PRNGKey(0)
    pkey, xkey = jax.random.split(key)

    in_size, out_size = 4, 32
    params = init_params(pkey, in_size=in_size, out_size=out_size)
    x = jax.random.normal(xkey, (2, in_size, 16, 16), jnp.float32)  # NCHW

    fwd = jax.jit(trans_unet_down_forward)
    out = jax.block_until_ready(fwd(params, x))

    assert out.shape == (2, out_size, 8, 8), out.shape
    assert bool(jnp.all(jnp.isfinite(out))), "non-finite output"

    ref = jax.block_until_ready(jax.jit(_reference_forward)(params, x))
    err = float(jnp.max(jnp.abs(out - ref)))
    assert err < 0.5, f"mismatch vs f32 reference: max abs err = {err}"

    print("KERNEL_OK")
</pallas_src>

<mosaic_0001>
module attributes {stable_mosaic.version = 11 : i64} {
  func.func @_fused_layer_kernel(%arg0: i32, %arg1: memref<1x81x16xbf16, #tpu.memory_space<vmem>>, %arg2: memref<64x32xbf16, #tpu.memory_space<vmem>>, %arg3: memref<1x64x32xbf16, #tpu.memory_space<vmem>>, %arg4: memref<64x64xbf16, #tpu.memory_space<vmem>>) attributes {dimension_semantics = [#tpu.dimension_semantics<parallel>], iteration_bounds = array<i64: 2>, scalar_prefetch = 0 : i64, scratch_operands = 1 : i64, tpu.core_type = #tpu.core_type<tc>, window_params = [{transform_indices = @transform_0, window_bounds = array<i64: 1, 81, 16>}, {pipeline_mode = #tpu.pipeline_mode<synchronous>, transform_indices = @transform_1, window_bounds = array<i64: 64, 32>}, {transform_indices = @transform_2, window_bounds = array<i64: 1, 64, 32>}]} {
    %c0 = arith.constant 0 : index
    %c0_0 = arith.constant 0 : index
    %c0_1 = arith.constant 0 : index
    %0 = vector.load %arg1[%c0, %c0_0, %c0_1] : memref<1x81x16xbf16, #tpu.memory_space<vmem>>, vector<1x8x16xbf16>
    %1 = vector.shape_cast %0 : vector<1x8x16xbf16> to vector<8x16xbf16>
    %c0_2 = arith.constant 0 : index
    %c0_3 = arith.constant 0 : index
    %2 = vector.load %arg4[%c0_2, %c0_3] : memref<64x64xbf16, #tpu.memory_space<vmem>>, vector<8x16xbf16>
    tpu.vector_store %arg4[%c0_2, %c0_3], %1 {strides = array<i32>} : memref<64x64xbf16, #tpu.memory_space<vmem>>, vector<8x16xbf16>,
    %c0_4 = arith.constant 0 : index
    %c1 = arith.constant 1 : index
    %c0_5 = arith.constant 0 : index
    %3 = vector.load %arg1[%c0_4, %c1, %c0_5] : memref<1x81x16xbf16, #tpu.memory_space<vmem>>, vector<1x8x16xbf16>
    %4 = vector.shape_cast %3 : vector<1x8x16xbf16> to vector<8x16xbf16>
    %c0_6 = arith.constant 0 : index
    %c16 = arith.constant 16 : index
    %5 = vector.load %arg4[%c0_6, %c16] : memref<64x64xbf16, #tpu.memory_space<vmem>>, vector<8x16xbf16>
    tpu.vector_store %arg4[%c0_6, %c16], %4 {strides = array<i32>} : memref<64x64xbf16, #tpu.memory_space<vmem>>, vector<8x16xbf16>,
    %c0_7 = arith.constant 0 : index
    %c9 = arith.constant 9 : index
    %c0_8 = arith.constant 0 : index
    %6 = vector.load %arg1[%c0_7, %c9, %c0_8] : memref<1x81x16xbf16, #tpu.memory_space<vmem>>, vector<1x8x16xbf16>
    %7 = vector.shape_cast %6 : vector<1x8x16xbf16> to vector<8x16xbf16>
    %c0_9 = arith.constant 0 : index
    %c32 = arith.constant 32 : index
    %8 = vector.load %arg4[%c0_9, %c32] : memref<64x64xbf16, #tpu.memory_space<vmem>>, vector<8x16xbf16>
    tpu.vector_store %arg4[%c0_9, %c32], %7 {strides = array<i32>} : memref<64x64xbf16, #tpu.memory_space<vmem>>, vector<8x16xbf16>,
    %c0_10 = arith.constant 0 : index
    %c10 = arith.constant 10 : index
    %c0_11 = arith.constant 0 : index
    %9 = vector.load %arg1[%c0_10, %c10, %c0_11] : memref<1x81x16xbf16, #tpu.memory_space<vmem>>, vector<1x8x16xbf16>
    %10 = vector.shape_cast %9 : vector<1x8x16xbf16> to vector<8x16xbf16>
    %c0_12 = arith.constant 0 : index
    %c48 = arith.constant 48 : index
    %11 = vector.load %arg4[%c0_12, %c48] : memref<64x64xbf16, #tpu.memory_space<vmem>>, vector<8x16xbf16>
    tpu.vector_store %arg4[%c0_12, %c48], %10 {strides = array<i32>} : memref<64x64xbf16, #tpu.memory_space<vmem>>, vector<8x16xbf16>,
    %c0_13 = arith.constant 0 : index
    %c9_14 = arith.constant 9 : index
    %c0_15 = arith.constant 0 : index
    %12 = vector.load %arg1[%c0_13, %c9_14, %c0_15] : memref<1x81x16xbf16, #tpu.memory_space<vmem>>, vector<1x8x16xbf16>
    %13 = vector.shape_cast %12 : vector<1x8x16xbf16> to vector<8x16xbf16>
    %c8 = arith.constant 8 : index
    %c0_16 = arith.constant 0 : index
    %14 = vector.load %arg4[%c8, %c0_16] : memref<64x64xbf16, #tpu.memory_space<vmem>>, vector<8x16xbf16>
    tpu.vector_store %arg4[%c8, %c0_16], %13 {strides = array<i32>} : memref<64x64xbf16, #tpu.memory_space<vmem>>, vector<8x16xbf16>,
    %c0_17 = arith.constant 0 : index
    %c10_18 = arith.constant 10 : index
    %c0_19 = arith.constant 0 : index
    %15 = vector.load %arg1[%c0_17, %c10_18, %c0_19] : memref<1x81x16xbf16, #tpu.memory_space<vmem>>, vector<1x8x16xbf16>
    %16 = vector.shape_cast %15 : vector<1x8x16xbf16> to vector<8x16xbf16>
    %c8_20 = arith.constant 8 : index
    %c16_21 = arith.constant 16 : index
    %17 = vector.load %arg4[%c8_20, %c16_21] : memref<64x64xbf16, #tpu.memory_space<vmem>>, vector<8x16xbf16>
    tpu.vector_store %arg4[%c8_20, %c16_21], %16 {strides = array<i32>} : memref<64x64xbf16, #tpu.memory_space<vmem>>, vector<8x16xbf16>,
    %c0_22 = arith.constant 0 : index
    %c18 = arith.constant 18 : index
    %c0_23 = arith.constant 0 : index
    %18 = vector.load %arg1[%c0_22, %c18, %c0_23] : memref<1x81x16xbf16, #tpu.memory_space<vmem>>, vector<1x8x16xbf16>
    %19 = vector.shape_cast %18 : vector<1x8x16xbf16> to vector<8x16xbf16>
    %c8_24 = arith.constant 8 : index
    %c32_25 = arith.constant 32 : index
    %20 = vector.load %arg4[%c8_24, %c32_25] : memref<64x64xbf16, #tpu.memory_space<vmem>>, vector<8x16xbf16>
    tpu.vector_store %arg4[%c8_24, %c32_25], %19 {strides = array<i32>} : memref<64x64xbf16, #tpu.memory_space<vmem>>, vector<8x16xbf16>,
    %c0_26 = arith.constant 0 : index
    %c19 = arith.constant 19 : index
    %c0_27 = arith.constant 0 : index
    %21 = vector.load %arg1[%c0_26, %c19, %c0_27] : memref<1x81x16xbf16, #tpu.memory_space<vmem>>, vector<1x8x16xbf16>
    %22 = vector.shape_cast %21 : vector<1x8x16xbf16> to vector<8x16xbf16>
    %c8_28 = arith.constant 8 : index
    %c48_29 = arith.constant 48 : index
    %23 = vector.load %arg4[%c8_28, %c48_29] : memref<64x64xbf16, #tpu.memory_space<vmem>>, vector<8x16xbf16>
    tpu.vector_store %arg4[%c8_28, %c48_29], %22 {strides = array<i32>} : memref<64x64xbf16, #tpu.memory_space<vmem>>, vector<8x16xbf16>,
    %c0_30 = arith.constant 0 : index
    %c18_31 = arith.constant 18 : index
    %c0_32 = arith.constant 0 : index
    %24 = vector.load %arg1[%c0_30, %c18_31, %c0_32] : memref<1x81x16xbf16, #tpu.memory_space<vmem>>, vector<1x8x16xbf16>
    %25 = vector.shape_cast %24 : vector<1x8x16xbf16> to vector<8x16xbf16>
    %c16_33 = arith.constant 16 : index
    %c0_34 = arith.constant 0 : index
    %26 = vector.load %arg4[%c16_33, %c0_34] : memref<64x64xbf16, #tpu.memory_space<vmem>>, vector<8x16xbf16>
    tpu.vector_store %arg4[%c16_33, %c0_34], %25 {strides = array<i32>} : memref<64x64xbf16, #tpu.memory_space<vmem>>, vector<8x16xbf16>,
    %c0_35 = arith.constant 0 : index
    %c19_36 = arith.constant 19 : index
    %c0_37 = arith.constant 0 : index
    %27 = vector.load %arg1[%c0_35, %c19_36, %c0_37] : memref<1x81x16xbf16, #tpu.memory_space<vmem>>, vector<1x8x16xbf16>
    %28 = vector.shape_cast %27 : vector<1x8x16xbf16> to vector<8x16xbf16>
    %c16_38 = arith.constant 16 : index
    %c16_39 = arith.constant 16 : index
    %29 = vector.load %arg4[%c16_38, %c16_39] : memref<64x64xbf16, #tpu.memory_space<vmem>>, vector<8x16xbf16>
    tpu.vector_store %arg4[%c16_38, %c16_39], %28 {strides = array<i32>} : memref<64x64xbf16, #tpu.memory_space<vmem>>, vector<8x16xbf16>,
    %c0_40 = arith.constant 0 : index
    %c27 = arith.constant 27 : index
    %c0_41 = arith.constant 0 : index
    %30 = vector.load %arg1[%c0_40, %c27, %c0_41] : memref<1x81x16xbf16, #tpu.memory_space<vmem>>, vector<1x8x16xbf16>
    %31 = vector.shape_cast %30 : vector<1x8x16xbf16> to vector<8x16xbf16>
    %c16_42 = arith.constant 16 : index
    %c32_43 = arith.constant 32 : index
    %32 = vector.load %arg4[%c16_42, %c32_43] : memref<64x64xbf16, #tpu.memory_space<vmem>>, vector<8x16xbf16>
    tpu.vector_store %arg4[%c16_42, %c32_43], %31 {strides = array<i32>} : memref<64x64xbf16, #tpu.memory_space<vmem>>, vector<8x16xbf16>,
    %c0_44 = arith.constant 0 : index
    %c28 = arith.constant 28 : index
    %c0_45 = arith.constant 0 : index
    %33 = vector.load %arg1[%c0_44, %c28, %c0_45] : memref<1x81x16xbf16, #tpu.memory_space<vmem>>, vector<1x8x16xbf16>
    %34 = vector.shape_cast %33 : vector<1x8x16xbf16> to vector<8x16xbf16>
    %c16_46 = arith.constant 16 : index
    %c48_47 = arith.constant 48 : index
    %35 = vector.load %arg4[%c16_46, %c48_47] : memref<64x64xbf16, #tpu.memory_space<vmem>>, vector<8x16xbf16>
    tpu.vector_store %arg4[%c16_46, %c48_47], %34 {strides = array<i32>} : memref<64x64xbf16, #tpu.memory_space<vmem>>, vector<8x16xbf16>,
    %c0_48 = arith.constant 0 : index
    %c27_49 = arith.constant 27 : index
    %c0_50 = arith.constant 0 : index
    %36 = vector.load %arg1[%c0_48, %c27_49, %c0_50] : memref<1x81x16xbf16, #tpu.memory_space<vmem>>, vector<1x8x16xbf16>
    %37 = vector.shape_cast %36 : vector<1x8x16xbf16> to vector<8x16xbf16>
    %c24 = arith.constant 24 : index
    %c0_51 = arith.constant 0 : index
    %38 = vector.load %arg4[%c24, %c0_51] : memref<64x64xbf16, #tpu.memory_space<vmem>>, vector<8x16xbf16>
    tpu.vector_store %arg4[%c24, %c0_51], %37 {strides = array<i32>} : memref<64x64xbf16, #tpu.memory_space<vmem>>, vector<8x16xbf16>,
    %c0_52 = arith.constant 0 : index
    %c28_53 = arith.constant 28 : index
    %c0_54 = arith.constant 0 : index
    %39 = vector.load %arg1[%c0_52, %c28_53, %c0_54] : memref<1x81x16xbf16, #tpu.memory_space<vmem>>, vector<1x8x16xbf16>
    %40 = vector.shape_cast %39 : vector<1x8x16xbf16> to vector<8x16xbf16>
    %c24_55 = arith.constant 24 : index
    %c16_56 = arith.constant 16 : index
    %41 = vector.load %arg4[%c24_55, %c16_56] : memref<64x64xbf16, #tpu.memory_space<vmem>>, vector<8x16xbf16>
    tpu.vector_store %arg4[%c24_55, %c16_56], %40 {strides = array<i32>} : memref<64x64xbf16, #tpu.memory_space<vmem>>, vector<8x16xbf16>,
    %c0_57 = arith.constant 0 : index
    %c36 = arith.constant 36 : index
    %c0_58 = arith.constant 0 : index
    %42 = vector.load %arg1[%c0_57, %c36, %c0_58] : memref<1x81x16xbf16, #tpu.memory_space<vmem>>, vector<1x8x16xbf16>
    %43 = vector.shape_cast %42 : vector<1x8x16xbf16> to vector<8x16xbf16>
    %c24_59 = arith.constant 24 : index
    %c32_60 = arith.constant 32 : index
    %44 = vector.load %arg4[%c24_59, %c32_60] : memref<64x64xbf16, #tpu.memory_space<vmem>>, vector<8x16xbf16>
    tpu.vector_store %arg4[%c24_59, %c32_60], %43 {strides = array<i32>} : memref<64x64xbf16, #tpu.memory_space<vmem>>, vector<8x16xbf16>,
    %c0_61 = arith.constant 0 : index
    %c37 = arith.constant 37 : index
    %c0_62 = arith.constant 0 : index
    %45 = vector.load %arg1[%c0_61, %c37, %c0_62] : memref<1x81x16xbf16, #tpu.memory_space<vmem>>, vector<1x8x16xbf16>
    %46 = vector.shape_cast %45 : vector<1x8x16xbf16> to vector<8x16xbf16>
    %c24_63 = arith.constant 24 : index
    %c48_64 = arith.constant 48 : index
    %47 = vector.load %arg4[%c24_63, %c48_64] : memref<64x64xbf16, #tpu.memory_space<vmem>>, vector<8x16xbf16>
    tpu.vector_store %arg4[%c24_63, %c48_64], %46 {strides = array<i32>} : memref<64x64xbf16, #tpu.memory_space<vmem>>, vector<8x16xbf16>,
    %c0_65 = arith.constant 0 : index
    %c36_66 = arith.constant 36 : index
    %c0_67 = arith.constant 0 : index
    %48 = vector.load %arg1[%c0_65, %c36_66, %c0_67] : memref<1x81x16xbf16, #tpu.memory_space<vmem>>, vector<1x8x16xbf16>
    %49 = vector.shape_cast %48 : vector<1x8x16xbf16> to vector<8x16xbf16>
    %c32_68 = arith.constant 32 : index
    %c0_69 = arith.constant 0 : index
    %50 = vector.load %arg4[%c32_68, %c0_69] : memref<64x64xbf16, #tpu.memory_space<vmem>>, vector<8x16xbf16>
    tpu.vector_store %arg4[%c32_68, %c0_69], %49 {strides = array<i32>} : memref<64x64xbf16, #tpu.memory_space<vmem>>, vector<8x16xbf16>,
    %c0_70 = arith.constant 0 : index
    %c37_71 = arith.constant 37 : index
    %c0_72 = arith.constant 0 : index
    %51 = vector.load %arg1[%c0_70, %c37_71, %c0_72] : memref<1x81x16xbf16, #tpu.memory_space<vmem>>, vector<1x8x16xbf16>
    %52 = vector.shape_cast %51 : vector<1x8x16xbf16> to vector<8x16xbf16>
    %c32_73 = arith.constant 32 : index
    %c16_74 = arith.constant 16 : index
    %53 = vector.load %arg4[%c32_73, %c16_74] : memref<64x64xbf16, #tpu.memory_space<vmem>>, vector<8x16xbf16>
    tpu.vector_store %arg4[%c32_73, %c16_74], %52 {strides = array<i32>} : memref<64x64xbf16, #tpu.memory_space<vmem>>, vector<8x16xbf16>,
    %c0_75 = arith.constant 0 : index
    %c45 = arith.constant 45 : index
    %c0_76 = arith.constant 0 : index
    %54 = vector.load %arg1[%c0_75, %c45, %c0_76] : memref<1x81x16xbf16, #tpu.memory_space<vmem>>, vector<1x8x16xbf16>
    %55 = vector.shape_cast %54 : vector<1x8x16xbf16> to vector<8x16xbf16>
    %c32_77 = arith.constant 32 : index
    %c32_78 = arith.constant 32 : index
    %56 = vector.load %arg4[%c32_77, %c32_78] : memref<64x64xbf16, #tpu.memory_space<vmem>>, vector<8x16xbf16>
    tpu.vector_store %arg4[%c32_77, %c32_78], %55 {strides = array<i32>} : memref<64x64xbf16, #tpu.memory_space<vmem>>, vector<8x16xbf16>,
    %c0_79 = arith.constant 0 : index
    %c46 = arith.constant 46 : index
    %c0_80 = arith.constant 0 : index
    %57 = vector.load %arg1[%c0_79, %c46, %c0_80] : memref<1x81x16xbf16, #tpu.memory_space<vmem>>, vector<1x8x16xbf16>
    %58 = vector.shape_cast %57 : vector<1x8x16xbf16> to vector<8x16xbf16>
    %c32_81 = arith.constant 32 : index
    %c48_82 = arith.constant 48 : index
    %59 = vector.load %arg4[%c32_81, %c48_82] : memref<64x64xbf16, #tpu.memory_space<vmem>>, vector<8x16xbf16>
    tpu.vector_store %arg4[%c32_81, %c48_82], %58 {strides = array<i32>} : memref<64x64xbf16, #tpu.memory_space<vmem>>, vector<8x16xbf16>,
    %c0_83 = arith.constant 0 : index
    %c45_84 = arith.constant 45 : index
    %c0_85 = arith.constant 0 : index
    %60 = vector.load %arg1[%c0_83, %c45_84, %c0_85] : memref<1x81x16xbf16, #tpu.memory_space<vmem>>, vector<1x8x16xbf16>
    %61 = vector.shape_cast %60 : vector<1x8x16xbf16> to vector<8x16xbf16>
    %c40 = arith.constant 40 : index
    %c0_86 = arith.constant 0 : index
    %62 = vector.load %arg4[%c40, %c0_86] : memref<64x64xbf16, #tpu.memory_space<vmem>>, vector<8x16xbf16>
    tpu.vector_store %arg4[%c40, %c0_86], %61 {strides = array<i32>} : memref<64x64xbf16, #tpu.memory_space<vmem>>, vector<8x16xbf16>,
    %c0_87 = arith.constant 0 : index
    %c46_88 = arith.constant 46 : index
    %c0_89 = arith.constant 0 : index
    %63 = vector.load %arg1[%c0_87, %c46_88, %c0_89] : memref<1x81x16xbf16, #tpu.memory_space<vmem>>, vector<1x8x16xbf16>
    %64 = vector.shape_cast %63 : vector<1x8x16xbf16> to vector<8x16xbf16>
    %c40_90 = arith.constant 40 : index
    %c16_91 = arith.constant 16 : index
    %65 = vector.load %arg4[%c40_90, %c16_91] : memref<64x64xbf16, #tpu.memory_space<vmem>>, vector<8x16xbf16>
    tpu.vector_store %arg4[%c40_90, %c16_91], %64 {strides = array<i32>} : memref<64x64xbf16, #tpu.memory_space<vmem>>, vector<8x16xbf16>,
    %c0_92 = arith.constant 0 : index
    %c54 = arith.constant 54 : index
    %c0_93 = arith.constant 0 : index
    %66 = vector.load %arg1[%c0_92, %c54, %c0_93] : memref<1x81x16xbf16, #tpu.memory_space<vmem>>, vector<1x8x16xbf16>
    %67 = vector.shape_cast %66 : vector<1x8x16xbf16> to vector<8x16xbf16>
    %c40_94 = arith.constant 40 : index
    %c32_95 = arith.constant 32 : index
    %68 = vector.load %arg4[%c40_94, %c32_95] : memref<64x64xbf16, #tpu.memory_space<vmem>>, vector<8x16xbf16>
    tpu.vector_store %arg4[%c40_94, %c32_95], %67 {strides = array<i32>} : memref<64x64xbf16, #tpu.memory_space<vmem>>, vector<8x16xbf16>,
    %c0_96 = arith.constant 0 : index
    %c55 = arith.constant 55 : index
    %c0_97 = arith.constant 0 : index
    %69 = vector.load %arg1[%c0_96, %c55, %c0_97] : memref<1x81x16xbf16, #tpu.memory_space<vmem>>, vector<1x8x16xbf16>
    %70 = vector.shape_cast %69 : vector<1x8x16xbf16> to vector<8x16xbf16>
    %c40_98 = arith.constant 40 : index
    %c48_99 = arith.constant 48 : index
    %71 = vector.load %arg4[%c40_98, %c48_99] : memref<64x64xbf16, #tpu.memory_space<vmem>>, vector<8x16xbf16>
    tpu.vector_store %arg4[%c40_98, %c48_99], %70 {strides = array<i32>} : memref<64x64xbf16, #tpu.memory_space<vmem>>, vector<8x16xbf16>,
    %c0_100 = arith.constant 0 : index
    %c54_101 = arith.constant 54 : index
    %c0_102 = arith.constant 0 : index
    %72 = vector.load %arg1[%c0_100, %c54_101, %c0_102] : memref<1x81x16xbf16, #tpu.memory_space<vmem>>, vector<1x8x16xbf16>
    %73 = vector.shape_cast %72 : vector<1x8x16xbf16> to vector<8x16xbf16>
    %c48_103 = arith.constant 48 : index
    %c0_104 = arith.constant 0 : index
    %74 = vector.load %arg4[%c48_103, %c0_104] : memref<64x64xbf16, #tpu.memory_space<vmem>>, vector<8x16xbf16>
    tpu.vector_store %arg4[%c48_103, %c0_104], %73 {strides = array<i32>} : memref<64x64xbf16, #tpu.memory_space<vmem>>, vector<8x16xbf16>,
    %c0_105 = arith.constant 0 : index
    %c55_106 = arith.constant 55 : index
    %c0_107 = arith.constant 0 : index
    %75 = vector.load %arg1[%c0_105, %c55_106, %c0_107] : memref<1x81x16xbf16, #tpu.memory_space<vmem>>, vector<1x8x16xbf16>
    %76 = vector.shape_cast %75 : vector<1x8x16xbf16> to vector<8x16xbf16>
    %c48_108 = arith.constant 48 : index
    %c16_109 = arith.constant 16 : index
    %77 = vector.load %arg4[%c48_108, %c16_109] : memref<64x64xbf16, #tpu.memory_space<vmem>>, vector<8x16xbf16>
    tpu.vector_store %arg4[%c48_108, %c16_109], %76 {strides = array<i32>} : memref<64x64xbf16, #tpu.memory_space<vmem>>, vector<8x16xbf16>,
    %c0_110 = arith.constant 0 : index
    %c63 = arith.constant 63 : index
    %c0_111 = arith.constant 0 : index
    %78 = vector.load %arg1[%c0_110, %c63, %c0_111] : memref<1x81x16xbf16, #tpu.memory_space<vmem>>, vector<1x8x16xbf16>
    %79 = vector.shape_cast %78 : vector<1x8x16xbf16> to vector<8x16xbf16>
    %c48_112 = arith.constant 48 : index
    %c32_113 = arith.constant 32 : index
    %80 = vector.load %arg4[%c48_112, %c32_113] : memref<64x64xbf16, #tpu.memory_space<vmem>>, vector<8x16xbf16>
    tpu.vector_store %arg4[%c48_112, %c32_113], %79 {strides = array<i32>} : memref<64x64xbf16, #tpu.memory_space<vmem>>, vector<8x16xbf16>,
    %c0_114 = arith.constant 0 : index
    %c64 = arith.constant 64 : index
    %c0_115 = arith.constant 0 : index
    %81 = vector.load %arg1[%c0_114, %c64, %c0_115] : memref<1x81x16xbf16, #tpu.memory_space<vmem>>, vector<1x8x16xbf16>
    %82 = vector.shape_cast %81 : vector<1x8x16xbf16> to vector<8x16xbf16>
    %c48_116 = arith.constant 48 : index
    %c48_117 = arith.constant 48 : index
    %83 = vector.load %arg4[%c48_116, %c48_117] : memref<64x64xbf16, #tpu.memory_space<vmem>>, vector<8x16xbf16>
    tpu.vector_store %arg4[%c48_116, %c48_117], %82 {strides = array<i32>} : memref<64x64xbf16, #tpu.memory_space<vmem>>, vector<8x16xbf16>,
    %c0_118 = arith.constant 0 : index
    %c63_119 = arith.constant 63 : index
    %c0_120 = arith.constant 0 : index
    %84 = vector.load %arg1[%c0_118, %c63_119, %c0_120] : memref<1x81x16xbf16, #tpu.memory_space<vmem>>, vector<1x8x16xbf16>
    %85 = vector.shape_cast %84 : vector<1x8x16xbf16> to vector<8x16xbf16>
    %c56 = arith.constant 56 : index
    %c0_121 = arith.constant 0 : index
    %86 = vector.load %arg4[%c56, %c0_121] : memref<64x64xbf16, #tpu.memory_space<vmem>>, vector<8x16xbf16>
    tpu.vector_store %arg4[%c56, %c0_121], %85 {strides = array<i32>} : memref<64x64xbf16, #tpu.memory_space<vmem>>, vector<8x16xbf16>,
    %c0_122 = arith.constant 0 : index
    %c64_123 = arith.constant 64 : index
    %c0_124 = arith.constant 0 : index
    %87 = vector.load %arg1[%c0_122, %c64_123, %c0_124] : memref<1x81x16xbf16, #tpu.memory_space<vmem>>, vector<1x8x16xbf16>
    %88 = vector.shape_cast %87 : vector<1x8x16xbf16> to vector<8x16xbf16>
    %c56_125 = arith.constant 56 : index
    %c16_126 = arith.constant 16 : index
    %89 = vector.load %arg4[%c56_125, %c16_126] : memref<64x64xbf16, #tpu.memory_space<vmem>>, vector<8x16xbf16>
    tpu.vector_store %arg4[%c56_125, %c16_126], %88 {strides = array<i32>} : memref<64x64xbf16, #tpu.memory_space<vmem>>, vector<8x16xbf16>,
    %c0_127 = arith.constant 0 : index
    %c72 = arith.constant 72 : index
    %c0_128 = arith.constant 0 : index
    %90 = vector.load %arg1[%c0_127, %c72, %c0_128] : memref<1x81x16xbf16, #tpu.memory_space<vmem>>, vector<1x8x16xbf16>
    %91 = vector.shape_cast %90 : vector<1x8x16xbf16> to vector<8x16xbf16>
    %c56_129 = arith.constant 56 : index
    %c32_130 = arith.constant 32 : index
    %92 = vector.load %arg4[%c56_129, %c32_130] : memref<64x64xbf16, #tpu.memory_space<vmem>>, vector<8x16xbf16>
    tpu.vector_store %arg4[%c56_129, %c32_130], %91 {strides = array<i32>} : memref<64x64xbf16, #tpu.memory_space<vmem>>, vector<8x16xbf16>,
    %c0_131 = arith.constant 0 : index
    %c73 = arith.constant 73 : index
    %c0_132 = arith.constant 0 : index
    %93 = vector.load %arg1[%c0_131, %c73, %c0_132] : memref<1x81x16xbf16, #tpu.memory_space<vmem>>, vector<1x8x16xbf16>
    %94 = vector.shape_cast %93 : vector<1x8x16xbf16> to vector<8x16xbf16>
    %c56_133 = arith.constant 56 : index
    %c48_134 = arith.constant 48 : index
    %95 = vector.load %arg4[%c56_133, %c48_134] : memref<64x64xbf16, #tpu.memory_space<vmem>>, vector<8x16xbf16>
    tpu.vector_store %arg4[%c56_133, %c48_134], %94 {strides = array<i32>} : memref<64x64xbf16, #tpu.memory_space<vmem>>, vector<8x16xbf16>,
    %c0_135 = arith.constant 0 : index
    %c0_136 = arith.constant 0 : index
    %96 = vector.load %arg4[%c0_135, %c0_136] : memref<64x64xbf16, #tpu.memory_space<vmem>>, vector<64x64xbf16>
    %c0_137 = arith.constant 0 : index
    %c0_138 = arith.constant 0 : index
    %97 = vector.load %arg2[%c0_137, %c0_138] : memref<64x32xbf16, #tpu.memory_space<vmem>>, vector<64x32xbf16>
    %cst = arith.constant dense<0.000000e+00> : vector<64x32xf32>
    %98 = tpu.matmul %96, %97, %cst {dimension_numbers = #tpu.dot_dimension_numbers<[1], [0], [0], [1], [0, 0, 1, 1], [], []>} : vector<64x64xbf16>, vector<64x32xbf16>, vector<64x32xf32> -> vector<64x32xf32>
    %cst_139 = arith.constant dense<0.000000e+00> : vector<32xf32>
    %99 = vector.multi_reduction <add>, %98, %cst_139 [0] : vector<64x32xf32> to vector<32xf32>
    %100 = vector.shape_cast %99 : vector<32xf32> to vector<1x32xf32>
    %cst_140 = arith.constant 1.562500e-02 : f32
    %101 = vector.broadcast %cst_140 : f32 to vector<1x32xf32>
    %102 = arith.mulf %100, %101 : vector<1x32xf32>
    %103 = vector.broadcast %102 : vector<1x32xf32> to vector<64x32xf32>
    %104 = arith.subf %98, %103 : vector<64x32xf32>
    %105 = arith.mulf %104, %104 : vector<64x32xf32>
    %cst_141 = arith.constant dense<0.000000e+00> : vector<32xf32>
    %106 = vector.multi_reduction <add>, %105, %cst_141 [0] : vector<64x32xf32> to vector<32xf32>
    %107 = vector.shape_cast %106 : vector<32xf32> to vector<1x32xf32>
    %cst_142 = arith.constant 1.562500e-02 : f32
    %108 = vector.broadcast %cst_142 : f32 to vector<1x32xf32>
    %109 = arith.mulf %107, %108 : vector<1x32xf32>
    %cst_143 = arith.constant 9.99999974E-6 : f32
    %110 = vector.broadcast %cst_143 : f32 to vector<1x32xf32>
    %111 = arith.addf %109, %110 : vector<1x32xf32>
    %112 = math.rsqrt %111 : vector<1x32xf32>
    %113 = vector.broadcast %112 : vector<1x32xf32> to vector<64x32xf32>
    %114 = arith.mulf %104, %113 : vector<64x32xf32>
    %cst_144 = arith.constant 0.000000e+00 : f32
    %115 = vector.broadcast %cst_144 : f32 to vector<64x32xf32>
    %116 = arith.cmpf ogt, %114, %115 : vector<64x32xf32>
    %cst_145 = arith.constant 2.000000e-01 : f32
    %117 = vector.broadcast %cst_145 : f32 to vector<64x32xf32>
    %118 = arith.mulf %117, %114 : vector<64x32xf32>
    %119 = arith.select %116, %114, %118 : vector<64x32xi1>, vector<64x32xf32>
    %120 = arith.truncf %119 : vector<64x32xf32> to vector<64x32xbf16>
    %c0_146 = arith.constant 0 : index
    %c0_147 = arith.constant 0 : index
    %c0_148 = arith.constant 0 : index
    %121 = vector.load %arg3[%c0_146, %c0_147, %c0_148] : memref<1x64x32xbf16, #tpu.memory_space<vmem>>, vector<1x64x32xbf16>
    %122 = vector.shape_cast %121 : vector<1x64x32xbf16> to vector<64x32xbf16>
    %123 = vector.shape_cast %120 : vector<64x32xbf16> to vector<1x64x32xbf16>
    tpu.vector_store %arg3[%c0_146, %c0_147, %c0_148], %123 {strides = array<i32>} : memref<1x64x32xbf16, #tpu.memory_space<vmem>>, vector<1x64x32xbf16>,
    return
  }
  func.func @transform_0(%arg0: i32) -> (i32, i32, i32) {
    %c0_i32 = arith.constant 0 : i32
    %c0_i32_0 = arith.constant 0 : i32
    %c0_i32_1 = arith.constant 0 : i32
    return %arg0, %c0_i32, %c0_i32_0 : i32, i32, i32
  }
  func.func @transform_1(%arg0: i32) -> (i32, i32) {
    %c0_i32 = arith.constant 0 : i32
    %c0_i32_0 = arith.constant 0 : i32
    %c0_i32_1 = arith.constant 0 : i32
    return %c0_i32, %c0_i32_0 : i32, i32
  }
  func.func @transform_2(%arg0: i32) -> (i32, i32, i32) {
    %c0_i32 = arith.constant 0 : i32
    %c0_i32_0 = arith.constant 0 : i32
    %c0_i32_1 = arith.constant 0 : i32
    return %arg0, %c0_i32, %c0_i32_0 : i32, i32, i32
  }
}

module attributes {stable_mosaic.version = 11 : i64} {
  func.func @_fused_layer_kernel(%arg0: i32, %arg1: memref<1x64x32xbf16, #tpu.memory_space<vmem>>, %arg2: memref<288x32xbf16, #tpu.memory_space<vmem>>, %arg3: memref<1x64x32xbf16, #tpu.memory_space<vmem>>, %arg4: memref<64x288xbf16, #tpu.memory_space<vmem>>) attributes {dimension_semantics = [#tpu.dimension_semantics<parallel>], iteration_bounds = array<i64: 2>, scalar_prefetch = 0 : i64, scratch_operands = 1 : i64, tpu.core_type = #tpu.core_type<tc>, window_params = [{transform_indices = @transform_0, window_bounds = array<i64: 1, 64, 32>}, {pipeline_mode = #tpu.pipeline_mode<synchronous>, transform_indices = @transform_1, window_bounds = array<i64: 288, 32>}, {transform_indices = @transform_2, window_bounds = array<i64: 1, 64, 32>}]} {
    %cst = arith.constant 0.000000e+00 : bf16
    %0 = vector.broadcast %cst : bf16 to vector<64x288xbf16>
    %c0 = arith.constant 0 : index
    %c0_0 = arith.constant 0 : index
    %1 = vector.load %arg4[%c0, %c0_0] : memref<64x288xbf16, #tpu.memory_space<vmem>>, vector<64x288xbf16>
    tpu.vector_store %arg4[%c0, %c0_0], %0 {strides = array<i32>} : memref<64x288xbf16, #tpu.memory_space<vmem>>, vector<64x288xbf16>,
    %c0_1 = arith.constant 0 : index
    %c0_2 = arith.constant 0 : index
    %c0_3 = arith.constant 0 : index
    %2 = vector.load %arg1[%c0_1, %c0_2, %c0_3] : memref<1x64x32xbf16, #tpu.memory_space<vmem>>, vector<1x7x32xbf16>
    %3 = vector.shape_cast %2 : vector<1x7x32xbf16> to vector<7x32xbf16>
    %c1 = arith.constant 1 : index
    %c96 = arith.constant 96 : index
    %4 = vector.load %arg4[%c1, %c96] : memref<64x288xbf16, #tpu.memory_space<vmem>>, vector<7x32xbf16>
    tpu.vector_store %arg4[%c1, %c96], %3 {strides = array<i32>} : memref<64x288xbf16, #tpu.memory_space<vmem>>, vector<7x32xbf16>,
    %c0_4 = arith.constant 0 : index
    %c0_5 = arith.constant 0 : index
    %c0_6 = arith.constant 0 : index
    %5 = vector.load %arg1[%c0_4, %c0_5, %c0_6] : memref<1x64x32xbf16, #tpu.memory_space<vmem>>, vector<1x8x32xbf16>
    %6 = vector.shape_cast %5 : vector<1x8x32xbf16> to vector<8x32xbf16>
    %c0_7 = arith.constant 0 : index
    %c128 = arith.constant 128 : index
    %7 = vector.load %arg4[%c0_7, %c128] : memref<64x288xbf16, #tpu.memory_space<vmem>>, vector<8x32xbf16>
    tpu.vector_store %arg4[%c0_7, %c128], %6 {strides = array<i32>} : memref<64x288xbf16, #tpu.memory_space<vmem>>, vector<8x32xbf16>,
    %c0_8 = arith.constant 0 : index
    %c1_9 = arith.constant 1 : index
    %c0_10 = arith.constant 0 : index
    %8 = vector.load %arg1[%c0_8, %c1_9, %c0_10] : memref<1x64x32xbf16, #tpu.memory_space<vmem>>, vector<1x7x32xbf16>
    %9 = vector.shape_cast %8 : vector<1x7x32xbf16> to vector<7x32xbf16>
    %c0_11 = arith.constant 0 : index
    %c160 = arith.constant 160 : index
    %10 = vector.load %arg4[%c0_11, %c160] : memref<64x288xbf16, #tpu.memory_space<vmem>>, vector<7x32xbf16>
    tpu.vector_store %arg4[%c0_11, %c160], %9 {strides = array<i32>} : memref<64x288xbf16, #tpu.memory_space<vmem>>, vector<7x32xbf16>,
    %c0_12 = arith.constant 0 : index
    %c8 = arith.constant 8 : index
    %c0_13 = arith.constant 0 : index
    %11 = vector.load %arg1[%c0_12, %c8, %c0_13] : memref<1x64x32xbf16, #tpu.memory_space<vmem>>, vector<1x7x32xbf16>
    %12 = vector.shape_cast %11 : vector<1x7x32xbf16> to vector<7x32xbf16>
    %c1_14 = arith.constant 1 : index
    %c192 = arith.constant 192 : index
    %13 = vector.load %arg4[%c1_14, %c192] : memref<64x288xbf16, #tpu.memory_space<vmem>>, vector<7x32xbf16>
    tpu.vector_store %arg4[%c1_14, %c192], %12 {strides = array<i32>} : memref<64x288xbf16, #tpu.memory_space<vmem>>, vector<7x32xbf16>,
    %c0_15 = arith.constant 0 : index
    %c8_16 = arith.constant 8 : index
    %c0_17 = arith.constant 0 : index
    %14 = vector.load %arg1[%c0_15, %c8_16, %c0_17] : memref<1x64x32xbf16, #tpu.memory_space<vmem>>, vector<1x8x32xbf16>
    %15 = vector.shape_cast %14 : vector<1x8x32xbf16> to vector<8x32xbf16>
    %c0_18 = arith.constant 0 : index
    %c224 = arith.constant 224 : index
    %16 = vector.load %arg4[%c0_18, %c224] : memref<64x288xbf16, #tpu.memory_space<vmem>>, vector<8x32xbf16>
    tpu.vector_store %arg4[%c0_18, %c224], %15 {strides = array<i32>} : memref<64x288xbf16, #tpu.memory_space<vmem>>, vector<8x32xbf16>,
    %c0_19 = arith.constant 0 : index
    %c9 = arith.constant 9 : index
    %c0_20 = arith.constant 0 : index
    %17 = vector.load %arg1[%c0_19, %c9, %c0_20] : memref<1x64x32xbf16, #tpu.memory_space<vmem>>, vector<1x7x32xbf16>
    %18 = vector.shape_cast %17 : vector<1x7x32xbf16> to vector<7x32xbf16>
    %c0_21 = arith.constant 0 : index
    %c256 = arith.constant 256 : index
    %19 = vector.load %arg4[%c0_21, %c256] : memref<64x288xbf16, #tpu.memory_space<vmem>>, vector<7x32xbf16>
    tpu.vector_store %arg4[%c0_21, %c256], %18 {strides = array<i32>} : memref<64x288xbf16, #tpu.memory_space<vmem>>, vector<7x32xbf16>,
    %c0_22 = arith.constant 0 : index
    %c0_23 = arith.constant 0 : index
    %c0_24 = arith.constant 0 : index
    %20 = vector.load %arg1[%c0_22, %c0_23, %c0_24] : memref<1x64x32xbf16, #tpu.memory_space<vmem>>, vector<1x7x32xbf16>
    %21 = vector.shape_cast %20 : vector<1x7x32xbf16> to vector<7x32xbf16>
    %c9_25 = arith.constant 9 : index
    %c0_26 = arith.constant 0 : index
    %22 = vector.load %arg4[%c9_25, %c0_26] : memref<64x288xbf16, #tpu.memory_space<vmem>>, vector<7x32xbf16>
    tpu.vector_store %arg4[%c9_25, %c0_26], %21 {strides = array<i32>} : memref<64x288xbf16, #tpu.memory_space<vmem>>, vector<7x32xbf16>,
    %c0_27 = arith.constant 0 : index
    %c0_28 = arith.constant 0 : index
    %c0_29 = arith.constant 0 : index
    %23 = vector.load %arg1[%c0_27, %c0_28, %c0_29] : memref<1x64x32xbf16, #tpu.memory_space<vmem>>, vector<1x8x32xbf16>
    %24 = vector.shape_cast %23 : vector<1x8x32xbf16> to vector<8x32xbf16>
    %c8_30 = arith.constant 8 : index
    %c32 = arith.constant 32 : index
    %25 = vector.load %arg4[%c8_30, %c32] : memref<64x288xbf16, #tpu.memory_space<vmem>>, vector<8x32xbf16>
    tpu.vector_store %arg4[%c8_30, %c32], %24 {strides = array<i32>} : memref<64x288xbf16, #tpu.memory_space<vmem>>, vector<8x32xbf16>,
    %c0_31 = arith.constant 0 : index
    %c1_32 = arith.constant 1 : index
    %c0_33 = arith.constant 0 : index
    %26 = vector.load %arg1[%c0_31, %c1_32, %c0_33] : memref<1x64x32xbf16, #tpu.memory_space<vmem>>, vector<1x7x32xbf16>
    %27 = vector.shape_cast %26 : vector<1x7x32xbf16> to vector<7x32xbf16>
    %c8_34 = arith.constant 8 : index
    %c64 = arith.constant 64 : index
    %28 = vector.load %arg4[%c8_34, %c64] : memref<64x288xbf16, #tpu.memory_space<vmem>>, vector<7x32xbf16>
    tpu.vector_store %arg4[%c8_34, %c64], %27 {strides = array<i32>} : memref<64x288xbf16, #tpu.memory_space<vmem>>, vector<7x32xbf16>,
    %c0_35 = arith.constant 0 : index
    %c8_36 = arith.constant 8 : index
    %c0_37 = arith.constant 0 : index
    %29 = vector.load %arg1[%c0_35, %c8_36, %c0_37] : memref<1x64x32xbf16, #tpu.memory_space<vmem>>, vector<1x7x32xbf16>
    %30 = vector.shape_cast %29 : vector<1x7x32xbf16> to vector<7x32xbf16>
    %c9_38 = arith.constant 9 : index
    %c96_39 = arith.constant 96 : index
    %31 = vector.load %arg4[%c9_38, %c96_39] : memref<64x288xbf16, #tpu.memory_space<vmem>>, vector<7x32xbf16>
    tpu.vector_store %arg4[%c9_38, %c96_39], %30 {strides = array<i32>} : memref<64x288xbf16, #tpu.memory_space<vmem>>, vector<7x32xbf16>,
    %c0_40 = arith.constant 0 : index
    %c8_41 = arith.constant 8 : index
    %c0_42 = arith.constant 0 : index
    %32 = vector.load %arg1[%c0_40, %c8_41, %c0_42] : memref<1x64x32xbf16, #tpu.memory_space<vmem>>, vector<1x8x32xbf16>
    %33 = vector.shape_cast %32 : vector<1x8x32xbf16> to vector<8x32xbf16>
    %c8_43 = arith.constant 8 : index
    %c128_44 = arith.constant 128 : index
    %34 = vector.load %arg4[%c8_43, %c128_44] : memref<64x288xbf16, #tpu.memory_space<vmem>>, vector<8x32xbf16>
    tpu.vector_store %arg4[%c8_43, %c128_44], %33 {strides = array<i32>} : memref<64x288xbf16, #tpu.memory_space<vmem>>, vector<8x32xbf16>,
    %c0_45 = arith.constant 0 : index
    %c9_46 = arith.constant 9 : index
    %c0_47 = arith.constant 0 : index
    %35 = vector.load %arg1[%c0_45, %c9_46, %c0_47] : memref<1x64x32xbf16, #tpu.memory_space<vmem>>, vector<1x7x32xbf16>
    %36 = vector.shape_cast %35 : vector<1x7x32xbf16> to vector<7x32xbf16>
    %c8_48 = arith.constant 8 : index
    %c160_49 = arith.constant 160 : index
    %37 = vector.load %arg4[%c8_48, %c160_49] : memref<64x288xbf16, #tpu.memory_space<vmem>>, vector<7x32xbf16>
    tpu.vector_store %arg4[%c8_48, %c160_49], %36 {strides = array<i32>} : memref<64x288xbf16, #tpu.memory_space<vmem>>, vector<7x32xbf16>,
    %c0_50 = arith.constant 0 : index
    %c16 = arith.constant 16 : index
    %c0_51 = arith.constant 0 : index
    %38 = vector.load %arg1[%c0_50, %c16, %c0_51] : memref<1x64x32xbf16, #tpu.memory_space<vmem>>, vector<1x7x32xbf16>
    %39 = vector.shape_cast %38 : vector<1x7x32xbf16> to vector<7x32xbf16>
    %c9_52 = arith.constant 9 : index
    %c192_53 = arith.constant 192 : index
    %40 = vector.load %arg4[%c9_52, %c192_53] : memref<64x288xbf16, #tpu.memory_space<vmem>>, vector<7x32xbf16>
    tpu.vector_store %arg4[%c9_52, %c192_53], %39 {strides = array<i32>} : memref<64x288xbf16, #tpu.memory_space<vmem>>, vector<7x32xbf16>,
    %c0_54 = arith.constant 0 : index
    %c16_55 = arith.constant 16 : index
    %c0_56 = arith.constant 0 : index
    %41 = vector.load %arg1[%c0_54, %c16_55, %c0_56] : memref<1x64x32xbf16, #tpu.memory_space<vmem>>, vector<1x8x32xbf16>
    %42 = vector.shape_cast %41 : vector<1x8x32xbf16> to vector<8x32xbf16>
    %c8_57 = arith.constant 8 : index
    %c224_58 = arith.constant 224 : index
    %43 = vector.load %arg4[%c8_57, %c224_58] : memref<64x288xbf16, #tpu.memory_space<vmem>>, vector<8x32xbf16>
    tpu.vector_store %arg4[%c8_57, %c224_58], %42 {strides = array<i32>} : memref<64x288xbf16, #tpu.memory_space<vmem>>, vector<8x32xbf16>,
    %c0_59 = arith.constant 0 : index
    %c17 = arith.constant 17 : index
    %c0_60 = arith.constant 0 : index
    %44 = vector.load %arg1[%c0_59, %c17, %c0_60] : memref<1x64x32xbf16, #tpu.memory_space<vmem>>, vector<1x7x32xbf16>
    %45 = vector.shape_cast %44 : vector<1x7x32xbf16> to vector<7x32xbf16>
    %c8_61 = arith.constant 8 : index
    %c256_62 = arith.constant 256 : index
    %46 = vector.load %arg4[%c8_61, %c256_62] : memref<64x288xbf16, #tpu.memory_space<vmem>>, vector<7x32xbf16>
    tpu.vector_store %arg4[%c8_61, %c256_62], %45 {strides = array<i32>} : memref<64x288xbf16, #tpu.memory_space<vmem>>, vector<7x32xbf16>,
    %c0_63 = arith.constant 0 : index
    %c8_64 = arith.constant 8 : index
    %c0_65 = arith.constant 0 : index
    %47 = vector.load %arg1[%c0_63, %c8_64, %c0_65] : memref<1x64x32xbf16, #tpu.memory_space<vmem>>, vector<1x7x32xbf16>
    %48 = vector.shape_cast %47 : vector<1x7x32xbf16> to vector<7x32xbf16>
    %c17_66 = arith.constant 17 : index
    %c0_67 = arith.constant 0 : index
    %49 = vector.load %arg4[%c17_66, %c0_67] : memref<64x288xbf16, #tpu.memory_space<vmem>>, vector<7x32xbf16>
    tpu.vector_store %arg4[%c17_66, %c0_67], %48 {strides = array<i32>} : memref<64x288xbf16, #tpu.memory_space<vmem>>, vector<7x32xbf16>,
    %c0_68 = arith.constant 0 : index
    %c8_69 = arith.constant 8 : index
    %c0_70 = arith.constant 0 : index
    %50 = vector.load %arg1[%c0_68, %c8_69, %c0_70] : memref<1x64x32xbf16, #tpu.memory_space<vmem>>, vector<1x8x32xbf16>
    %51 = vector.shape_cast %50 : vector<1x8x32xbf16> to vector<8x32xbf16>
    %c16_71 = arith.constant 16 : index
    %c32_72 = arith.constant 32 : index
    %52 = vector.load %arg4[%c16_71, %c32_72] : memref<64x288xbf16, #tpu.memory_space<vmem>>, vector<8x32xbf16>
    tpu.vector_store %arg4[%c16_71, %c32_72], %51 {strides = array<i32>} : memref<64x288xbf16, #tpu.memory_space<vmem>>, vector<8x32xbf16>,
    %c0_73 = arith.constant 0 : index
    %c9_74 = arith.constant 9 : index
    %c0_75 = arith.constant 0 : index
    %53 = vector.load %arg1[%c0_73, %c9_74, %c0_75] : memref<1x64x32xbf16, #tpu.memory_space<vmem>>, vector<1x7x32xbf16>
    %54 = vector.shape_cast %53 : vector<1x7x32xbf16> to vector<7x32xbf16>
    %c16_76 = arith.constant 16 : index
    %c64_77 = arith.constant 64 : index
    %55 = vector.load %arg4[%c16_76, %c64_77] : memref<64x288xbf16, #tpu.memory_space<vmem>>, vector<7x32xbf16>
    tpu.vector_store %arg4[%c16_76, %c64_77], %54 {strides = array<i32>} : memref<64x288xbf16, #tpu.memory_space<vmem>>, vector<7x32xbf16>,
    %c0_78 = arith.constant 0 : index
    %c16_79 = arith.constant 16 : index
    %c0_80 = arith.constant 0 : index
    %56 = vector.load %arg1[%c0_78, %c16_79, %c0_80] : memref<1x64x32xbf16, #tpu.memory_space<vmem>>, vector<1x7x32xbf16>
    %57 = vector.shape_cast %56 : vector<1x7x32xbf16> to vector<7x32xbf16>
    %c17_81 = arith.constant 17 : index
    %c96_82 = arith.constant 96 : index
    %58 = vector.load %arg4[%c17_81, %c96_82] : memref<64x288xbf16, #tpu.memory_space<vmem>>, vector<7x32xbf16>
    tpu.vector_store %arg4[%c17_81, %c96_82], %57 {strides = array<i32>} : memref<64x288xbf16, #tpu.memory_space<vmem>>, vector<7x32xbf16>,
    %c0_83 = arith.constant 0 : index
    %c16_84 = arith.constant 16 : index
    %c0_85 = arith.constant 0 : index
    %59 = vector.load %arg1[%c0_83, %c16_84, %c0_85] : memref<1x64x32xbf16, #tpu.memory_space<vmem>>, vector<1x8x32xbf16>
    %60 = vector.shape_cast %59 : vector<1x8x32xbf16> to vector<8x32xbf16>
    %c16_86 = arith.constant 16 : index
    %c128_87 = arith.constant 128 : index
    %61 = vector.load %arg4[%c16_86, %c128_87] : memref<64x288xbf16, #tpu.memory_space<vmem>>, vector<8x32xbf16>
    tpu.vector_store %arg4[%c16_86, %c128_87], %60 {strides = array<i32>} : memref<64x288xbf16, #tpu.memory_space<vmem>>, vector<8x32xbf16>,
    %c0_88 = arith.constant 0 : index
    %c17_89 = arith.constant 17 : index
    %c0_90 = arith.constant 0 : index
    %62 = vector.load %arg1[%c0_88, %c17_89, %c0_90] : memref<1x64x32xbf16, #tpu.memory_space<vmem>>, vector<1x7x32xbf16>
    %63 = vector.shape_cast %62 : vector<1x7x32xbf16> to vector<7x32xbf16>
    %c16_91 = arith.constant 16 : index
    %c160_92 = arith.constant 160 : index
    %64 = vector.load %arg4[%c16_91, %c160_92] : memref<64x288xbf16, #tpu.memory_space<vmem>>, vector<7x32xbf16>
    tpu.vector_store %arg4[%c16_91, %c160_92], %63 {strides = array<i32>} : memref<64x288xbf16, #tpu.memory_space<vmem>>, vector<7x32xbf16>,
    %c0_93 = arith.constant 0 : index
    %c24 = arith.constant 24 : index
    %c0_94 = arith.constant 0 : index
    %65 = vector.load %arg1[%c0_93, %c24, %c0_94] : memref<1x64x32xbf16, #tpu.memory_space<vmem>>, vector<1x7x32xbf16>
    %66 = vector.shape_cast %65 : vector<1x7x32xbf16> to vector<7x32xbf16>
    %c17_95 = arith.constant 17 : index
    %c192_96 = arith.constant 192 : index
    %67 = vector.load %arg4[%c17_95, %c192_96] : memref<64x288xbf16, #tpu.memory_space<vmem>>, vector<7x32xbf16>
    tpu.vector_store %arg4[%c17_95, %c192_96], %66 {strides = array<i32>} : memref<64x288xbf16, #tpu.memory_space<vmem>>, vector<7x32xbf16>,
    %c0_97 = arith.constant 0 : index
    %c24_98 = arith.constant 24 : index
    %c0_99 = arith.constant 0 : index
    %68 = vector.load %arg1[%c0_97, %c24_98, %c0_99] : memref<1x64x32xbf16, #tpu.memory_space<vmem>>, vector<1x8x32xbf16>
    %69 = vector.shape_cast %68 : vector<1x8x32xbf16> to vector<8x32xbf16>
    %c16_100 = arith.constant 16 : index
    %c224_101 = arith.constant 224 : index
    %70 = vector.load %arg4[%c16_100, %c224_101] : memref<64x288xbf16, #tpu.memory_space<vmem>>, vector<8x32xbf16>
    tpu.vector_store %arg4[%c16_100, %c224_101], %69 {strides = array<i32>} : memref<64x288xbf16, #tpu.memory_space<vmem>>, vector<8x32xbf16>,
    %c0_102 = arith.constant 0 : index
    %c25 = arith.constant 25 : index
    %c0_103 = arith.constant 0 : index
    %71 = vector.load %arg1[%c0_102, %c25, %c0_103] : memref<1x64x32xbf16, #tpu.memory_space<vmem>>, vector<1x7x32xbf16>
    %72 = vector.shape_cast %71 : vector<1x7x32xbf16> to vector<7x32xbf16>
    %c16_104 = arith.constant 16 : index
    %c256_105 = arith.constant 256 : index
    %73 = vector.load %arg4[%c16_104, %c256_105] : memref<64x288xbf16, #tpu.memory_space<vmem>>, vector<7x32xbf16>
    tpu.vector_store %arg4[%c16_104, %c256_105], %72 {strides = array<i32>} : memref<64x288xbf16, #tpu.memory_space<vmem>>, vector<7x32xbf16>,
    %c0_106 = arith.constant 0 : index
    %c16_107 = arith.constant 16 : index
    %c0_108 = arith.constant 0 : index
    %74 = vector.load %arg1[%c0_106, %c16_107, %c0_108] : memref<1x64x32xbf16, #tpu.memory_space<vmem>>, vector<1x7x32xbf16>
    %75 = vector.shape_cast %74 : vector<1x7x32xbf16> to vector<7x32xbf16>
    %c25_109 = arith.constant 25 : index
    %c0_110 = arith.constant 0 : index
    %76 = vector.load %arg4[%c25_109, %c0_110] : memref<64x288xbf16, #tpu.memory_space<vmem>>, vector<7x32xbf16>
    tpu.vector_store %arg4[%c25_109, %c0_110], %75 {strides = array<i32>} : memref<64x288xbf16, #tpu.memory_space<vmem>>, vector<7x32xbf16>,
    %c0_111 = arith.constant 0 : index
    %c16_112 = arith.constant 16 : index
    %c0_113 = arith.constant 0 : index
    %77 = vector.load %arg1[%c0_111, %c16_112, %c0_113] : memref<1x64x32xbf16, #tpu.memory_space<vmem>>, vector<1x8x32xbf16>
    %78 = vector.shape_cast %77 : vector<1x8x32xbf16> to vector<8x32xbf16>
    %c24_114 = arith.constant 24 : index
    %c32_115 = arith.constant 32 : index
    %79 = vector.load %arg4[%c24_114, %c32_115] : memref<64x288xbf16, #tpu.memory_space<vmem>>, vector<8x32xbf16>
    tpu.vector_store %arg4[%c24_114, %c32_115], %78 {strides = array<i32>} : memref<64x288xbf16, #tpu.memory_space<vmem>>, vector<8x32xbf16>,
    %c0_116 = arith.constant 0 : index
    %c17_117 = arith.constant 17 : index
    %c0_118 = arith.constant 0 : index
    %80 = vector.load %arg1[%c0_116, %c17_117, %c0_118] : memref<1x64x32xbf16, #tpu.memory_space<vmem>>, vector<1x7x32xbf16>
    %81 = vector.shape_cast %80 : vector<1x7x32xbf16> to vector<7x32xbf16>
    %c24_119 = arith.constant 24 : index
    %c64_120 = arith.constant 64 : index
    %82 = vector.load %arg4[%c24_119, %c64_120] : memref<64x288xbf16, #tpu.memory_space<vmem>>, vector<7x32xbf16>
    tpu.vector_store %arg4[%c24_119, %c64_120], %81 {strides = array<i32>} : memref<64x288xbf16, #tpu.memory_space<vmem>>, vector<7x32xbf16>,
    %c0_121 = arith.constant 0 : index
    %c24_122 = arith.constant 24 : index
    %c0_123 = arith.constant 0 : index
    %83 = vector.load %arg1[%c0_121, %c24_122, %c0_123] : memref<1x64x32xbf16, #tpu.memory_space<vmem>>, vector<1x7x32xbf16>
    %84 = vector.shape_cast %83 : vector<1x7x32xbf16> to vector<7x32xbf16>
    %c25_124 = arith.constant 25 : index
    %c96_125 = arith.constant 96 : index
    %85 = vector.load %arg4[%c25_124, %c96_125] : memref<64x288xbf16, #tpu.memory_space<vmem>>, vector<7x32xbf16>
    tpu.vector_store %arg4[%c25_124, %c96_125], %84 {strides = array<i32>} : memref<64x288xbf16, #tpu.memory_space<vmem>>, vector<7x32xbf16>,
    %c0_126 = arith.constant 0 : index
    %c24_127 = arith.constant 24 : index
    %c0_128 = arith.constant 0 : index
    %86 = vector.load %arg1[%c0_126, %c24_127, %c0_128] : memref<1x64x32xbf16, #tpu.memory_space<vmem>>, vector<1x8x32xbf16>
    %87 = vector.shape_cast %86 : vector<1x8x32xbf16> to vector<8x32xbf16>
    %c24_129 = arith.constant 24 : index
    %c128_130 = arith.constant 128 : index
    %88 = vector.load %arg4[%c24_129, %c128_130] : memref<64x288xbf16, #tpu.memory_space<vmem>>, vector<8x32xbf16>
    tpu.vector_store %arg4[%c24_129, %c128_130], %87 {strides = array<i32>} : memref<64x288xbf16, #tpu.memory_space<vmem>>, vector<8x32xbf16>,
    %c0_131 = arith.constant 0 : index
    %c25_132 = arith.constant 25 : index
    %c0_133 = arith.constant 0 : index
    %89 = vector.load %arg1[%c0_131, %c25_132, %c0_133] : memref<1x64x32xbf16, #tpu.memory_space<vmem>>, vector<1x7x32xbf16>
    %90 = vector.shape_cast %89 : vector<1x7x32xbf16> to vector<7x32xbf16>
    %c24_134 = arith.constant 24 : index
    %c160_135 = arith.constant 160 : index
    %91 = vector.load %arg4[%c24_134, %c160_135] : memref<64x288xbf16, #tpu.memory_space<vmem>>, vector<7x32xbf16>
    tpu.vector_store %arg4[%c24_134, %c160_135], %90 {strides = array<i32>} : memref<64x288xbf16, #tpu.memory_space<vmem>>, vector<7x32xbf16>,
    %c0_136 = arith.constant 0 : index
    %c32_137 = arith.constant 32 : index
    %c0_138 = arith.constant 0 : index
    %92 = vector.load %arg1[%c0_136, %c32_137, %c0_138] : memref<1x64x32xbf16, #tpu.memory_space<vmem>>, vector<1x7x32xbf16>
    %93 = vector.shape_cast %92 : vector<1x7x32xbf16> to vector<7x32xbf16>
    %c25_139 = arith.constant 25 : index
    %c192_140 = arith.constant 192 : index
    %94 = vector.load %arg4[%c25_139, %c192_140] : memref<64x288xbf16, #tpu.memory_space<vmem>>, vector<7x32xbf16>
    tpu.vector_store %arg4[%c25_139, %c192_140], %93 {strides = array<i32>} : memref<64x288xbf16, #tpu.memory_space<vmem>>, vector<7x32xbf16>,
    %c0_141 = arith.constant 0 : index
    %c32_142 = arith.constant 32 : index
    %c0_143 = arith.constant 0 : index
    %95 = vector.load %arg1[%c0_141, %c32_142, %c0_143] : memref<1x64x32xbf16, #tpu.memory_space<vmem>>, vector<1x8x32xbf16>
    %96 = vector.shape_cast %95 : vector<1x8x32xbf16> to vector<8x32xbf16>
    %c24_144 = arith.constant 24 : index
    %c224_145 = arith.constant 224 : index
    %97 = vector.load %arg4[%c24_144, %c224_145] : memref<64x288xbf16, #tpu.memory_space<vmem>>, vector<8x32xbf16>
    tpu.vector_store %arg4[%c24_144, %c224_145], %96 {strides = array<i32>} : memref<64x288xbf16, #tpu.memory_space<vmem>>, vector<8x32xbf16>,
    %c0_146 = arith.constant 0 : index
    %c33 = arith.constant 33 : index
    %c0_147 = arith.constant 0 : index
    %98 = vector.load %arg1[%c0_146, %c33, %c0_147] : memref<1x64x32xbf16, #tpu.memory_space<vmem>>, vector<1x7x32xbf16>
    %99 = vector.shape_cast %98 : vector<1x7x32xbf16> to vector<7x32xbf16>
    %c24_148 = arith.constant 24 : index
    %c256_149 = arith.constant 256 : index
    %100 = vector.load %arg4[%c24_148, %c256_149] : memref<64x288xbf16, #tpu.memory_space<vmem>>, vector<7x32xbf16>
    tpu.vector_store %arg4[%c24_148, %c256_149], %99 {strides = array<i32>} : memref<64x288xbf16, #tpu.memory_space<vmem>>, vector<7x32xbf16>,
    %c0_150 = arith.constant 0 : index
    %c24_151 = arith.constant 24 : index
    %c0_152 = arith.constant 0 : index
    %101 = vector.load %arg1[%c0_150, %c24_151, %c0_152] : memref<1x64x32xbf16, #tpu.memory_space<vmem>>, vector<1x7x32xbf16>
    %102 = vector.shape_cast %101 : vector<1x7x32xbf16> to vector<7x32xbf16>
    %c33_153 = arith.constant 33 : index
    %c0_154 = arith.constant 0 : index
    %103 = vector.load %arg4[%c33_153, %c0_154] : memref<64x288xbf16, #tpu.memory_space<vmem>>, vector<7x32xbf16>
    tpu.vector_store %arg4[%c33_153, %c0_154], %102 {strides = array<i32>} : memref<64x288xbf16, #tpu.memory_space<vmem>>, vector<7x32xbf16>,
    %c0_155 = arith.constant 0 : index
    %c24_156 = arith.constant 24 : index
    %c0_157 = arith.constant 0 : index
    %104 = vector.load %arg1[%c0_155, %c24_156, %c0_157] : memref<1x64x32xbf16, #tpu.memory_space<vmem>>, vector<1x8x32xbf16>
    %105 = vector.shape_cast %104 : vector<1x8x32xbf16> to vector<8x32xbf16>
    %c32_158 = arith.constant 32 : index
    %c32_159 = arith.constant 32 : index
    %106 = vector.load %arg4[%c32_158, %c32_159] : memref<64x288xbf16, #tpu.memory_space<vmem>>, vector<8x32xbf16>
    tpu.vector_store %arg4[%c32_158, %c32_159], %105 {strides = array<i32>} : memref<64x288xbf16, #tpu.memory_space<vmem>>, vector<8x32xbf16>,
    %c0_160 = arith.constant 0 : index
    %c25_161 = arith.constant 25 : index
    %c0_162 = arith.constant 0 : index
    %107 = vector.load %arg1[%c0_160, %c25_161, %c0_162] : memref<1x64x32xbf16, #tpu.memory_space<vmem>>, vector<1x7x32xbf16>
    %108 = vector.shape_cast %107 : vector<1x7x32xbf16> to vector<7x32xbf16>
    %c32_163 = arith.constant 32 : index
    %c64_164 = arith.constant 64 : index
    %109 = vector.load %arg4[%c32_163, %c64_164] : memref<64x288xbf16, #tpu.memory_space<vmem>>, vector<7x32xbf16>
    tpu.vector_store %arg4[%c32_163, %c64_164], %108 {strides = array<i32>} : memref<64x288xbf16, #tpu.memory_space<vmem>>, vector<7x32xbf16>,
    %c0_165 = arith.constant 0 : index
    %c32_166 = arith.constant 32 : index
    %c0_167 = arith.constant 0 : index
    %110 = vector.load %arg1[%c0_165, %c32_166, %c0_167] : memref<1x64x32xbf16, #tpu.memory_space<vmem>>, vector<1x7x32xbf16>
    %111 = vector.shape_cast %110 : vector<1x7x32xbf16> to vector<7x32xbf16>
    %c33_168 = arith.constant 33 : index
    %c96_169 = arith.constant 96 : index
    %112 = vector.load %arg4[%c33_168, %c96_169] : memref<64x288xbf16, #tpu.memory_space<vmem>>, vector<7x32xbf16>
    tpu.vector_store %arg4[%c33_168, %c96_169], %111 {strides = array<i32>} : memref<64x288xbf16, #tpu.memory_space<vmem>>, vector<7x32xbf16>,
    %c0_170 = arith.constant 0 : index
    %c32_171 = arith.constant 32 : index
    %c0_172 = arith.constant 0 : index
    %113 = vector.load %arg1[%c0_170, %c32_171, %c0_172] : memref<1x64x32xbf16, #tpu.memory_space<vmem>>, vector<1x8x32xbf16>
    %114 = vector.shape_cast %113 : vector<1x8x32xbf16> to vector<8x32xbf16>
    %c32_173 = arith.constant 32 : index
    %c128_174 = arith.constant 128 : index
    %115 = vector.load %arg4[%c32_173, %c128_174] : memref<64x288xbf16, #tpu.memory_space<vmem>>, vector<8x32xbf16>
    tpu.vector_store %arg4[%c32_173, %c128_174], %114 {strides = array<i32>} : memref<64x288xbf16, #tpu.memory_space<vmem>>, vector<8x32xbf16>,
    %c0_175 = arith.constant 0 : index
    %c33_176 = arith.constant 33 : index
    %c0_177 = arith.constant 0 : index
    %116 = vector.load %arg1[%c0_175, %c33_176, %c0_177] : memref<1x64x32xbf16, #tpu.memory_space<vmem>>, vector<1x7x32xbf16>
    %117 = vector.shape_cast %116 : vector<1x7x32xbf16> to vector<7x32xbf16>
    %c32_178 = arith.constant 32 : index
    %c160_179 = arith.constant 160 : index
    %118 = vector.load %arg4[%c32_178, %c160_179] : memref<64x288xbf16, #tpu.memory_space<vmem>>, vector<7x32xbf16>
    tpu.vector_store %arg4[%c32_178, %c160_179], %117 {strides = array<i32>} : memref<64x288xbf16, #tpu.memory_space<vmem>>, vector<7x32xbf16>,
    %c0_180 = arith.constant 0 : index
    %c40 = arith.constant 40 : index
    %c0_181 = arith.constant 0 : index
    %119 = vector.load %arg1[%c0_180, %c40, %c0_181] : memref<1x64x32xbf16, #tpu.memory_space<vmem>>, vector<1x7x32xbf16>
    %120 = vector.shape_cast %119 : vector<1x7x32xbf16> to vector<7x32xbf16>
    %c33_182 = arith.constant 33 : index
    %c192_183 = arith.constant 192 : index
    %121 = vector.load %arg4[%c33_182, %c192_183] : memref<64x288xbf16, #tpu.memory_space<vmem>>, vector<7x32xbf16>
    tpu.vector_store %arg4[%c33_182, %c192_183], %120 {strides = array<i32>} : memref<64x288xbf16, #tpu.memory_space<vmem>>, vector<7x32xbf16>,
    %c0_184 = arith.constant 0 : index
    %c40_185 = arith.constant 40 : index
    %c0_186 = arith.constant 0 : index
    %122 = vector.load %arg1[%c0_184, %c40_185, %c0_186] : memref<1x64x32xbf16, #tpu.memory_space<vmem>>, vector<1x8x32xbf16>
    %123 = vector.shape_cast %122 : vector<1x8x32xbf16> to vector<8x32xbf16>
    %c32_187 = arith.constant 32 : index
    %c224_188 = arith.constant 224 : index
    %124 = vector.load %arg4[%c32_187, %c224_188] : memref<64x288xbf16, #tpu.memory_space<vmem>>, vector<8x32xbf16>
    tpu.vector_store %arg4[%c32_187, %c224_188], %123 {strides = array<i32>} : memref<64x288xbf16, #tpu.memory_space<vmem>>, vector<8x32xbf16>,
    %c0_189 = arith.constant 0 : index
    %c41 = arith.constant 41 : index
    %c0_190 = arith.constant 0 : index
    %125 = vector.load %arg1[%c0_189, %c41, %c0_190] : memref<1x64x32xbf16, #tpu.memory_space<vmem>>, vector<1x7x32xbf16>
    %126 = vector.shape_cast %125 : vector<1x7x32xbf16> to vector<7x32xbf16>
    %c32_191 = arith.constant 32 : index
    %c256_192 = arith.constant 256 : index
    %127 = vector.load %arg4[%c32_191, %c256_192] : memref<64x288xbf16, #tpu.memory_space<vmem>>, vector<7x32xbf16>
    tpu.vector_store %arg4[%c32_191, %c256_192], %126 {strides = array<i32>} : memref<64x288xbf16, #tpu.memory_space<vmem>>, vector<7x32xbf16>,
    %c0_193 = arith.constant 0 : index
    %c32_194 = arith.constant 32 : index
    %c0_195 = arith.constant 0 : index
    %128 = vector.load %arg1[%c0_193, %c32_194, %c0_195] : memref<1x64x32xbf16, #tpu.memory_space<vmem>>, vector<1x7x32xbf16>
    %129 = vector.shape_cast %128 : vector<1x7x32xbf16> to vector<7x32xbf16>
    %c41_196 = arith.constant 41 : index
    %c0_197 = arith.constant 0 : index
    %130 = vector.load %arg4[%c41_196, %c0_197] : memref<64x288xbf16, #tpu.memory_space<vmem>>, vector<7x32xbf16>
    tpu.vector_store %arg4[%c41_196, %c0_197], %129 {strides = array<i32>} : memref<64x288xbf16, #tpu.memory_space<vmem>>, vector<7x32xbf16>,
    %c0_198 = arith.constant 0 : index
    %c32_199 = arith.constant 32 : index
    %c0_200 = arith.constant 0 : index
    %131 = vector.load %arg1[%c0_198, %c32_199, %c0_200] : memref<1x64x32xbf16, #tpu.memory_space<vmem>>, vector<1x8x32xbf16>
    %132 = vector.shape_cast %131 : vector<1x8x32xbf16> to vector<8x32xbf16>
    %c40_201 = arith.constant 40 : index
    %c32_202 = arith.constant 32 : index
    %133 = vector.load %arg4[%c40_201, %c32_202] : memref<64x288xbf16, #tpu.memory_space<vmem>>, vector<8x32xbf16>
    tpu.vector_store %arg4[%c40_201, %c32_202], %132 {strides = array<i32>} : memref<64x288xbf16, #tpu.memory_space<vmem>>, vector<8x32xbf16>,
    %c0_203 = arith.constant 0 : index
    %c33_204 = arith.constant 33 : index
    %c0_205 = arith.constant 0 : index
    %134 = vector.load %arg1[%c0_203, %c33_204, %c0_205] : memref<1x64x32xbf16, #tpu.memory_space<vmem>>, vector<1x7x32xbf16>
    %135 = vector.shape_cast %134 : vector<1x7x32xbf16> to vector<7x32xbf16>
    %c40_206 = arith.constant 40 : index
    %c64_207 = arith.constant 64 : index
    %136 = vector.load %arg4[%c40_206, %c64_207] : memref<64x288xbf16, #tpu.memory_space<vmem>>, vector<7x32xbf16>
    tpu.vector_store %arg4[%c40_206, %c64_207], %135 {strides = array<i32>} : memref<64x288xbf16, #tpu.memory_space<vmem>>, vector<7x32xbf16>,
    %c0_208 = arith.constant 0 : index
    %c40_209 = arith.constant 40 : index
    %c0_210 = arith.constant 0 : index
    %137 = vector.load %arg1[%c0_208, %c40_209, %c0_210] : memref<1x64x32xbf16, #tpu.memory_space<vmem>>, vector<1x7x32xbf16>
    %138 = vector.shape_cast %137 : vector<1x7x32xbf16> to vector<7x32xbf16>
    %c41_211 = arith.constant 41 : index
    %c96_212 = arith.constant 96 : index
    %139 = vector.load %arg4[%c41_211, %c96_212] : memref<64x288xbf16, #tpu.memory_space<vmem>>, vector<7x32xbf16>
    tpu.vector_store %arg4[%c41_211, %c96_212], %138 {strides = array<i32>} : memref<64x288xbf16, #tpu.memory_space<vmem>>, vector<7x32xbf16>,
    %c0_213 = arith.constant 0 : index
    %c40_214 = arith.constant 40 : index
    %c0_215 = arith.constant 0 : index
    %140 = vector.load %arg1[%c0_213, %c40_214, %c0_215] : memref<1x64x32xbf16, #tpu.memory_space<vmem>>, vector<1x8x32xbf16>
    %141 = vector.shape_cast %140 : vector<1x8x32xbf16> to vector<8x32xbf16>
    %c40_216 = arith.constant 40 : index
    %c128_217 = arith.constant 128 : index
    %142 = vector.load %arg4[%c40_216, %c128_217] : memref<64x288xbf16, #tpu.memory_space<vmem>>, vector<8x32xbf16>
    tpu.vector_store %arg4[%c40_216, %c128_217], %141 {strides = array<i32>} : memref<64x288xbf16, #tpu.memory_space<vmem>>, vector<8x32xbf16>,
    %c0_218 = arith.constant 0 : index
    %c41_219 = arith.constant 41 : index
    %c0_220 = arith.constant 0 : index
    %143 = vector.load %arg1[%c0_218, %c41_219, %c0_220] : memref<1x64x32xbf16, #tpu.memory_space<vmem>>, vector<1x7x32xbf16>
    %144 = vector.shape_cast %143 : vector<1x7x32xbf16> to vector<7x32xbf16>
    %c40_221 = arith.constant 40 : index
    %c160_222 = arith.constant 160 : index
    %145 = vector.load %arg4[%c40_221, %c160_222] : memref<64x288xbf16, #tpu.memory_space<vmem>>, vector<7x32xbf16>
    tpu.vector_store %arg4[%c40_221, %c160_222], %144 {strides = array<i32>} : memref<64x288xbf16, #tpu.memory_space<vmem>>, vector<7x32xbf16>,
    %c0_223 = arith.constant 0 : index
    %c48 = arith.constant 48 : index
    %c0_224 = arith.constant 0 : index
    %146 = vector.load %arg1[%c0_223, %c48, %c0_224] : memref<1x64x32xbf16, #tpu.memory_space<vmem>>, vector<1x7x32xbf16>
    %147 = vector.shape_cast %146 : vector<1x7x32xbf16> to vector<7x32xbf16>
    %c41_225 = arith.constant 41 : index
    %c192_226 = arith.constant 192 : index
    %148 = vector.load %arg4[%c41_225, %c192_226] : memref<64x288xbf16, #tpu.memory_space<vmem>>, vector<7x32xbf16>
    tpu.vector_store %arg4[%c41_225, %c192_226], %147 {strides = array<i32>} : memref<64x288xbf16, #tpu.memory_space<vmem>>, vector<7x32xbf16>,
    %c0_227 = arith.constant 0 : index
    %c48_228 = arith.constant 48 : index
    %c0_229 = arith.constant 0 : index
    %149 = vector.load %arg1[%c0_227, %c48_228, %c0_229] : memref<1x64x32xbf16, #tpu.memory_space<vmem>>, vector<1x8x32xbf16>
    %150 = vector.shape_cast %149 : vector<1x8x32xbf16> to vector<8x32xbf16>
    %c40_230 = arith.constant 40 : index
    %c224_231 = arith.constant 224 : index
    %151 = vector.load %arg4[%c40_230, %c224_231] : memref<64x288xbf16, #tpu.memory_space<vmem>>, vector<8x32xbf16>
    tpu.vector_store %arg4[%c40_230, %c224_231], %150 {strides = array<i32>} : memref<64x288xbf16, #tpu.memory_space<vmem>>, vector<8x32xbf16>,
    %c0_232 = arith.constant 0 : index
    %c49 = arith.constant 49 : index
    %c0_233 = arith.constant 0 : index
    %152 = vector.load %arg1[%c0_232, %c49, %c0_233] : memref<1x64x32xbf16, #tpu.memory_space<vmem>>, vector<1x7x32xbf16>
    %153 = vector.shape_cast %152 : vector<1x7x32xbf16> to vector<7x32xbf16>
    %c40_234 = arith.constant 40 : index
    %c256_235 = arith.constant 256 : index
    %154 = vector.load %arg4[%c40_234, %c256_235] : memref<64x288xbf16, #tpu.memory_space<vmem>>, vector<7x32xbf16>
    tpu.vector_store %arg4[%c40_234, %c256_235], %153 {strides = array<i32>} : memref<64x288xbf16, #tpu.memory_space<vmem>>, vector<7x32xbf16>,
    %c0_236 = arith.constant 0 : index
    %c40_237 = arith.constant 40 : index
    %c0_238 = arith.constant 0 : index
    %155 = vector.load %arg1[%c0_236, %c40_237, %c0_238] : memref<1x64x32xbf16, #tpu.memory_space<vmem>>, vector<1x7x32xbf16>
    %156 = vector.shape_cast %155 : vector<1x7x32xbf16> to vector<7x32xbf16>
    %c49_239 = arith.constant 49 : index
    %c0_240 = arith.constant 0 : index
    %157 = vector.load %arg4[%c49_239, %c0_240] : memref<64x288xbf16, #tpu.memory_space<vmem>>, vector<7x32xbf16>
    tpu.vector_store %arg4[%c49_239, %c0_240], %156 {strides = array<i32>} : memref<64x288xbf16, #tpu.memory_space<vmem>>, vector<7x32xbf16>,
    %c0_241 = arith.constant 0 : index
    %c40_242 = arith.constant 40 : index
    %c0_243 = arith.constant 0 : index
    %158 = vector.load %arg1[%c0_241, %c40_242, %c0_243] : memref<1x64x32xbf16, #tpu.memory_space<vmem>>, vector<1x8x32xbf16>
    %159 = vector.shape_cast %158 : vector<1x8x32xbf16> to vector<8x32xbf16>
    %c48_244 = arith.constant 48 : index
    %c32_245 = arith.constant 32 : index
    %160 = vector.load %arg4[%c48_244, %c32_245] : memref<64x288xbf16, #tpu.memory_space<vmem>>, vector<8x32xbf16>
    tpu.vector_store %arg4[%c48_244, %c32_245], %159 {strides = array<i32>} : memref<64x288xbf16, #tpu.memory_space<vmem>>, vector<8x32xbf16>,
    %c0_246 = arith.constant 0 : index
    %c41_247 = arith.constant 41 : index
    %c0_248 = arith.constant 0 : index
    %161 = vector.load %arg1[%c0_246, %c41_247, %c0_248] : memref<1x64x32xbf16, #tpu.memory_space<vmem>>, vector<1x7x32xbf16>
    %162 = vector.shape_cast %161 : vector<1x7x32xbf16> to vector<7x32xbf16>
    %c48_249 = arith.constant 48 : index
    %c64_250 = arith.constant 64 : index
    %163 = vector.load %arg4[%c48_249, %c64_250] : memref<64x288xbf16, #tpu.memory_space<vmem>>, vector<7x32xbf16>
    tpu.vector_store %arg4[%c48_249, %c64_250], %162 {strides = array<i32>} : memref<64x288xbf16, #tpu.memory_space<vmem>>, vector<7x32xbf16>,
    %c0_251 = arith.constant 0 : index
    %c48_252 = arith.constant 48 : index
    %c0_253 = arith.constant 0 : index
    %164 = vector.load %arg1[%c0_251, %c48_252, %c0_253] : memref<1x64x32xbf16, #tpu.memory_space<vmem>>, vector<1x7x32xbf16>
    %165 = vector.shape_cast %164 : vector<1x7x32xbf16> to vector<7x32xbf16>
    %c49_254 = arith.constant 49 : index
    %c96_255 = arith.constant 96 : index
    %166 = vector.load %arg4[%c49_254, %c96_255] : memref<64x288xbf16, #tpu.memory_space<vmem>>, vector<7x32xbf16>
    tpu.vector_store %arg4[%c49_254, %c96_255], %165 {strides = array<i32>} : memref<64x288xbf16, #tpu.memory_space<vmem>>, vector<7x32xbf16>,
    %c0_256 = arith.constant 0 : index
    %c48_257 = arith.constant 48 : index
    %c0_258 = arith.constant 0 : index
    %167 = vector.load %arg1[%c0_256, %c48_257, %c0_258] : memref<1x64x32xbf16, #tpu.memory_space<vmem>>, vector<1x8x32xbf16>
    %168 = vector.shape_cast %167 : vector<1x8x32xbf16> to vector<8x32xbf16>
    %c48_259 = arith.constant 48 : index
    %c128_260 = arith.constant 128 : index
    %169 = vector.load %arg4[%c48_259, %c128_260] : memref<64x288xbf16, #tpu.memory_space<vmem>>, vector<8x32xbf16>
    tpu.vector_store %arg4[%c48_259, %c128_260], %168 {strides = array<i32>} : memref<64x288xbf16, #tpu.memory_space<vmem>>, vector<8x32xbf16>,
    %c0_261 = arith.constant 0 : index
    %c49_262 = arith.constant 49 : index
    %c0_263 = arith.constant 0 : index
    %170 = vector.load %arg1[%c0_261, %c49_262, %c0_263] : memref<1x64x32xbf16, #tpu.memory_space<vmem>>, vector<1x7x32xbf16>
    %171 = vector.shape_cast %170 : vector<1x7x32xbf16> to vector<7x32xbf16>
    %c48_264 = arith.constant 48 : index
    %c160_265 = arith.constant 160 : index
    %172 = vector.load %arg4[%c48_264, %c160_265] : memref<64x288xbf16, #tpu.memory_space<vmem>>, vector<7x32xbf16>
    tpu.vector_store %arg4[%c48_264, %c160_265], %171 {strides = array<i32>} : memref<64x288xbf16, #tpu.memory_space<vmem>>, vector<7x32xbf16>,
    %c0_266 = arith.constant 0 : index
    %c56 = arith.constant 56 : index
    %c0_267 = arith.constant 0 : index
    %173 = vector.load %arg1[%c0_266, %c56, %c0_267] : memref<1x64x32xbf16, #tpu.memory_space<vmem>>, vector<1x7x32xbf16>
    %174 = vector.shape_cast %173 : vector<1x7x32xbf16> to vector<7x32xbf16>
    %c49_268 = arith.constant 49 : index
    %c192_269 = arith.constant 192 : index
    %175 = vector.load %arg4[%c49_268, %c192_269] : memref<64x288xbf16, #tpu.memory_space<vmem>>, vector<7x32xbf16>
    tpu.vector_store %arg4[%c49_268, %c192_269], %174 {strides = array<i32>} : memref<64x288xbf16, #tpu.memory_space<vmem>>, vector<7x32xbf16>,
    %c0_270 = arith.constant 0 : index
    %c56_271 = arith.constant 56 : index
    %c0_272 = arith.constant 0 : index
    %176 = vector.load %arg1[%c0_270, %c56_271, %c0_272] : memref<1x64x32xbf16, #tpu.memory_space<vmem>>, vector<1x8x32xbf16>
    %177 = vector.shape_cast %176 : vector<1x8x32xbf16> to vector<8x32xbf16>
    %c48_273 = arith.constant 48 : index
    %c224_274 = arith.constant 224 : index
    %178 = vector.load %arg4[%c48_273, %c224_274] : memref<64x288xbf16, #tpu.memory_space<vmem>>, vector<8x32xbf16>
    tpu.vector_store %arg4[%c48_273, %c224_274], %177 {strides = array<i32>} : memref<64x288xbf16, #tpu.memory_space<vmem>>, vector<8x32xbf16>,
    %c0_275 = arith.constant 0 : index
    %c57 = arith.constant 57 : index
    %c0_276 = arith.constant 0 : index
    %179 = vector.load %arg1[%c0_275, %c57, %c0_276] : memref<1x64x32xbf16, #tpu.memory_space<vmem>>, vector<1x7x32xbf16>
    %180 = vector.shape_cast %179 : vector<1x7x32xbf16> to vector<7x32xbf16>
    %c48_277 = arith.constant 48 : index
    %c256_278 = arith.constant 256 : index
    %181 = vector.load %arg4[%c48_277, %c256_278] : memref<64x288xbf16, #tpu.memory_space<vmem>>, vector<7x32xbf16>
    tpu.vector_store %arg4[%c48_277, %c256_278], %180 {strides = array<i32>} : memref<64x288xbf16, #tpu.memory_space<vmem>>, vector<7x32xbf16>,
    %c0_279 = arith.constant 0 : index
    %c48_280 = arith.constant 48 : index
    %c0_281 = arith.constant 0 : index
    %182 = vector.load %arg1[%c0_279, %c48_280, %c0_281] : memref<1x64x32xbf16, #tpu.memory_space<vmem>>, vector<1x7x32xbf16>
    %183 = vector.shape_cast %182 : vector<1x7x32xbf16> to vector<7x32xbf16>
    %c57_282 = arith.constant 57 : index
    %c0_283 = arith.constant 0 : index
    %184 = vector.load %arg4[%c57_282, %c0_283] : memref<64x288xbf16, #tpu.memory_space<vmem>>, vector<7x32xbf16>
    tpu.vector_store %arg4[%c57_282, %c0_283], %183 {strides = array<i32>} : memref<64x288xbf16, #tpu.memory_space<vmem>>, vector<7x32xbf16>,
    %c0_284 = arith.constant 0 : index
    %c48_285 = arith.constant 48 : index
    %c0_286 = arith.constant 0 : index
    %185 = vector.load %arg1[%c0_284, %c48_285, %c0_286] : memref<1x64x32xbf16, #tpu.memory_space<vmem>>, vector<1x8x32xbf16>
    %186 = vector.shape_cast %185 : vector<1x8x32xbf16> to vector<8x32xbf16>
    %c56_287 = arith.constant 56 : index
    %c32_288 = arith.constant 32 : index
    %187 = vector.load %arg4[%c56_287, %c32_288] : memref<64x288xbf16, #tpu.memory_space<vmem>>, vector<8x32xbf16>
    tpu.vector_store %arg4[%c56_287, %c32_288], %186 {strides = array<i32>} : memref<64x288xbf16, #tpu.memory_space<vmem>>, vector<8x32xbf16>,
    %c0_289 = arith.constant 0 : index
    %c49_290 = arith.constant 49 : index
    %c0_291 = arith.constant 0 : index
    %188 = vector.load %arg1[%c0_289, %c49_290, %c0_291] : memref<1x64x32xbf16, #tpu.memory_space<vmem>>, vector<1x7x32xbf16>
    %189 = vector.shape_cast %188 : vector<1x7x32xbf16> to vector<7x32xbf16>
    %c56_292 = arith.constant 56 : index
    %c64_293 = arith.constant 64 : index
    %190 = vector.load %arg4[%c56_292, %c64_293] : memref<64x288xbf16, #tpu.memory_space<vmem>>, vector<7x32xbf16>
    tpu.vector_store %arg4[%c56_292, %c64_293], %189 {strides = array<i32>} : memref<64x288xbf16, #tpu.memory_space<vmem>>, vector<7x32xbf16>,
    %c0_294 = arith.constant 0 : index
    %c56_295 = arith.constant 56 : index
    %c0_296 = arith.constant 0 : index
    %191 = vector.load %arg1[%c0_294, %c56_295, %c0_296] : memref<1x64x32xbf16, #tpu.memory_space<vmem>>, vector<1x7x32xbf16>
    %192 = vector.shape_cast %191 : vector<1x7x32xbf16> to vector<7x32xbf16>
    %c57_297 = arith.constant 57 : index
    %c96_298 = arith.constant 96 : index
    %193 = vector.load %arg4[%c57_297, %c96_298] : memref<64x288xbf16, #tpu.memory_space<vmem>>, vector<7x32xbf16>
    tpu.vector_store %arg4[%c57_297, %c96_298], %192 {strides = array<i32>} : memref<64x288xbf16, #tpu.memory_space<vmem>>, vector<7x32xbf16>,
    %c0_299 = arith.constant 0 : index
    %c56_300 = arith.constant 56 : index
    %c0_301 = arith.constant 0 : index
    %194 = vector.load %arg1[%c0_299, %c56_300, %c0_301] : memref<1x64x32xbf16, #tpu.memory_space<vmem>>, vector<1x8x32xbf16>
    %195 = vector.shape_cast %194 : vector<1x8x32xbf16> to vector<8x32xbf16>
    %c56_302 = arith.constant 56 : index
    %c128_303 = arith.constant 128 : index
    %196 = vector.load %arg4[%c56_302, %c128_303] : memref<64x288xbf16, #tpu.memory_space<vmem>>, vector<8x32xbf16>
    tpu.vector_store %arg4[%c56_302, %c128_303], %195 {strides = array<i32>} : memref<64x288xbf16, #tpu.memory_space<vmem>>, vector<8x32xbf16>,
    %c0_304 = arith.constant 0 : index
    %c57_305 = arith.constant 57 : index
    %c0_306 = arith.constant 0 : index
    %197 = vector.load %arg1[%c0_304, %c57_305, %c0_306] : memref<1x64x32xbf16, #tpu.memory_space<vmem>>, vector<1x7x32xbf16>
    %198 = vector.shape_cast %197 : vector<1x7x32xbf16> to vector<7x32xbf16>
    %c56_307 = arith.constant 56 : index
    %c160_308 = arith.constant 160 : index
    %199 = vector.load %arg4[%c56_307, %c160_308] : memref<64x288xbf16, #tpu.memory_space<vmem>>, vector<7x32xbf16>
    tpu.vector_store %arg4[%c56_307, %c160_308], %198 {strides = array<i32>} : memref<64x288xbf16, #tpu.memory_space<vmem>>, vector<7x32xbf16>,
    %c0_309 = arith.constant 0 : index
    %c0_310 = arith.constant 0 : index
    %200 = vector.load %arg4[%c0_309, %c0_310] : memref<64x288xbf16, #tpu.memory_space<vmem>>, vector<64x288xbf16>
    %c0_311 = arith.constant 0 : index
    %c0_312 = arith.constant 0 : index
    %201 = vector.load %arg2[%c0_311, %c0_312] : memref<288x32xbf16, #tpu.memory_space<vmem>>, vector<288x32xbf16>
    %cst_313 = arith.constant dense<0.000000e+00> : vector<64x32xf32>
    %202 = tpu.matmul %200, %201, %cst_313 {dimension_numbers = #tpu.dot_dimension_numbers<[1], [0], [0], [1], [0, 0, 1, 1], [], []>} : vector<64x288xbf16>, vector<288x32xbf16>, vector<64x32xf32> -> vector<64x32xf32>
    %cst_314 = arith.constant dense<0.000000e+00> : vector<32xf32>
    %203 = vector.multi_reduction <add>, %202, %cst_314 [0] : vector<64x32xf32> to vector<32xf32>
    %204 = vector.shape_cast %203 : vector<32xf32> to vector<1x32xf32>
    %cst_315 = arith.constant 1.562500e-02 : f32
    %205 = vector.broadcast %cst_315 : f32 to vector<1x32xf32>
    %206 = arith.mulf %204, %205 : vector<1x32xf32>
    %207 = vector.broadcast %206 : vector<1x32xf32> to vector<64x32xf32>
    %208 = arith.subf %202, %207 : vector<64x32xf32>
    %209 = arith.mulf %208, %208 : vector<64x32xf32>
    %cst_316 = arith.constant dense<0.000000e+00> : vector<32xf32>
    %210 = vector.multi_reduction <add>, %209, %cst_316 [0] : vector<64x32xf32> to vector<32xf32>
    %211 = vector.shape_cast %210 : vector<32xf32> to vector<1x32xf32>
    %cst_317 = arith.constant 1.562500e-02 : f32
    %212 = vector.broadcast %cst_317 : f32 to vector<1x32xf32>
    %213 = arith.mulf %211, %212 : vector<1x32xf32>
    %cst_318 = arith.constant 9.99999974E-6 : f32
    %214 = vector.broadcast %cst_318 : f32 to vector<1x32xf32>
    %215 = arith.addf %213, %214 : vector<1x32xf32>
    %216 = math.rsqrt %215 : vector<1x32xf32>
    %217 = vector.broadcast %216 : vector<1x32xf32> to vector<64x32xf32>
    %218 = arith.mulf %208, %217 : vector<64x32xf32>
    %cst_319 = arith.constant 0.000000e+00 : f32
    %219 = vector.broadcast %cst_319 : f32 to vector<64x32xf32>
    %220 = arith.cmpf ogt, %218, %219 : vector<64x32xf32>
    %cst_320 = arith.constant 2.000000e-01 : f32
    %221 = vector.broadcast %cst_320 : f32 to vector<64x32xf32>
    %222 = arith.mulf %221, %218 : vector<64x32xf32>
    %223 = arith.select %220, %218, %222 : vector<64x32xi1>, vector<64x32xf32>
    %224 = arith.truncf %223 : vector<64x32xf32> to vector<64x32xbf16>
    %c0_321 = arith.constant 0 : index
    %c0_322 = arith.constant 0 : index
    %c0_323 = arith.constant 0 : index
    %225 = vector.load %arg3[%c0_321, %c0_322, %c0_323] : memref<1x64x32xbf16, #tpu.memory_space<vmem>>, vector<1x64x32xbf16>
    %226 = vector.shape_cast %225 : vector<1x64x32xbf16> to vector<64x32xbf16>
    %227 = vector.shape_cast %224 : vector<64x32xbf16> to vector<1x64x32xbf16>
    tpu.vector_store %arg3[%c0_321, %c0_322, %c0_323], %227 {strides = array<i32>} : memref<1x64x32xbf16, #tpu.memory_space<vmem>>, vector<1x64x32xbf16>,
    return
  }
  func.func @transform_0(%arg0: i32) -> (i32, i32, i32) {
    %c0_i32 = arith.constant 0 : i32
    %c0_i32_0 = arith.constant 0 : i32
    %c0_i32_1 = arith.constant 0 : i32
    return %arg0, %c0_i32, %c0_i32_0 : i32, i32, i32
  }
  func.func @transform_1(%arg0: i32) -> (i32, i32) {
    %c0_i32 = arith.constant 0 : i32
    %c0_i32_0 = arith.constant 0 : i32
    %c0_i32_1 = arith.constant 0 : i32
    return %c0_i32, %c0_i32_0 : i32, i32
  }
  func.func @transform_2(%arg0: i32) -> (i32, i32, i32) {
    %c0_i32 = arith.constant 0 : i32
    %c0_i32_0 = arith.constant 0 : i32
    %c0_i32_1 = arith.constant 0 : i32
    return %arg0, %c0_i32, %c0_i32_0 : i32, i32, i32
  }
}

</mosaic_0001>

<llo_original>
// kernel: trans_unet_down_forward.3
$region0: #{trans_unet_down_forward.3}
  #allocation0 [shape = 'u32[]', space=smem, size = 0x4, offset = 0x4, fixed_abs, tag = 'smem constant byte address 0x4 - core index']
  #allocation1 [shape = 'u32[144,128]{1,0:T(1,128)}', space=vmem, size = 0x12000, scoped, tag = 'internal scratch']
  #allocation2 [shape = 'bf16[64,64]{1,0:T(16,128)(2,1)}', space=vmem, size = 0x4000, scoped, tag = 'scratch operand']
  %s0 = inlined_call_operand.vmem [shape: bf16[2,81,16], index: 0, kind: input, shape index: {}]
  %s1 = inlined_call_operand.vmem [shape: bf16[64,32], index: 1, kind: input, shape index: {}]
  %s2 = inlined_call_operand.vmem [shape: bf16[2,64,32], index: 2, kind: output, shape index: {}]
  %s3 = sld [smem:[#allocation0]]
  $region41: #{trans_unet_down_forward.3} parent=0
    _
  %s5 = ssub.s32 1, %s3
  %s6 = scalar_select 0, %s5, %s3
  loop: start=0, step=1, limit=4
  $region2: #{trans_unet_down_forward.3} parent=0 // loop_pre_header
    _
  $region3: #{trans_unet_down_forward.3} parent=0 // loop_header
    %s8 = sphi 0, %s12
    %p9 = scmp.ge.s32.totalorder %s8, 4
    %s18 = sphi 0, %s20
    %s21 = sphi 0, %s18
    %s22 = sphi 0, %s21
    %s38 = sphi 0, %s22
    %s42 = sphi 0, %s42
    %s44 = sphi 0, %s42
    %s45 = sphi 0, %s44
    %s59 = sphi 0, %s45
    %s65 = sphi 0, %s67
    %s68 = sphi 0, %s65
    %s69 = sphi 0, %s68
    %s85 = sphi 0, %s69
  $region4: #{trans_unet_down_forward.3} parent=0 // loop_header_branch
    %11 = sbr.rel (%p9) target = $region8
  $region5: #{trans_unet_down_forward.3} parent=0 // loop_body
    %s13 = ssub.s32 %s8, 1
    %s14 = ssub.s32 %s8, 2
    %s15 = sadd.s32 %s8, 1
    %s16 = ssub.s32 %s8, %s15
    %p17 = scmp.eq.s32.totalorder %s16, 0
    %s19 = sadd.s32 %s18, 1
    %s20 = scalar_select %p17, %s18, %s19
    %p23 = pneg %p17
    %p24 = scmp.eq.s32.totalorder %s8, 1
    %p25 = por %p23, %p24
    %p26 = scmp.ne.s32.totalorder %s18, %s21
    %p27 = scmp.eq.s32.totalorder %s8, 0
    %p28 = por %p26, %p27
    %p29 = scmp.ne.s32.totalorder %s18, %s21
    %p30 = scmp.eq.s32.totalorder %s13, 1
    %p31 = por %p29, %p30
    %p32 = scmp.ne.s32.totalorder %s21, %s22
    %p33 = scmp.eq.s32.totalorder %s13, 0
    %p34 = por %p32, %p33
    %p35 = scmp.ne.s32.totalorder %s21, %s22
    %p36 = scmp.eq.s32.totalorder %s14, 1
    %p37 = por %p35, %p36
    %p39 = scmp.ne.s32.totalorder %s22, %s38
    %p40 = scmp.eq.s32.totalorder %s14, 0
    %p41 = por %p39, %p40
    %s43 = sadd.s32 %s42, 1
    %p46 = scmp.eq.s32.totalorder %s8, 1
    %p47 = scmp.ne.s32.totalorder %s42, %s44
    %p48 = scmp.eq.s32.totalorder %s8, 0
    %p49 = por %p47, %p48
    %p50 = scmp.ne.s32.totalorder %s42, %s44
    %p51 = scmp.eq.s32.totalorder %s13, 1
    %p52 = por %p50, %p51
    %p53 = scmp.ne.s32.totalorder %s44, %s45
    %p54 = scmp.eq.s32.totalorder %s13, 0
    %p55 = por %p53, %p54
    %p56 = scmp.ne.s32.totalorder %s44, %s45
    %p57 = scmp.eq.s32.totalorder %s14, 1
    %p58 = por %p56, %p57
    %p60 = scmp.ne.s32.totalorder %s45, %s59
    %p61 = scmp.eq.s32.totalorder %s14, 0
    %p62 = por %p60, %p61
    %s63 = ssub.s32 %s8, %s15
    %p64 = scmp.eq.s32.totalorder %s63, 0
    %s66 = sadd.s32 %s65, 1
    %s67 = scalar_select %p64, %s65, %s66
    %p70 = pneg %p64
    %p71 = scmp.eq.s32.totalorder %s8, 1
    %p72 = por %p70, %p71
    %p73 = scmp.ne.s32.totalorder %s65, %s68
    %p74 = scmp.eq.s32.totalorder %s8, 0
    %p75 = por %p73, %p74
    %p76 = scmp.ne.s32.totalorder %s65, %s68
    %p77 = scmp.eq.s32.totalorder %s13, 1
    %p78 = por %p76, %p77
    %p79 = scmp.ne.s32.totalorder %s68, %s69
    %p80 = scmp.eq.s32.totalorder %s13, 0
    %p81 = por %p79, %p80
    %p82 = scmp.ne.s32.totalorder %s68, %s69
    %p83 = scmp.eq.s32.totalorder %s14, 1
    %p84 = por %p82, %p83
    %p86 = scmp.ne.s32.totalorder %s69, %s85
    %p87 = scmp.eq.s32.totalorder %s14, 0
    %p88 = por %p86, %p87
    %p89 = scmp.le.s32.totalorder 1, %s8
    %p90 = scmp.lt.s32.totalorder %s8, 3
    %p91 = pnand %p89, %p90
    %p92 = pneg %p91
    // Predicated region
    $region9: #{trans_unet_down_forward.3} parent=5 // pred_check
      _
    $region10: #{trans_unet_down_forward.3} parent=5 // pred_check_branch
      %94 = sbr.rel (%p91) target = $region12
    $region11: #{trans_unet_down_forward.3} parent=5 // pred_region
      %s95 = ssub.s32 %s8, 1
      // Predicated region
      $region13: #{trans_unet_down_forward.3} parent=11 // pred_check
        %p96 = pneg %p55
      $region14: #{trans_unet_down_forward.3} parent=11 // pred_check_branch
        %98 = sbr.rel (%p96) target = $region16
      $region15: #{trans_unet_down_forward.3} parent=11 // pred_region
        _
      $region16: #{trans_unet_down_forward.3} parent=11 // pred_fallthru
        _
    $region12: #{trans_unet_down_forward.3} parent=5 // pred_fallthru
      _
    %p99 = scmp.lt.s32.totalorder %s8, 2
    // Predicated region
    $region17: #{trans_unet_down_forward.3} parent=5 // pred_check
      %p100 = pneg %p99
    $region18: #{trans_unet_down_forward.3} parent=5 // pred_check_branch
      %102 = sbr.rel (%p100) target = $region20
    $region19: #{trans_unet_down_forward.3} parent=5 // pred_region
      // Predicated region
      $region21: #{trans_unet_down_forward.3} parent=19 // pred_check
        %p103 = pneg %p28
      $region22: #{trans_unet_down_forward.3} parent=19 // pred_check_branch
        %105 = sbr.rel (%p103) target = $region24
      $region23: #{trans_unet_down_forward.3} parent=19 // pred_region
        %p106 = scmp.lt.s32.totalorder %s8, 1
        %s107 = scalar_select %p106, %s8, 1
        %s108 = smul.addr %s107, 11
        %s109 = smul.addr %s108, 4
        %s110 = scalar_lea.vmem %s0, %s109
      $region24: #{trans_unet_down_forward.3} parent=19 // pred_fallthru
        _
    $region20: #{trans_unet_down_forward.3} parent=5 // pred_fallthru
      _
    %p111 = scmp.le.s32.totalorder 1, %s8
    %p112 = scmp.lt.s32.totalorder %s8, 3
    %p113 = pnand %p111, %p112
    %p114 = pneg %p113
    // Predicated region
    $region25: #{trans_unet_down_forward.3} parent=5 // pred_check
      _
    $region26: #{trans_unet_down_forward.3} parent=5 // pred_check_branch
      %116 = sbr.rel (%p113) target = $region28
    $region27: #{trans_unet_down_forward.3} parent=5 // pred_region
      %s117 = ssub.s32 %s8, 1
      %p118 = scmp.lt.s32.totalorder %s13, 1
      %s119 = scalar_select %p118, %s13, 1
      %s120 = smul.addr %s119, 11
      %s121 = smul.addr %s120, 4
      %s122 = scalar_lea.vmem %s0, %s121
      %p123 = pneg %p34
      %p124 = pneg %p31
      %p125 = pneg %p55
      %p126 = pneg %p52
      %p127 = pneg %p81
      %p128 = pneg %p78
      %p129 = scmp.lt.s32.totalorder %s13, 1
      %s130 = scalar_select %p129, %s13, 1
      %s131 = smul.addr %s130, 8
      %s132 = smul.addr %s131, 4
      %s133 = scalar_lea.vmem %s2, %s132
      %p134 = scmp.lt.s32.totalorder %s13, 1
      %s135 = scalar_select %p134, %s13, 1
      %s136 = smul.addr %s135, 11
      %s137 = smul.addr %s136, 4
      %s138 = scalar_lea.vmem %s0, %s137
      %p139 = scmp.lt.s32.totalorder %s13, 1
      %s140 = scalar_select %p139, %s13, 1
      %s141 = smul.addr %s140, 8
      %s142 = smul.addr %s141, 4
      %s143 = scalar_lea.vmem %s2, %s142
      %v145 = vld [vmem:[%s138] sm:$0xf]
      %vm146 = vcmask 125952
      %147 = vst.msk [vmem:[#allocation2] sm:$0xf] %vm146, %v145
      %v148 = vld [vmem:[%s138] sm:$0xf]
      %v149 = vld [vmem:[%s138 + $0x4] sm:$0x1]
      %v152 = vunpack.c.l.b16 %v148
      %v153 = vunpack.c.l.b16 %v149
      %v154 = vpack.c.b16 %v153, %v152
      %v156 = vshrl.u32 %v154, 16
      %v158 = vshll.u32 %v154, 16
      %v160 = vrot.slane %v158, 1
      %v161 = vor.u32 %v156, %v160
      %162 = vrot.lane.b32.xlu0 %v161, 16
      %v163 = vpop.permute.xlu0 %162
      %vm165 = vcmask 257152
      %166 = vst.msk [vmem:[#allocation2] sm:$0xf] %vm165, %v163
      %v167 = vld [vmem:[%s138 + $0x4] sm:$0xf]
      %v168 = vld [vmem:[%s138 + $0x8] sm:$0x1]
      %v171 = vunpack.c.l.b16 %v167
      %v172 = vunpack.c.l.b16 %v168
      %v173 = vpack.c.b16 %v172, %v171
      %v175 = vshrl.u32 %v173, 16
      %v177 = vshll.u32 %v173, 16
      %v179 = vrot.slane %v177, 1
      %v180 = vor.u32 %v175, %v179
      %181 = vrot.lane.b32.xlu0 %v180, 32
      %v182 = vpop.permute.xlu0 %181
      %vm184 = vcmask 388352
      %185 = vst.msk [vmem:[#allocation2] sm:$0xf] %vm184, %v182
      %v186 = vld [vmem:[%s138 + $0x4] sm:$0xe]
      %v187 = vld [vmem:[%s138 + $0x8] sm:$0x1]
      %v190 = vunpack.c.l.b16 %v186
      %v191 = vunpack.c.l.b16 %v187
      %v192 = vpack.c.b16 %v191, %v190
      %v193 = vrot.slane %v192, 1
      %194 = vrot.lane.b32.xlu0 %v193, 48
      %v195 = vpop.permute.xlu0 %194
      %vm197 = vcmask 519552
      %198 = vst.msk [vmem:[#allocation2] sm:$0xf] %vm197, %v195
      %v199 = vld [vmem:[%s138 + $0x4] sm:$0xf]
      %v200 = vld [vmem:[%s138 + $0x8] sm:$0x1]
      %v203 = vunpack.c.l.b16 %v199
      %v204 = vunpack.c.l.b16 %v200
      %v205 = vpack.c.b16 %v204, %v203
      %v207 = vshrl.u32 %v205, 16
      %v209 = vrot.slane %v207, 4
      %v210 = vshll.u32 %v205, 16
      %v212 = vrot.slane %v210, 5
      %v213 = vor.u32 %v209, %v212
      %vm215 = vcmask 130052
      %216 = vst.msk [vmem:[#allocation2] sm:$0xf0] %vm215, %v213
      %v217 = vld [vmem:[%s138 + $0x4] sm:$0xe]
      %v218 = vld [vmem:[%s138 + $0x8] sm:$0x1]
      %v221 = vunpack.c.l.b16 %v217
      %v222 = vunpack.c.l.b16 %v218
      %v223 = vpack.c.b16 %v222, %v221
      %v224 = vrot.slane %v223, 5
      %225 = vrot.lane.b32.xlu0 %v224, 16
      %v226 = vpop.permute.xlu0 %225
      %vm228 = vcmask 261252
      %229 = vst.msk [vmem:[#allocation2] sm:$0xf0] %vm228, %v226
      %v230 = vld [vmem:[%s138 + $0x8] sm:$0xe]
      %v231 = vld [vmem:[%s138 + $0xc] sm:$0x1]
      %v234 = vunpack.c.l.b16 %v230
      %v235 = vunpack.c.l.b16 %v231
      %v236 = vpack.c.b16 %v235, %v234
      %v237 = vrot.slane %v236, 5
      %238 = vrot.lane.b32.xlu0 %v237, 32
      %v239 = vpop.permute.xlu0 %238
      %vm241 = vcmask 392452
      %242 = vst.msk [vmem:[#allocation2] sm:$0xf0] %vm241, %v239
      %v243 = vld [vmem:[%s138 + $0x8] sm:$0xe]
      %v244 = vld [vmem:[%s138 + $0xc] sm:$0x3]
      %v247 = vunpack.c.l.b16 %v243
      %v248 = vunpack.c.l.b16 %v244
      %v249 = vpack.c.b16 %v248, %v247
      %v251 = vshrl.u32 %v249, 16
      %v253 = vrot.slane %v251, 5
      %v254 = vshll.u32 %v249, 16
      %v256 = vrot.slane %v254, 6
      %v257 = vor.u32 %v253, %v256
      %258 = vrot.lane.b32.xlu0 %v257, 48
      %v259 = vpop.permute.xlu0 %258
      %vm261 = vcmask 523652
      %262 = vst.msk [vmem:[#allocation2] sm:$0xf0] %vm261, %v259
      %v263 = vld [vmem:[%s138 + $0x8] sm:$0xe]
      %v264 = vld [vmem:[%s138 + $0xc] sm:$0x1]
      %v267 = vunpack.c.l.b16 %v263
      %v268 = vunpack.c.l.b16 %v264
      %v269 = vpack.c.b16 %v268, %v267
      %v270 = vrot.slane %v269, 1
      %272 = vst.msk [vmem:[#allocation2 + $0x8] sm:$0xf] %vm146, %v270
      %v273 = vld [vmem:[%s138 + $0x8] sm:$0xe]
      %v274 = vld [vmem:[%s138 + $0xc] sm:$0x3]
      %v277 = vunpack.c.l.b16 %v273
      %v278 = vunpack.c.l.b16 %v274
      %v279 = vpack.c.b16 %v278, %v277
      %v281 = vshrl.u32 %v279, 16
      %v283 = vrot.slane %v281, 1
      %v284 = vshll.u32 %v279, 16
      %v286 = vrot.slane %v284, 2
      %v287 = vor.u32 %v283, %v286
      %288 = vrot.lane.b32.xlu0 %v287, 16
      %v289 = vpop.permute.xlu0 %288
      %291 = vst.msk [vmem:[#allocation2 + $0x8] sm:$0xf] %vm165, %v289
      %v292 = vld [vmem:[%s138 + $0xc] sm:$0xe]
      %v293 = vld [vmem:[%s138 + $0x10] sm:$0x3]
      %v296 = vunpack.c.l.b16 %v292
      %v297 = vunpack.c.l.b16 %v293
      %v298 = vpack.c.b16 %v297, %v296
      %v300 = vshrl.u32 %v298, 16
      %v302 = vrot.slane %v300, 1
      %v303 = vshll.u32 %v298, 16
      %v305 = vrot.slane %v303, 2
      %v306 = vor.u32 %v302, %v305
      %307 = vrot.lane.b32.xlu0 %v306, 32
      %v308 = vpop.permute.xlu0 %307
      %310 = vst.msk [vmem:[#allocation2 + $0x8] sm:$0xf] %vm184, %v308
      %v311 = vld [vmem:[%s138 + $0xc] sm:$0xc]
      %v312 = vld [vmem:[%s138 + $0x10] sm:$0x3]
      %v315 = vunpack.c.l.b16 %v311
      %v316 = vunpack.c.l.b16 %v312
      %v317 = vpack.c.b16 %v316, %v315
      %v318 = vrot.slane %v317, 2
      %319 = vrot.lane.b32.xlu0 %v318, 48
      %v320 = vpop.permute.xlu0 %319
      %322 = vst.msk [vmem:[#allocation2 + $0x8] sm:$0xf] %vm197, %v320
      %v323 = vld [vmem:[%s138 + $0xc] sm:$0xe]
      %v324 = vld [vmem:[%s138 + $0x10] sm:$0x3]
      %v327 = vunpack.c.l.b16 %v323
      %v328 = vunpack.c.l.b16 %v324
      %v329 = vpack.c.b16 %v328, %v327
      %v331 = vshrl.u32 %v329, 16
      %v333 = vrot.slane %v331, 5
      %v334 = vshll.u32 %v329, 16
      %v336 = vrot.slane %v334, 6
      %v337 = vor.u32 %v333, %v336
      %339 = vst.msk [vmem:[#allocation2 + $0x8] sm:$0xf0] %vm215, %v337
      %v340 = vld [vmem:[%s138 + $0xc] sm:$0xc]
      %v341 = vld [vmem:[%s138 + $0x10] sm:$0x3]
      %v344 = vunpack.c.l.b16 %v340
      %v345 = vunpack.c.l.b16 %v341
      %v346 = vpack.c.b16 %v345, %v344
      %v347 = vrot.slane %v346, 6
      %348 = vrot.lane.b32.xlu0 %v347, 16
      %v349 = vpop.permute.xlu0 %348
      %351 = vst.msk [vmem:[#allocation2 + $0x8] sm:$0xf0] %vm228, %v349
      %v352 = vld [vmem:[%s138 + $0x10] sm:$0xc]
      %v353 = vld [vmem:[%s138 + $0x14] sm:$0x3]
      %v356 = vunpack.c.l.b16 %v352
      %v357 = vunpack.c.l.b16 %v353
      %v358 = vpack.c.b16 %v357, %v356
      %v359 = vrot.slane %v358, 6
      %360 = vrot.lane.b32.xlu0 %v359, 32
      %v361 = vpop.permute.xlu0 %360
      %363 = vst.msk [vmem:[#allocation2 + $0x8] sm:$0xf0] %vm241, %v361
      %v364 = vld [vmem:[%s138 + $0x10] sm:$0xc]
      %v365 = vld [vmem:[%s138 + $0x14] sm:$0x7]
      %v368 = vunpack.c.l.b16 %v364
      %v369 = vunpack.c.l.b16 %v365
      %v370 = vpack.c.b16 %v369, %v368
      %v372 = vshrl.u32 %v370, 16
      %v374 = vrot.slane %v372, 6
      %v375 = vshll.u32 %v370, 16
      %v377 = vrot.slane %v375, 7
      %v378 = vor.u32 %v374, %v377
      %379 = vrot.lane.b32.xlu0 %v378, 48
      %v380 = vpop.permute.xlu0 %379
      %382 = vst.msk [vmem:[#allocation2 + $0x8] sm:$0xf0] %vm261, %v380
      %v383 = vld [vmem:[%s138 + $0x10] sm:$0xc]
      %v384 = vld [vmem:[%s138 + $0x14] sm:$0x3]
      %v387 = vunpack.c.l.b16 %v383
      %v388 = vunpack.c.l.b16 %v384
      %v389 = vpack.c.b16 %v388, %v387
      %v390 = vrot.slane %v389, 2
      %392 = vst.msk [vmem:[#allocation2 + $0x10] sm:$0xf] %vm146, %v390
      %v393 = vld [vmem:[%s138 + $0x10] sm:$0xc]
      %v394 = vld [vmem:[%s138 + $0x14] sm:$0x7]
      %v397 = vunpack.c.l.b16 %v393
      %v398 = vunpack.c.l.b16 %v394
      %v399 = vpack.c.b16 %v398, %v397
      %v401 = vshrl.u32 %v399, 16
      %v403 = vrot.slane %v401, 2
      %v404 = vshll.u32 %v399, 16
      %v406 = vrot.slane %v404, 3
      %v407 = vor.u32 %v403, %v406
      %408 = vrot.lane.b32.xlu0 %v407, 16
      %v409 = vpop.permute.xlu0 %408
      %411 = vst.msk [vmem:[#allocation2 + $0x10] sm:$0xf] %vm165, %v409
      %v412 = vld [vmem:[%s138 + $0x14] sm:$0xc]
      %v413 = vld [vmem:[%s138 + $0x18] sm:$0x7]
      %v416 = vunpack.c.l.b16 %v412
      %v417 = vunpack.c.l.b16 %v413
      %v418 = vpack.c.b16 %v417, %v416
      %v420 = vshrl.u32 %v418, 16
      %v422 = vrot.slane %v420, 2
      %v423 = vshll.u32 %v418, 16
      %v425 = vrot.slane %v423, 3
      %v426 = vor.u32 %v422, %v425
      %427 = vrot.lane.b32.xlu0 %v426, 32
      %v428 = vpop.permute.xlu0 %427
      %430 = vst.msk [vmem:[#allocation2 + $0x10] sm:$0xf] %vm184, %v428
      %v431 = vld [vmem:[%s138 + $0x14] sm:$0x8]
      %v432 = vld [vmem:[%s138 + $0x18] sm:$0x7]
      %v435 = vunpack.c.l.b16 %v431
      %v436 = vunpack.c.l.b16 %v432
      %v437 = vpack.c.b16 %v436, %v435
      %v438 = vrot.slane %v437, 3
      %439 = vrot.lane.b32.xlu0 %v438, 48
      %v440 = vpop.permute.xlu0 %439
      %442 = vst.msk [vmem:[#allocation2 + $0x10] sm:$0xf] %vm197, %v440
      %v443 = vld [vmem:[%s138 + $0x14] sm:$0xc]
      %v444 = vld [vmem:[%s138 + $0x18] sm:$0x7]
      %v447 = vunpack.c.l.b16 %v443
      %v448 = vunpack.c.l.b16 %v444
      %v449 = vpack.c.b16 %v448, %v447
      %v451 = vshrl.u32 %v449, 16
      %v453 = vrot.slane %v451, 6
      %v454 = vshll.u32 %v449, 16
      %v456 = vrot.slane %v454, 7
      %v457 = vor.u32 %v453, %v456
      %459 = vst.msk [vmem:[#allocation2 + $0x10] sm:$0xf0] %vm215, %v457
      %v460 = vld [vmem:[%s138 + $0x14] sm:$0x8]
      %v461 = vld [vmem:[%s138 + $0x18] sm:$0x7]
      %v464 = vunpack.c.l.b16 %v460
      %v465 = vunpack.c.l.b16 %v461
      %v466 = vpack.c.b16 %v465, %v464
      %v467 = vrot.slane %v466, 7
      %468 = vrot.lane.b32.xlu0 %v467, 16
      %v469 = vpop.permute.xlu0 %468
      %471 = vst.msk [vmem:[#allocation2 + $0x10] sm:$0xf0] %vm228, %v469
      %v472 = vld [vmem:[%s138 + $0x18] sm:$0x8]
      %v473 = vld [vmem:[%s138 + $0x1c] sm:$0x7]
      %v476 = vunpack.c.l.b16 %v472
      %v477 = vunpack.c.l.b16 %v473
      %v478 = vpack.c.b16 %v477, %v476
      %v479 = vrot.slane %v478, 7
      %480 = vrot.lane.b32.xlu0 %v479, 32
      %v481 = vpop.permute.xlu0 %480
      %483 = vst.msk [vmem:[#allocation2 + $0x10] sm:$0xf0] %vm241, %v481
      %v484 = vld [vmem:[%s138 + $0x18] sm:$0x8]
      %v485 = vld [vmem:[%s138 + $0x1c] sm:$0xf]
      %v488 = vunpack.c.l.b16 %v484
      %v489 = vunpack.c.l.b16 %v485
      %v490 = vpack.c.b16 %v489, %v488
      %v492 = vshrl.u32 %v490, 16
      %v494 = vrot.slane %v492, 7
      %v495 = vshll.u32 %v490, 16
      %v497 = vor.u32 %v494, %v495
      %498 = vrot.lane.b32.xlu0 %v497, 48
      %v499 = vpop.permute.xlu0 %498
      %501 = vst.msk [vmem:[#allocation2 + $0x10] sm:$0xf0] %vm261, %v499
      %v502 = vld [vmem:[%s138 + $0x18] sm:$0x8]
      %v503 = vld [vmem:[%s138 + $0x1c] sm:$0x7]
      %v506 = vunpack.c.l.b16 %v502
      %v507 = vunpack.c.l.b16 %v503
      %v508 = vpack.c.b16 %v507, %v506
      %v509 = vrot.slane %v508, 3
      %511 = vst.msk [vmem:[#allocation2 + $0x18] sm:$0xf] %vm146, %v509
      %v512 = vld [vmem:[%s138 + $0x18] sm:$0x8]
      %v513 = vld [vmem:[%s138 + $0x1c] sm:$0xf]
      %v516 = vunpack.c.l.b16 %v512
      %v517 = vunpack.c.l.b16 %v513
      %v518 = vpack.c.b16 %v517, %v516
      %v520 = vshrl.u32 %v518, 16
      %v522 = vrot.slane %v520, 3
      %v523 = vshll.u32 %v518, 16
      %v525 = vrot.slane %v523, 4
      %v526 = vor.u32 %v522, %v525
      %527 = vrot.lane.b32.xlu0 %v526, 16
      %v528 = vpop.permute.xlu0 %527
      %530 = vst.msk [vmem:[#allocation2 + $0x18] sm:$0xf] %vm165, %v528
      %v531 = vld [vmem:[%s138 + $0x1c] sm:$0x8]
      %v532 = vld [vmem:[%s138 + $0x20] sm:$0xf]
      %v535 = vunpack.c.l.b16 %v531
      %v536 = vunpack.c.l.b16 %v532
      %v537 = vpack.c.b16 %v536, %v535
      %v539 = vshrl.u32 %v537, 16
      %v541 = vrot.slane %v539, 3
      %v542 = vshll.u32 %v537, 16
      %v544 = vrot.slane %v542, 4
      %v545 = vor.u32 %v541, %v544
      %546 = vrot.lane.b32.xlu0 %v545, 32
      %v547 = vpop.permute.xlu0 %546
      %549 = vst.msk [vmem:[#allocation2 + $0x18] sm:$0xf] %vm184, %v547
      %v550 = vld [vmem:[%s138 + $0x20] sm:$0xf]
      %v552 = vunpack.c.l.b16 %v550
      %v553 = vpack.c.b16 %v552, %v552
      %554 = vrot.lane.b32.xlu0 %v553, 48
      %v555 = vpop.permute.xlu0 %554
      %557 = vst.msk [vmem:[#allocation2 + $0x18] sm:$0xf] %vm197, %v555
      %v558 = vld [vmem:[%s138 + $0x1c] sm:$0x8]
      %v559 = vld [vmem:[%s138 + $0x20] sm:$0xf]
      %v562 = vunpack.c.l.b16 %v558
      %v563 = vunpack.c.l.b16 %v559
      %v564 = vpack.c.b16 %v563, %v562
      %v566 = vshrl.u32 %v564, 16
      %v568 = vrot.slane %v566, 7
      %v569 = vshll.u32 %v564, 16
      %v571 = vor.u32 %v568, %v569
      %573 = vst.msk [vmem:[#allocation2 + $0x18] sm:$0xf0] %vm215, %v571
      %v574 = vld [vmem:[%s138 + $0x20] sm:$0xf]
      %v576 = vunpack.c.l.b16 %v574
      %v577 = vpack.c.b16 %v576, %v576
      %578 = vrot.lane.b32.xlu0 %v577, 16
      %v579 = vpop.permute.xlu0 %578
      %581 = vst.msk [vmem:[#allocation2 + $0x18] sm:$0xf0] %vm228, %v579
      %v582 = vld [vmem:[%s138 + $0x24] sm:$0xf]
      %v584 = vunpack.c.l.b16 %v582
      %v585 = vpack.c.b16 %v584, %v584
      %586 = vrot.lane.b32.xlu0 %v585, 32
      %v587 = vpop.permute.xlu0 %586
      %589 = vst.msk [vmem:[#allocation2 + $0x18] sm:$0xf0] %vm241, %v587
      %v590 = vld [vmem:[%s138 + $0x24] sm:$0xf]
      %v591 = vld [vmem:[%s138 + $0x28] sm:$0x1]
      %v594 = vunpack.c.l.b16 %v590
      %v595 = vunpack.c.l.b16 %v591
      %v596 = vpack.c.b16 %v595, %v594
      %v598 = vshrl.u32 %v596, 16
      %v600 = vrot.slane %v598, 4
      %v601 = vshll.u32 %v596, 16
      %v603 = vrot.slane %v601, 5
      %v604 = vor.u32 %v600, %v603
      %605 = vrot.lane.b32.xlu0 %v604, 48
      %v606 = vpop.permute.xlu0 %605
      %608 = vst.msk [vmem:[#allocation2 + $0x18] sm:$0xf0] %vm261, %v606
      %v609 = vld [vmem:[#allocation2] sm:$0xff]
      %v610 = vld [vmem:[#allocation2 + $0x8] sm:$0xff]
      %v611 = vld [vmem:[#allocation2 + $0x10] sm:$0xff]
      %v612 = vld [vmem:[#allocation2 + $0x18] sm:$0xff]
      %v613 = vld [vmem:[%s1] sm:$0xf]
      %v614 = vld [vmem:[%s1 + $0x4] sm:$0xf]
      %v615 = vld [vmem:[%s1 + $0x8] sm:$0xf]
      %v616 = vld [vmem:[%s1 + $0xc] sm:$0xf]
      %v617 = vld [vmem:[%s1 + $0x10] sm:$0xf]
      %v618 = vld [vmem:[%s1 + $0x14] sm:$0xf]
      %v619 = vld [vmem:[%s1 + $0x18] sm:$0xf]
      %v620 = vld [vmem:[%s1 + $0x1c] sm:$0xf]
      %v629 = vunpack.c.l.b16 %v613
      %v630 = vunpack.c.l.b16 %v614
      %v631 = vunpack.c.l.b16 %v615
      %v632 = vunpack.c.l.b16 %v616
      %v633 = vunpack.c.l.b16 %v617
      %v634 = vunpack.c.l.b16 %v618
      %v635 = vunpack.c.l.b16 %v619
      %v636 = vunpack.c.l.b16 %v620
      %v637 = vpack.c.b16 %v630, %v629
      %v638 = vpack.c.b16 %v632, %v631
      %v639 = vpack.c.b16 %v634, %v633
      %v640 = vpack.c.b16 %v636, %v635
      %vm645 = vcmask 523264
      %v647 = vsel %vm645, %v609, 0
      %v650 = vsel %vm645, %v610, 0
      %v653 = vsel %vm645, %v611, 0
      %v656 = vsel %vm645, %v612, 0
      %658 = vmatprep.subr.bf16.mxu0 0
      %659 = vmatpush1.bf16.msra.mxu0 %v637
      %660 = vmatprep.subr.bf16.mxu0 0
      %661 = vmatpush1.bf16.msra.mxu0 %v638
      %662 = vmatprep.subr.bf16.mxu0 0
      %663 = vmatpush1.bf16.msra.mxu0 %v639
      %664 = vmatprep.subr.bf16.mxu0 0
      %665 = vmatpush1.bf16.msra.mxu0 %v640
      %666 = vmatprep.subr.bf16.mxu0 0
      %667 = vmatpush1.bf16.msra.mxu0 0
      %668 = vmatprep.subr.bf16.mxu0 0
      %669 = vmatpush1.bf16.msra.mxu0 0
      %670 = vmatprep.subr.bf16.mxu0 0
      %671 = vmatpush1.bf16.msra.mxu0 0
      %672 = vmatprep.subr.bf16.mxu0 0
      %673 = vmatpush1.bf16.msra.mxu0 0
      %674 = vmatprep.subr.bf16.mxu0 0
      %675 = vmatpush1.bf16.msra.mxu0 0
      %676 = vmatprep.subr.bf16.mxu0 0
      %677 = vmatpush1.bf16.msra.mxu0 0
      %678 = vmatprep.subr.bf16.mxu0 0
      %679 = vmatpush1.bf16.msra.mxu0 0
      %680 = vmatprep.subr.bf16.mxu0 0
      %681 = vmatpush1.bf16.msra.mxu0 0
      %682 = vmatprep.subr.bf16.mxu0 0
      %683 = vmatpush1.bf16.msra.mxu0 0
      %684 = vmatprep.subr.bf16.mxu0 0
      %685 = vmatpush1.bf16.msra.mxu0 0
      %686 = vmatprep.subr.bf16.mxu0 0
      %687 = vmatpush1.bf16.msra.mxu0 0
      %688 = vmatprep.subr.bf16.mxu0 0
      %689 = vmatpush1.bf16.msra.mxu0 0
      %690 = vmatprep.mubr.bf16.mxu0 0
      %691 = vmatmul.mubr.bf16.gmra.mrb[0].mxu0 %v647
      %v692 = vpop.f32.mrb[0].mxu0
      %v693 = vadd.f32 0.0, %v692
      %v694 = vpop.f32.mrb[0].mxu0
      %v695 = vpop.f32.mrb[0].mxu0
      %v696 = vadd.f32 0.0, %v695
      %v697 = vpop.f32.mrb[0].mxu0
      %698 = vmatprep.mubr.bf16.mxu0 0
      %699 = vmatmul.mubr.bf16.gmra.mrb[0].mxu0 %v650
      %v700 = vpop.f32.mrb[0].mxu0
      %v701 = vadd.f32 0.0, %v700
      %v702 = vpop.f32.mrb[0].mxu0
      %v703 = vpop.f32.mrb[0].mxu0
      %v704 = vadd.f32 0.0, %v703
      %v705 = vpop.f32.mrb[0].mxu0
      %706 = vmatprep.mubr.bf16.mxu0 0
      %707 = vmatmul.mubr.bf16.gmra.mrb[0].mxu0 %v653
      %v708 = vpop.f32.mrb[0].mxu0
      %v709 = vadd.f32 0.0, %v708
      %v710 = vpop.f32.mrb[0].mxu0
      %v711 = vpop.f32.mrb[0].mxu0
      %v712 = vadd.f32 0.0, %v711
      %v713 = vpop.f32.mrb[0].mxu0
      %714 = vmatprep.mubr.bf16.mxu0 0
      %715 = vmatmul.mubr.bf16.gmra.mrb[0].mxu0 %v656
      %v716 = vpop.f32.mrb[0].mxu0
      %v717 = vadd.f32 0.0, %v716
      %v718 = vpop.f32.mrb[0].mxu0
      %v719 = vpop.f32.mrb[0].mxu0
      %v720 = vadd.f32 0.0, %v719
      %v721 = vpop.f32.mrb[0].mxu0
      %722 = vdwg.mxu0
      %vm723 = vcmask 261120
      %v724 = vsel %vm723, %v693, 0.0
      %v725 = vsel %vm723, %v696, 0.0
      %v726 = vadd.f32 %v724, %v725
      %v727 = vsel %vm723, %v701, 0.0
      %v728 = vadd.f32 %v726, %v727
      %v729 = vsel %vm723, %v704, 0.0
      %v730 = vadd.f32 %v728, %v729
      %v731 = vsel %vm723, %v709, 0.0
      %v732 = vadd.f32 %v730, %v731
      %v733 = vsel %vm723, %v712, 0.0
      %v734 = vadd.f32 %v732, %v733
      %v735 = vsel %vm723, %v717, 0.0
      %v736 = vadd.f32 %v734, %v735
      %v737 = vsel %vm723, %v720, 0.0
      %v738 = vadd.f32 %v736, %v737
      %v739 = vrot.slane %v738, 4
      %v740 = vadd.f32 %v738, %v739
      %v741 = vrot.slane %v740, 2
      %v742 = vadd.f32 %v740, %v741
      %v743 = vrot.slane %v742, 1
      %v744 = vadd.f32 %v742, %v743
      %v745 = vmul.f32 %v744, 0.015625
      %v746 = vsub.f32 %v693, %v745
      %v747 = vsub.f32 %v696, %v745
      %v748 = vsub.f32 %v701, %v745
      %v749 = vsub.f32 %v704, %v745
      %v750 = vsub.f32 %v709, %v745
      %v751 = vsub.f32 %v712, %v745
      %v752 = vsub.f32 %v717, %v745
      %v753 = vsub.f32 %v720, %v745
      %v754 = vmul.f32 %v746, %v746
      %v755 = vmul.f32 %v747, %v747
      %v756 = vmul.f32 %v748, %v748
      %v757 = vmul.f32 %v749, %v749
      %v758 = vmul.f32 %v750, %v750
      %v759 = vmul.f32 %v751, %v751
      %v760 = vmul.f32 %v752, %v752
      %v761 = vmul.f32 %v753, %v753
      %v762 = vsel %vm723, %v754, 0.0
      %v763 = vsel %vm723, %v755, 0.0
      %v764 = vadd.f32 %v762, %v763
      %v765 = vsel %vm723, %v756, 0.0
      %v766 = vadd.f32 %v764, %v765
      %v767 = vsel %vm723, %v757, 0.0
      %v768 = vadd.f32 %v766, %v767
      %v769 = vsel %vm723, %v758, 0.0
      %v770 = vadd.f32 %v768, %v769
      %v771 = vsel %vm723, %v759, 0.0
      %v772 = vadd.f32 %v770, %v771
      %v773 = vsel %vm723, %v760, 0.0
      %v774 = vadd.f32 %v772, %v773
      %v775 = vsel %vm723, %v761, 0.0
      %v776 = vadd.f32 %v774, %v775
      %v777 = vrot.slane %v776, 4
      %v778 = vadd.f32 %v776, %v777
      %v779 = vrot.slane %v778, 2
      %v780 = vadd.f32 %v778, %v779
      %v781 = vrot.slane %v780, 1
      %v782 = vadd.f32 %v780, %v781
      %v783 = vmul.f32 %v782, 0.015625
      %v784 = vadd.f32 %v783, 1e-05
      %v785 = vrsqrt.pop %v784
      %v786 = vmul.f32 %v746, %v785
      %v787 = vmul.f32 %v747, %v785
      %v788 = vmul.f32 %v748, %v785
      %v789 = vmul.f32 %v749, %v785
      %v790 = vmul.f32 %v750, %v785
      %v791 = vmul.f32 %v751, %v785
      %v792 = vmul.f32 %v752, %v785
      %v793 = vmul.f32 %v753, %v785
      %vm794 = vcmp.gt.f32.partialorder %v786, 0.0
      %vm795 = vcmp.gt.f32.partialorder %v787, 0.0
      %vm796 = vcmp.gt.f32.partialorder %v788, 0.0
      %vm797 = vcmp.gt.f32.partialorder %v789, 0.0
      %vm798 = vcmp.gt.f32.partialorder %v790, 0.0
      %vm799 = vcmp.gt.f32.partialorder %v791, 0.0
      %vm800 = vcmp.gt.f32.partialorder %v792, 0.0
      %vm801 = vcmp.gt.f32.partialorder %v793, 0.0
      %v802 = vmul.f32 %v786, 0.2
      %v803 = vmul.f32 %v787, 0.2
      %v804 = vmul.f32 %v788, 0.2
      %v805 = vmul.f32 %v789, 0.2
      %v806 = vmul.f32 %v790, 0.2
      %v807 = vmul.f32 %v791, 0.2
      %v808 = vmul.f32 %v792, 0.2
      %v809 = vmul.f32 %v793, 0.2
      %v810 = vsel %vm794, %v786, %v802
      %v811 = vsel %vm795, %v787, %v803
      %v812 = vsel %vm796, %v788, %v804
      %v813 = vsel %vm797, %v789, %v805
      %v814 = vsel %vm798, %v790, %v806
      %v815 = vsel %vm799, %v791, %v807
      %v816 = vsel %vm800, %v792, %v808
      %v817 = vsel %vm801, %v793, %v809
      %v818 = vpack.c.bf16 %v811, %v810
      %v819 = vpack.c.bf16 %v813, %v812
      %v820 = vpack.c.bf16 %v815, %v814
      %v821 = vpack.c.bf16 %v817, %v816
      %v826 = vunpack.c.l.b16 %v818
      %v827 = vunpack.c.h.b16 %v818
      %v828 = vunpack.c.l.b16 %v819
      %v829 = vunpack.c.h.b16 %v819
      %v830 = vunpack.c.l.b16 %v820
      %v831 = vunpack.c.h.b16 %v820
      %v832 = vunpack.c.l.b16 %v821
      %v833 = vunpack.c.h.b16 %v821
      %v834 = vpack.c.b16 %v826, %v826
      %v835 = vpack.c.b16 %v827, %v827
      %v836 = vpack.c.b16 %v828, %v828
      %v837 = vpack.c.b16 %v829, %v829
      %v838 = vpack.c.b16 %v830, %v830
      %v839 = vpack.c.b16 %v831, %v831
      %v840 = vpack.c.b16 %v832, %v832
      %v841 = vpack.c.b16 %v833, %v833
      %vm850 = vcmask 257024
      %851 = vst.msk [vmem:[%s143] sm:$0xf] %vm850, %v834
      %852 = vst.msk [vmem:[%s143 + $0x4] sm:$0xf] %vm850, %v835
      %853 = vst.msk [vmem:[%s143 + $0x8] sm:$0xf] %vm850, %v836
      %854 = vst.msk [vmem:[%s143 + $0xc] sm:$0xf] %vm850, %v837
      %855 = vst.msk [vmem:[%s143 + $0x10] sm:$0xf] %vm850, %v838
      %856 = vst.msk [vmem:[%s143 + $0x14] sm:$0xf] %vm850, %v839
      %857 = vst.msk [vmem:[%s143 + $0x18] sm:$0xf] %vm850, %v840
      %858 = vst.msk [vmem:[%s143 + $0x1c] sm:$0xf] %vm850, %v841
      %p859 = scmp.lt.s32.totalorder %s13, 1
      %s860 = scalar_select %p859, %s13, 1
      %s861 = smul.addr %s860, 8
      %s862 = smul.addr %s861, 4
      %s863 = scalar_lea.vmem %s2, %s862
      // Predicated region
      $region29: #{trans_unet_down_forward.3} parent=27 // pred_check
        %p864 = pneg %p78
      $region30: #{trans_unet_down_forward.3} parent=27 // pred_check_branch
        %866 = sbr.rel (%p864) target = $region32
      $region31: #{trans_unet_down_forward.3} parent=27 // pred_region
        _
      $region32: #{trans_unet_down_forward.3} parent=27 // pred_fallthru
        _
    $region28: #{trans_unet_down_forward.3} parent=5 // pred_fallthru
      _
    %p867 = scmp.le.s32.totalorder 2, %s8
    // Predicated region
    $region33: #{trans_unet_down_forward.3} parent=5 // pred_check
      %p868 = pneg %p867
    $region34: #{trans_unet_down_forward.3} parent=5 // pred_check_branch
      %870 = sbr.rel (%p868) target = $region36
    $region35: #{trans_unet_down_forward.3} parent=5 // pred_region
      %s871 = ssub.s32 %s8, 2
      // Predicated region
      $region37: #{trans_unet_down_forward.3} parent=35 // pred_check
        %p872 = pneg %p84
      $region38: #{trans_unet_down_forward.3} parent=35 // pred_check_branch
        %874 = sbr.rel (%p872) target = $region40
      $region39: #{trans_unet_down_forward.3} parent=35 // pred_region
        %p875 = scmp.lt.s32.totalorder %s14, 1
        %s876 = scalar_select %p875, %s14, 1
        %s877 = smul.addr %s876, 8
        %s878 = smul.addr %s877, 4
        %s879 = scalar_lea.vmem %s2, %s878
      $region40: #{trans_unet_down_forward.3} parent=35 // pred_fallthru
        _
    $region36: #{trans_unet_down_forward.3} parent=5 // pred_fallthru
      _
  $region6: #{trans_unet_down_forward.3} parent=0 // loop_footer
    %s12 = sadd.s32 1, %s8
  $region7: #{trans_unet_down_forward.3} parent=0 // loop_footer_branch
    %7 = sbr.rel target = $region3
  $region8: #{trans_unet_down_forward.3} parent=0 // loop_exit
    _

// kernel: trans_unet_down_forward.4
$region0: #{trans_unet_down_forward.4}
  #allocation0 [shape = 'u32[]', space=smem, size = 0x4, offset = 0x4, fixed_abs, tag = 'smem constant byte address 0x4 - core index']
  #allocation1 [shape = 'u32[144,128]{1,0:T(1,128)}', space=vmem, size = 0x12000, scoped, tag = 'internal scratch']
  #allocation2 [shape = 'bf16[64,288]{1,0:T(16,128)(2,1)}', space=vmem, size = 0xc000, scoped, tag = 'scratch operand']
  %s0 = inlined_call_operand.vmem [shape: bf16[2,64,32], index: 0, kind: input, shape index: {}]
  %s1 = inlined_call_operand.vmem [shape: bf16[288,32], index: 1, kind: input, shape index: {}]
  %s2 = inlined_call_operand.vmem [shape: bf16[2,64,32], index: 2, kind: output, shape index: {}]
  %s3 = sld [smem:[#allocation0]]
  $region41: #{trans_unet_down_forward.4} parent=0
    _
  %s5 = ssub.s32 1, %s3
  %s6 = scalar_select 0, %s5, %s3
  loop: start=0, step=1, limit=4
  $region2: #{trans_unet_down_forward.4} parent=0 // loop_pre_header
    _
  $region3: #{trans_unet_down_forward.4} parent=0 // loop_header
    %s8 = sphi 0, %s12
    %p9 = scmp.ge.s32.totalorder %s8, 4
    %s18 = sphi 0, %s20
    %s21 = sphi 0, %s18
    %s22 = sphi 0, %s21
    %s38 = sphi 0, %s22
    %s42 = sphi 0, %s42
    %s44 = sphi 0, %s42
    %s45 = sphi 0, %s44
    %s59 = sphi 0, %s45
    %s65 = sphi 0, %s67
    %s68 = sphi 0, %s65
    %s69 = sphi 0, %s68
    %s85 = sphi 0, %s69
  $region4: #{trans_unet_down_forward.4} parent=0 // loop_header_branch
    %11 = sbr.rel (%p9) target = $region8
  $region5: #{trans_unet_down_forward.4} parent=0 // loop_body
    %s13 = ssub.s32 %s8, 1
    %s14 = ssub.s32 %s8, 2
    %s15 = sadd.s32 %s8, 1
    %s16 = ssub.s32 %s8, %s15
    %p17 = scmp.eq.s32.totalorder %s16, 0
    %s19 = sadd.s32 %s18, 1
    %s20 = scalar_select %p17, %s18, %s19
    %p23 = pneg %p17
    %p24 = scmp.eq.s32.totalorder %s8, 1
    %p25 = por %p23, %p24
    %p26 = scmp.ne.s32.totalorder %s18, %s21
    %p27 = scmp.eq.s32.totalorder %s8, 0
    %p28 = por %p26, %p27
    %p29 = scmp.ne.s32.totalorder %s18, %s21
    %p30 = scmp.eq.s32.totalorder %s13, 1
    %p31 = por %p29, %p30
    %p32 = scmp.ne.s32.totalorder %s21, %s22
    %p33 = scmp.eq.s32.totalorder %s13, 0
    %p34 = por %p32, %p33
    %p35 = scmp.ne.s32.totalorder %s21, %s22
    %p36 = scmp.eq.s32.totalorder %s14, 1
    %p37 = por %p35, %p36
    %p39 = scmp.ne.s32.totalorder %s22, %s38
    %p40 = scmp.eq.s32.totalorder %s14, 0
    %p41 = por %p39, %p40
    %s43 = sadd.s32 %s42, 1
    %p46 = scmp.eq.s32.totalorder %s8, 1
    %p47 = scmp.ne.s32.totalorder %s42, %s44
    %p48 = scmp.eq.s32.totalorder %s8, 0
    %p49 = por %p47, %p48
    %p50 = scmp.ne.s32.totalorder %s42, %s44
    %p51 = scmp.eq.s32.totalorder %s13, 1
    %p52 = por %p50, %p51
    %p53 = scmp.ne.s32.totalorder %s44, %s45
    %p54 = scmp.eq.s32.totalorder %s13, 0
    %p55 = por %p53, %p54
    %p56 = scmp.ne.s32.totalorder %s44, %s45
    %p57 = scmp.eq.s32.totalorder %s14, 1
    %p58 = por %p56, %p57
    %p60 = scmp.ne.s32.totalorder %s45, %s59
    %p61 = scmp.eq.s32.totalorder %s14, 0
    %p62 = por %p60, %p61
    %s63 = ssub.s32 %s8, %s15
    %p64 = scmp.eq.s32.totalorder %s63, 0
    %s66 = sadd.s32 %s65, 1
    %s67 = scalar_select %p64, %s65, %s66
    %p70 = pneg %p64
    %p71 = scmp.eq.s32.totalorder %s8, 1
    %p72 = por %p70, %p71
    %p73 = scmp.ne.s32.totalorder %s65, %s68
    %p74 = scmp.eq.s32.totalorder %s8, 0
    %p75 = por %p73, %p74
    %p76 = scmp.ne.s32.totalorder %s65, %s68
    %p77 = scmp.eq.s32.totalorder %s13, 1
    %p78 = por %p76, %p77
    %p79 = scmp.ne.s32.totalorder %s68, %s69
    %p80 = scmp.eq.s32.totalorder %s13, 0
    %p81 = por %p79, %p80
    %p82 = scmp.ne.s32.totalorder %s68, %s69
    %p83 = scmp.eq.s32.totalorder %s14, 1
    %p84 = por %p82, %p83
    %p86 = scmp.ne.s32.totalorder %s69, %s85
    %p87 = scmp.eq.s32.totalorder %s14, 0
    %p88 = por %p86, %p87
    %p89 = scmp.le.s32.totalorder 1, %s8
    %p90 = scmp.lt.s32.totalorder %s8, 3
    %p91 = pnand %p89, %p90
    %p92 = pneg %p91
    // Predicated region
    $region9: #{trans_unet_down_forward.4} parent=5 // pred_check
      _
    $region10: #{trans_unet_down_forward.4} parent=5 // pred_check_branch
      %94 = sbr.rel (%p91) target = $region12
    $region11: #{trans_unet_down_forward.4} parent=5 // pred_region
      %s95 = ssub.s32 %s8, 1
      // Predicated region
      $region13: #{trans_unet_down_forward.4} parent=11 // pred_check
        %p96 = pneg %p55
      $region14: #{trans_unet_down_forward.4} parent=11 // pred_check_branch
        %98 = sbr.rel (%p96) target = $region16
      $region15: #{trans_unet_down_forward.4} parent=11 // pred_region
        _
      $region16: #{trans_unet_down_forward.4} parent=11 // pred_fallthru
        _
    $region12: #{trans_unet_down_forward.4} parent=5 // pred_fallthru
      _
    %p99 = scmp.lt.s32.totalorder %s8, 2
    // Predicated region
    $region17: #{trans_unet_down_forward.4} parent=5 // pred_check
      %p100 = pneg %p99
    $region18: #{trans_unet_down_forward.4} parent=5 // pred_check_branch
      %102 = sbr.rel (%p100) target = $region20
    $region19: #{trans_unet_down_forward.4} parent=5 // pred_region
      // Predicated region
      $region21: #{trans_unet_down_forward.4} parent=19 // pred_check
        %p103 = pneg %p28
      $region22: #{trans_unet_down_forward.4} parent=19 // pred_check_branch
        %105 = sbr.rel (%p103) target = $region24
      $region23: #{trans_unet_down_forward.4} parent=19 // pred_region
        %p106 = scmp.lt.s32.totalorder %s8, 1
        %s107 = scalar_select %p106, %s8, 1
        %s108 = smul.addr %s107, 8
        %s109 = smul.addr %s108, 4
        %s110 = scalar_lea.vmem %s0, %s109
      $region24: #{trans_unet_down_forward.4} parent=19 // pred_fallthru
        _
    $region20: #{trans_unet_down_forward.4} parent=5 // pred_fallthru
      _
    %p111 = scmp.le.s32.totalorder 1, %s8
    %p112 = scmp.lt.s32.totalorder %s8, 3
    %p113 = pnand %p111, %p112
    %p114 = pneg %p113
    // Predicated region
    $region25: #{trans_unet_down_forward.4} parent=5 // pred_check
      _
    $region26: #{trans_unet_down_forward.4} parent=5 // pred_check_branch
      %116 = sbr.rel (%p113) target = $region28
    $region27: #{trans_unet_down_forward.4} parent=5 // pred_region
      %s117 = ssub.s32 %s8, 1
      %p118 = scmp.lt.s32.totalorder %s13, 1
      %s119 = scalar_select %p118, %s13, 1
      %s120 = smul.addr %s119, 8
      %s121 = smul.addr %s120, 4
      %s122 = scalar_lea.vmem %s0, %s121
      %p123 = pneg %p34
      %p124 = pneg %p31
      %p125 = pneg %p55
      %p126 = pneg %p52
      %p127 = pneg %p81
      %p128 = pneg %p78
      %p129 = scmp.lt.s32.totalorder %s13, 1
      %s130 = scalar_select %p129, %s13, 1
      %s131 = smul.addr %s130, 8
      %s132 = smul.addr %s131, 4
      %s133 = scalar_lea.vmem %s2, %s132
      %p134 = scmp.lt.s32.totalorder %s13, 1
      %s135 = scalar_select %p134, %s13, 1
      %s136 = smul.addr %s135, 8
      %s137 = smul.addr %s136, 4
      %s138 = scalar_lea.vmem %s0, %s137
      %p139 = scmp.lt.s32.totalorder %s13, 1
      %s140 = scalar_select %p139, %s13, 1
      %s141 = smul.addr %s140, 8
      %s142 = smul.addr %s141, 4
      %s143 = scalar_lea.vmem %s2, %s142
      %145 = vst [vmem:[#allocation2] sm:$0xff] 0
      %146 = vst [vmem:[#allocation2 + $0x8] sm:$0xff] 0
      %vm147 = vcmask 261120
      %148 = vst.msk [vmem:[#allocation2 + $0x10] sm:$0xff] %vm147, 0
      %149 = vst [vmem:[#allocation2 + $0x18] sm:$0xff] 0
      %150 = vst [vmem:[#allocation2 + $0x20] sm:$0xff] 0
      %151 = vst.msk [vmem:[#allocation2 + $0x28] sm:$0xff] %vm147, 0
      %152 = vst [vmem:[#allocation2 + $0x30] sm:$0xff] 0
      %153 = vst [vmem:[#allocation2 + $0x38] sm:$0xff] 0
      %154 = vst.msk [vmem:[#allocation2 + $0x40] sm:$0xff] %vm147, 0
      %155 = vst [vmem:[#allocation2 + $0x48] sm:$0xff] 0
      %156 = vst [vmem:[#allocation2 + $0x50] sm:$0xff] 0
      %157 = vst.msk [vmem:[#allocation2 + $0x58] sm:$0xff] %vm147, 0
      %v158 = vld [vmem:[%s138] sm:$0xf]
      %v160 = vunpack.c.l.b16 %v158
      %v161 = vpack.c.b16 %v160, %v160
      %v163 = vshrl.u32 %v161, 16
      %v165 = vrot.slane %v163, 7
      %v166 = vshll.u32 %v161, 16
      %v168 = vor.u32 %v165, %v166
      %169 = vrot.lane.b32.xlu0 %v168, 96
      %v170 = vpop.permute.xlu0 %169
      %vm172 = vcmask 1044224
      %vm173 = vsmask.f32 7938
      %vm174 = vmand %vm172, %vm173
      %v175 = vld [vmem:[#allocation2] sm:$0xf]
      %v176 = vsel %vm174, %v170, %v175
      %177 = vst [vmem:[#allocation2] sm:$0xf] %v176
      %v178 = vld [vmem:[%s138] sm:$0xf]
      %vm179 = vcmask 257024
      %180 = vst.msk [vmem:[#allocation2 + $0x8] sm:$0xf] %vm179, %v178
      %v181 = vld [vmem:[%s138] sm:$0xf]
      %v183 = vunpack.c.l.b16 %v181
      %v184 = vpack.c.b16 %v183, %v183
      %v186 = vshrl.u32 %v184, 16
      %v188 = vshll.u32 %v184, 16
      %v190 = vrot.slane %v188, 1
      %v191 = vor.u32 %v186, %v190
      %192 = vrot.lane.b32.xlu0 %v191, 32
      %v193 = vpop.permute.xlu0 %192
      %vm195 = vcmask 519424
      %vm196 = vsmask.f32 3328
      %vm197 = vmand %vm195, %vm196
      %v198 = vld [vmem:[#allocation2 + $0x8] sm:$0xf]
      %v199 = vsel %vm197, %v193, %v198
      %200 = vst [vmem:[#allocation2 + $0x8] sm:$0xf] %v199
      %v201 = vld [vmem:[%s138 + $0x4] sm:$0xf]
      %v203 = vunpack.c.l.b16 %v201
      %v204 = vpack.c.b16 %v203, %v203
      %v206 = vshrl.u32 %v204, 16
      %v208 = vrot.slane %v206, 7
      %v209 = vshll.u32 %v204, 16
      %v211 = vor.u32 %v208, %v209
      %212 = vrot.lane.b32.xlu0 %v211, 64
      %v213 = vpop.permute.xlu0 %212
      %vm215 = vcmask 781824
      %vm216 = vmand %vm215, %vm173
      %v217 = vld [vmem:[#allocation2 + $0x8] sm:$0xf]
      %v218 = vsel %vm216, %v213, %v217
      %219 = vst [vmem:[#allocation2 + $0x8] sm:$0xf] %v218
      %v220 = vld [vmem:[%s138 + $0x4] sm:$0xf]
      %v222 = vunpack.c.l.b16 %v220
      %v223 = vpack.c.b16 %v222, %v222
      %224 = vrot.lane.b32.xlu0 %v223, 96
      %v225 = vpop.permute.xlu0 %224
      %vm227 = vcmask 1044224
      %228 = vst.msk [vmem:[#allocation2 + $0x8] sm:$0xf] %vm227, %v225
      %v229 = vld [vmem:[%s138 + $0x4] sm:$0xf]
      %v231 = vunpack.c.l.b16 %v229
      %v232 = vpack.c.b16 %v231, %v231
      %v234 = vshrl.u32 %v232, 16
      %v236 = vshll.u32 %v232, 16
      %v238 = vrot.slane %v236, 1
      %v239 = vor.u32 %v234, %v238
      %vm241 = vcmask 257024
      %vm242 = vmand %vm241, %vm196
      %v243 = vld [vmem:[#allocation2 + $0x10] sm:$0xf]
      %v244 = vsel %vm242, %v239, %v243
      %245 = vst [vmem:[#allocation2 + $0x10] sm:$0xf] %v244
      %v246 = vld [vmem:[%s138] sm:$0xf]
      %v248 = vunpack.c.l.b16 %v246
      %v249 = vpack.c.b16 %v248, %v248
      %v251 = vshrl.u32 %v249, 16
      %v253 = vrot.slane %v251, 3
      %v254 = vshll.u32 %v249, 16
      %v256 = vrot.slane %v254, 4
      %v257 = vor.u32 %v253, %v256
      %vm259 = vcmask 261124
      %vm260 = vsmask.f32 7954
      %vm261 = vmand %vm259, %vm260
      %v262 = vld [vmem:[#allocation2] sm:$0xf0]
      %v263 = vsel %vm261, %v257, %v262
      %264 = vst [vmem:[#allocation2] sm:$0xf0] %v263
      %v265 = vld [vmem:[%s138] sm:$0xf]
      %v267 = vunpack.c.l.b16 %v265
      %v268 = vpack.c.b16 %v267, %v267
      %269 = vrot.lane.b32.xlu0 %v268, 32
      %v270 = vpop.permute.xlu0 %269
      %vm272 = vcmask 523524
      %273 = vst.msk [vmem:[#allocation2] sm:$0xf0] %vm272, %v270
      %v274 = vld [vmem:[%s138] sm:$0xf]
      %v276 = vunpack.c.l.b16 %v274
      %v277 = vpack.c.b16 %v276, %v276
      %v279 = vshrl.u32 %v277, 16
      %v281 = vrot.slane %v279, 4
      %v282 = vshll.u32 %v277, 16
      %v284 = vrot.slane %v282, 5
      %v285 = vor.u32 %v281, %v284
      %286 = vrot.lane.b32.xlu0 %v285, 64
      %v287 = vpop.permute.xlu0 %286
      %vm289 = vcmask 785924
      %vm290 = vsmask.f32 7424
      %vm291 = vmand %vm289, %vm290
      %v292 = vld [vmem:[#allocation2] sm:$0xf0]
      %v293 = vsel %vm291, %v287, %v292
      %294 = vst [vmem:[#allocation2] sm:$0xf0] %v293
      %v295 = vld [vmem:[%s138 + $0x4] sm:$0xf]
      %v297 = vunpack.c.l.b16 %v295
      %v298 = vpack.c.b16 %v297, %v297
      %v300 = vshrl.u32 %v298, 16
      %v302 = vrot.slane %v300, 3
      %v303 = vshll.u32 %v298, 16
      %v305 = vrot.slane %v303, 4
      %v306 = vor.u32 %v302, %v305
      %307 = vrot.lane.b32.xlu0 %v306, 96
      %v308 = vpop.permute.xlu0 %307
      %vm310 = vcmask 1048324
      %vm311 = vmand %vm310, %vm260
      %v312 = vld [vmem:[#allocation2] sm:$0xf0]
      %v313 = vsel %vm311, %v308, %v312
      %314 = vst [vmem:[#allocation2] sm:$0xf0] %v313
      %v315 = vld [vmem:[%s138 + $0x4] sm:$0xf]
      %v317 = vunpack.c.l.b16 %v315
      %v318 = vpack.c.b16 %v317, %v317
      %vm320 = vcmask 261124
      %321 = vst.msk [vmem:[#allocation2 + $0x8] sm:$0xf0] %vm320, %v318
      %v322 = vld [vmem:[%s138 + $0x4] sm:$0xf]
      %v324 = vunpack.c.l.b16 %v322
      %v325 = vpack.c.b16 %v324, %v324
      %v327 = vshrl.u32 %v325, 16
      %v329 = vrot.slane %v327, 4
      %v330 = vshll.u32 %v325, 16
      %v332 = vrot.slane %v330, 5
      %v333 = vor.u32 %v329, %v332
      %334 = vrot.lane.b32.xlu0 %v333, 32
      %v335 = vpop.permute.xlu0 %334
      %vm337 = vcmask 523524
      %vm338 = vmand %vm337, %vm290
      %v339 = vld [vmem:[#allocation2 + $0x8] sm:$0xf0]
      %v340 = vsel %vm338, %v335, %v339
      %341 = vst [vmem:[#allocation2 + $0x8] sm:$0xf0] %v340
      %v342 = vld [vmem:[%s138 + $0x8] sm:$0xf]
      %v344 = vunpack.c.l.b16 %v342
      %v345 = vpack.c.b16 %v344, %v344
      %v347 = vshrl.u32 %v345, 16
      %v349 = vrot.slane %v347, 3
      %v350 = vshll.u32 %v345, 16
      %v352 = vrot.slane %v350, 4
      %v353 = vor.u32 %v349, %v352
      %354 = vrot.lane.b32.xlu0 %v353, 64
      %v355 = vpop.permute.xlu0 %354
      %vm357 = vmand %vm289, %vm260
      %v358 = vld [vmem:[#allocation2 + $0x8] sm:$0xf0]
      %v359 = vsel %vm357, %v355, %v358
      %360 = vst [vmem:[#allocation2 + $0x8] sm:$0xf0] %v359
      %v361 = vld [vmem:[%s138 + $0x8] sm:$0xf]
      %v363 = vunpack.c.l.b16 %v361
      %v364 = vpack.c.b16 %v363, %v363
      %365 = vrot.lane.b32.xlu0 %v364, 96
      %v366 = vpop.permute.xlu0 %365
      %vm368 = vcmask 1048324
      %369 = vst.msk [vmem:[#allocation2 + $0x8] sm:$0xf0] %vm368, %v366
      %v370 = vld [vmem:[%s138 + $0x8] sm:$0xf]
      %v372 = vunpack.c.l.b16 %v370
      %v373 = vpack.c.b16 %v372, %v372
      %v375 = vshrl.u32 %v373, 16
      %v377 = vrot.slane %v375, 4
      %v378 = vshll.u32 %v373, 16
      %v380 = vrot.slane %v378, 5
      %v381 = vor.u32 %v377, %v380
      %vm383 = vmand %vm259, %vm290
      %v384 = vld [vmem:[#allocation2 + $0x10] sm:$0xf0]
      %v385 = vsel %vm383, %v381, %v384
      %386 = vst [vmem:[#allocation2 + $0x10] sm:$0xf0] %v385
      %v387 = vld [vmem:[%s138 + $0x4] sm:$0xf]
      %v389 = vunpack.c.l.b16 %v387
      %v390 = vpack.c.b16 %v389, %v389
      %v392 = vshrl.u32 %v390, 16
      %v394 = vrot.slane %v392, 7
      %v395 = vshll.u32 %v390, 16
      %v397 = vor.u32 %v394, %v395
      %vm399 = vmand %vm241, %vm173
      %v400 = vld [vmem:[#allocation2 + $0x18] sm:$0xf]
      %v401 = vsel %vm399, %v397, %v400
      %402 = vst [vmem:[#allocation2 + $0x18] sm:$0xf] %v401
      %v403 = vld [vmem:[%s138 + $0x4] sm:$0xf]
      %v405 = vunpack.c.l.b16 %v403
      %v406 = vpack.c.b16 %v405, %v405
      %407 = vrot.lane.b32.xlu0 %v406, 32
      %v408 = vpop.permute.xlu0 %407
      %vm410 = vcmask 519424
      %411 = vst.msk [vmem:[#allocation2 + $0x18] sm:$0xf] %vm410, %v408
      %v412 = vld [vmem:[%s138 + $0x4] sm:$0xf]
      %v414 = vunpack.c.l.b16 %v412
      %v415 = vpack.c.b16 %v414, %v414
      %v417 = vshrl.u32 %v415, 16
      %v419 = vshll.u32 %v415, 16
      %v421 = vrot.slane %v419, 1
      %v422 = vor.u32 %v417, %v421
      %423 = vrot.lane.b32.xlu0 %v422, 64
      %v424 = vpop.permute.xlu0 %423
      %vm426 = vmand %vm215, %vm196
      %v427 = vld [vmem:[#allocation2 + $0x18] sm:$0xf]
      %v428 = vsel %vm426, %v424, %v427
      %429 = vst [vmem:[#allocation2 + $0x18] sm:$0xf] %v428
      %v430 = vld [vmem:[%s138 + $0x8] sm:$0xf]
      %v432 = vunpack.c.l.b16 %v430
      %v433 = vpack.c.b16 %v432, %v432
      %v435 = vshrl.u32 %v433, 16
      %v437 = vrot.slane %v435, 7
      %v438 = vshll.u32 %v433, 16
      %v440 = vor.u32 %v437, %v438
      %441 = vrot.lane.b32.xlu0 %v440, 96
      %v442 = vpop.permute.xlu0 %441
      %v444 = vld [vmem:[#allocation2 + $0x18] sm:$0xf]
      %v445 = vsel %vm174, %v442, %v444
      %446 = vst [vmem:[#allocation2 + $0x18] sm:$0xf] %v445
      %v447 = vld [vmem:[%s138 + $0x8] sm:$0xf]
      %448 = vst.msk [vmem:[#allocation2 + $0x20] sm:$0xf] %vm179, %v447
      %v449 = vld [vmem:[%s138 + $0x8] sm:$0xf]
      %v451 = vunpack.c.l.b16 %v449
      %v452 = vpack.c.b16 %v451, %v451
      %v454 = vshrl.u32 %v452, 16
      %v456 = vshll.u32 %v452, 16
      %v458 = vrot.slane %v456, 1
      %v459 = vor.u32 %v454, %v458
      %460 = vrot.lane.b32.xlu0 %v459, 32
      %v461 = vpop.permute.xlu0 %460
      %v463 = vld [vmem:[#allocation2 + $0x20] sm:$0xf]
      %v464 = vsel %vm197, %v461, %v463
      %465 = vst [vmem:[#allocation2 + $0x20] sm:$0xf] %v464
      %v466 = vld [vmem:[%s138 + $0xc] sm:$0xf]
      %v468 = vunpack.c.l.b16 %v466
      %v469 = vpack.c.b16 %v468, %v468
      %v471 = vshrl.u32 %v469, 16
      %v473 = vrot.slane %v471, 7
      %v474 = vshll.u32 %v469, 16
      %v476 = vor.u32 %v473, %v474
      %477 = vrot.lane.b32.xlu0 %v476, 64
      %v478 = vpop.permute.xlu0 %477
      %v480 = vld [vmem:[#allocation2 + $0x20] sm:$0xf]
      %v481 = vsel %vm216, %v478, %v480
      %482 = vst [vmem:[#allocation2 + $0x20] sm:$0xf] %v481
      %v483 = vld [vmem:[%s138 + $0xc] sm:$0xf]
      %v485 = vunpack.c.l.b16 %v483
      %v486 = vpack.c.b16 %v485, %v485
      %487 = vrot.lane.b32.xlu0 %v486, 96
      %v488 = vpop.permute.xlu0 %487
      %490 = vst.msk [vmem:[#allocation2 + $0x20] sm:$0xf] %vm227, %v488
      %v491 = vld [vmem:[%s138 + $0xc] sm:$0xf]
      %v493 = vunpack.c.l.b16 %v491
      %v494 = vpack.c.b16 %v493, %v493
      %v496 = vshrl.u32 %v494, 16
      %v498 = vshll.u32 %v494, 16
      %v500 = vrot.slane %v498, 1
      %v501 = vor.u32 %v496, %v500
      %v503 = vld [vmem:[#allocation2 + $0x28] sm:$0xf]
      %v504 = vsel %vm242, %v501, %v503
      %505 = vst [vmem:[#allocation2 + $0x28] sm:$0xf] %v504
      %v506 = vld [vmem:[%s138 + $0x8] sm:$0xf]
      %v508 = vunpack.c.l.b16 %v506
      %v509 = vpack.c.b16 %v508, %v508
      %v511 = vshrl.u32 %v509, 16
      %v513 = vrot.slane %v511, 3
      %v514 = vshll.u32 %v509, 16
      %v516 = vrot.slane %v514, 4
      %v517 = vor.u32 %v513, %v516
      %v519 = vld [vmem:[#allocation2 + $0x18] sm:$0xf0]
      %v520 = vsel %vm261, %v517, %v519
      %521 = vst [vmem:[#allocation2 + $0x18] sm:$0xf0] %v520
      %v522 = vld [vmem:[%s138 + $0x8] sm:$0xf]
      %v524 = vunpack.c.l.b16 %v522
      %v525 = vpack.c.b16 %v524, %v524
      %526 = vrot.lane.b32.xlu0 %v525, 32
      %v527 = vpop.permute.xlu0 %526
      %529 = vst.msk [vmem:[#allocation2 + $0x18] sm:$0xf0] %vm272, %v527
      %v530 = vld [vmem:[%s138 + $0x8] sm:$0xf]
      %v532 = vunpack.c.l.b16 %v530
      %v533 = vpack.c.b16 %v532, %v532
      %v535 = vshrl.u32 %v533, 16
      %v537 = vrot.slane %v535, 4
      %v538 = vshll.u32 %v533, 16
      %v540 = vrot.slane %v538, 5
      %v541 = vor.u32 %v537, %v540
      %542 = vrot.lane.b32.xlu0 %v541, 64
      %v543 = vpop.permute.xlu0 %542
      %v545 = vld [vmem:[#allocation2 + $0x18] sm:$0xf0]
      %v546 = vsel %vm291, %v543, %v545
      %547 = vst [vmem:[#allocation2 + $0x18] sm:$0xf0] %v546
      %v548 = vld [vmem:[%s138 + $0xc] sm:$0xf]
      %v550 = vunpack.c.l.b16 %v548
      %v551 = vpack.c.b16 %v550, %v550
      %v553 = vshrl.u32 %v551, 16
      %v555 = vrot.slane %v553, 3
      %v556 = vshll.u32 %v551, 16
      %v558 = vrot.slane %v556, 4
      %v559 = vor.u32 %v555, %v558
      %560 = vrot.lane.b32.xlu0 %v559, 96
      %v561 = vpop.permute.xlu0 %560
      %v563 = vld [vmem:[#allocation2 + $0x18] sm:$0xf0]
      %v564 = vsel %vm311, %v561, %v563
      %565 = vst [vmem:[#allocation2 + $0x18] sm:$0xf0] %v564
      %v566 = vld [vmem:[%s138 + $0xc] sm:$0xf]
      %v568 = vunpack.c.l.b16 %v566
      %v569 = vpack.c.b16 %v568, %v568
      %571 = vst.msk [vmem:[#allocation2 + $0x20] sm:$0xf0] %vm320, %v569
      %v572 = vld [vmem:[%s138 + $0xc] sm:$0xf]
      %v574 = vunpack.c.l.b16 %v572
      %v575 = vpack.c.b16 %v574, %v574
      %v577 = vshrl.u32 %v575, 16
      %v579 = vrot.slane %v577, 4
      %v580 = vshll.u32 %v575, 16
      %v582 = vrot.slane %v580, 5
      %v583 = vor.u32 %v579, %v582
      %584 = vrot.lane.b32.xlu0 %v583, 32
      %v585 = vpop.permute.xlu0 %584
      %v587 = vld [vmem:[#allocation2 + $0x20] sm:$0xf0]
      %v588 = vsel %vm338, %v585, %v587
      %589 = vst [vmem:[#allocation2 + $0x20] sm:$0xf0] %v588
      %v590 = vld [vmem:[%s138 + $0x10] sm:$0xf]
      %v592 = vunpack.c.l.b16 %v590
      %v593 = vpack.c.b16 %v592, %v592
      %v595 = vshrl.u32 %v593, 16
      %v597 = vrot.slane %v595, 3
      %v598 = vshll.u32 %v593, 16
      %v600 = vrot.slane %v598, 4
      %v601 = vor.u32 %v597, %v600
      %602 = vrot.lane.b32.xlu0 %v601, 64
      %v603 = vpop.permute.xlu0 %602
      %v605 = vld [vmem:[#allocation2 + $0x20] sm:$0xf0]
      %v606 = vsel %vm357, %v603, %v605
      %607 = vst [vmem:[#allocation2 + $0x20] sm:$0xf0] %v606
      %v608 = vld [vmem:[%s138 + $0x10] sm:$0xf]
      %v610 = vunpack.c.l.b16 %v608
      %v611 = vpack.c.b16 %v610, %v610
      %612 = vrot.lane.b32.xlu0 %v611, 96
      %v613 = vpop.permute.xlu0 %612
      %615 = vst.msk [vmem:[#allocation2 + $0x20] sm:$0xf0] %vm368, %v613
      %v616 = vld [vmem:[%s138 + $0x10] sm:$0xf]
      %v618 = vunpack.c.l.b16 %v616
      %v619 = vpack.c.b16 %v618, %v618
      %v621 = vshrl.u32 %v619, 16
      %v623 = vrot.slane %v621, 4
      %v624 = vshll.u32 %v619, 16
      %v626 = vrot.slane %v624, 5
      %v627 = vor.u32 %v623, %v626
      %v629 = vld [vmem:[#allocation2 + $0x28] sm:$0xf0]
      %v630 = vsel %vm383, %v627, %v629
      %631 = vst [vmem:[#allocation2 + $0x28] sm:$0xf0] %v630
      %v632 = vld [vmem:[%s138 + $0xc] sm:$0xf]
      %v634 = vunpack.c.l.b16 %v632
      %v635 = vpack.c.b16 %v634, %v634
      %v637 = vshrl.u32 %v635, 16
      %v639 = vrot.slane %v637, 7
      %v640 = vshll.u32 %v635, 16
      %v642 = vor.u32 %v639, %v640
      %v644 = vld [vmem:[#allocation2 + $0x30] sm:$0xf]
      %v645 = vsel %vm399, %v642, %v644
      %646 = vst [vmem:[#allocation2 + $0x30] sm:$0xf] %v645
      %v647 = vld [vmem:[%s138 + $0xc] sm:$0xf]
      %v649 = vunpack.c.l.b16 %v647
      %v650 = vpack.c.b16 %v649, %v649
      %651 = vrot.lane.b32.xlu0 %v650, 32
      %v652 = vpop.permute.xlu0 %651
      %654 = vst.msk [vmem:[#allocation2 + $0x30] sm:$0xf] %vm410, %v652
      %v655 = vld [vmem:[%s138 + $0xc] sm:$0xf]
      %v657 = vunpack.c.l.b16 %v655
      %v658 = vpack.c.b16 %v657, %v657
      %v660 = vshrl.u32 %v658, 16
      %v662 = vshll.u32 %v658, 16
      %v664 = vrot.slane %v662, 1
      %v665 = vor.u32 %v660, %v664
      %666 = vrot.lane.b32.xlu0 %v665, 64
      %v667 = vpop.permute.xlu0 %666
      %v669 = vld [vmem:[#allocation2 + $0x30] sm:$0xf]
      %v670 = vsel %vm426, %v667, %v669
      %671 = vst [vmem:[#allocation2 + $0x30] sm:$0xf] %v670
      %v672 = vld [vmem:[%s138 + $0x10] sm:$0xf]
      %v674 = vunpack.c.l.b16 %v672
      %v675 = vpack.c.b16 %v674, %v674
      %v677 = vshrl.u32 %v675, 16
      %v679 = vrot.slane %v677, 7
      %v680 = vshll.u32 %v675, 16
      %v682 = vor.u32 %v679, %v680
      %683 = vrot.lane.b32.xlu0 %v682, 96
      %v684 = vpop.permute.xlu0 %683
      %v686 = vld [vmem:[#allocation2 + $0x30] sm:$0xf]
      %v687 = vsel %vm174, %v684, %v686
      %688 = vst [vmem:[#allocation2 + $0x30] sm:$0xf] %v687
      %v689 = vld [vmem:[%s138 + $0x10] sm:$0xf]
      %690 = vst.msk [vmem:[#allocation2 + $0x38] sm:$0xf] %vm179, %v689
      %v691 = vld [vmem:[%s138 + $0x10] sm:$0xf]
      %v693 = vunpack.c.l.b16 %v691
      %v694 = vpack.c.b16 %v693, %v693
      %v696 = vshrl.u32 %v694, 16
      %v698 = vshll.u32 %v694, 16
      %v700 = vrot.slane %v698, 1
      %v701 = vor.u32 %v696, %v700
      %702 = vrot.lane.b32.xlu0 %v701, 32
      %v703 = vpop.permute.xlu0 %702
      %v705 = vld [vmem:[#allocation2 + $0x38] sm:$0xf]
      %v706 = vsel %vm197, %v703, %v705
      %707 = vst [vmem:[#allocation2 + $0x38] sm:$0xf] %v706
      %v708 = vld [vmem:[%s138 + $0x14] sm:$0xf]
      %v710 = vunpack.c.l.b16 %v708
      %v711 = vpack.c.b16 %v710, %v710
      %v713 = vshrl.u32 %v711, 16
      %v715 = vrot.slane %v713, 7
      %v716 = vshll.u32 %v711, 16
      %v718 = vor.u32 %v715, %v716
      %719 = vrot.lane.b32.xlu0 %v718, 64
      %v720 = vpop.permute.xlu0 %719
      %v722 = vld [vmem:[#allocation2 + $0x38] sm:$0xf]
      %v723 = vsel %vm216, %v720, %v722
      %724 = vst [vmem:[#allocation2 + $0x38] sm:$0xf] %v723
      %v725 = vld [vmem:[%s138 + $0x14] sm:$0xf]
      %v727 = vunpack.c.l.b16 %v725
      %v728 = vpack.c.b16 %v727, %v727
      %729 = vrot.lane.b32.xlu0 %v728, 96
      %v730 = vpop.permute.xlu0 %729
      %732 = vst.msk [vmem:[#allocation2 + $0x38] sm:$0xf] %vm227, %v730
      %v733 = vld [vmem:[%s138 + $0x14] sm:$0xf]
      %v735 = vunpack.c.l.b16 %v733
      %v736 = vpack.c.b16 %v735, %v735
      %v738 = vshrl.u32 %v736, 16
      %v740 = vshll.u32 %v736, 16
      %v742 = vrot.slane %v740, 1
      %v743 = vor.u32 %v738, %v742
      %v745 = vld [vmem:[#allocation2 + $0x40] sm:$0xf]
      %v746 = vsel %vm242, %v743, %v745
      %747 = vst [vmem:[#allocation2 + $0x40] sm:$0xf] %v746
      %v748 = vld [vmem:[%s138 + $0x10] sm:$0xf]
      %v750 = vunpack.c.l.b16 %v748
      %v751 = vpack.c.b16 %v750, %v750
      %v753 = vshrl.u32 %v751, 16
      %v755 = vrot.slane %v753, 3
      %v756 = vshll.u32 %v751, 16
      %v758 = vrot.slane %v756, 4
      %v759 = vor.u32 %v755, %v758
      %v761 = vld [vmem:[#allocation2 + $0x30] sm:$0xf0]
      %v762 = vsel %vm261, %v759, %v761
      %763 = vst [vmem:[#allocation2 + $0x30] sm:$0xf0] %v762
      %v764 = vld [vmem:[%s138 + $0x10] sm:$0xf]
      %v766 = vunpack.c.l.b16 %v764
      %v767 = vpack.c.b16 %v766, %v766
      %768 = vrot.lane.b32.xlu0 %v767, 32
      %v769 = vpop.permute.xlu0 %768
      %771 = vst.msk [vmem:[#allocation2 + $0x30] sm:$0xf0] %vm272, %v769
      %v772 = vld [vmem:[%s138 + $0x10] sm:$0xf]
      %v774 = vunpack.c.l.b16 %v772
      %v775 = vpack.c.b16 %v774, %v774
      %v777 = vshrl.u32 %v775, 16
      %v779 = vrot.slane %v777, 4
      %v780 = vshll.u32 %v775, 16
      %v782 = vrot.slane %v780, 5
      %v783 = vor.u32 %v779, %v782
      %784 = vrot.lane.b32.xlu0 %v783, 64
      %v785 = vpop.permute.xlu0 %784
      %v787 = vld [vmem:[#allocation2 + $0x30] sm:$0xf0]
      %v788 = vsel %vm291, %v785, %v787
      %789 = vst [vmem:[#allocation2 + $0x30] sm:$0xf0] %v788
      %v790 = vld [vmem:[%s138 + $0x14] sm:$0xf]
      %v792 = vunpack.c.l.b16 %v790
      %v793 = vpack.c.b16 %v792, %v792
      %v795 = vshrl.u32 %v793, 16
      %v797 = vrot.slane %v795, 3
      %v798 = vshll.u32 %v793, 16
      %v800 = vrot.slane %v798, 4
      %v801 = vor.u32 %v797, %v800
      %802 = vrot.lane.b32.xlu0 %v801, 96
      %v803 = vpop.permute.xlu0 %802
      %v805 = vld [vmem:[#allocation2 + $0x30] sm:$0xf0]
      %v806 = vsel %vm311, %v803, %v805
      %807 = vst [vmem:[#allocation2 + $0x30] sm:$0xf0] %v806
      %v808 = vld [vmem:[%s138 + $0x14] sm:$0xf]
      %v810 = vunpack.c.l.b16 %v808
      %v811 = vpack.c.b16 %v810, %v810
      %813 = vst.msk [vmem:[#allocation2 + $0x38] sm:$0xf0] %vm320, %v811
      %v814 = vld [vmem:[%s138 + $0x14] sm:$0xf]
      %v816 = vunpack.c.l.b16 %v814
      %v817 = vpack.c.b16 %v816, %v816
      %v819 = vshrl.u32 %v817, 16
      %v821 = vrot.slane %v819, 4
      %v822 = vshll.u32 %v817, 16
      %v824 = vrot.slane %v822, 5
      %v825 = vor.u32 %v821, %v824
      %826 = vrot.lane.b32.xlu0 %v825, 32
      %v827 = vpop.permute.xlu0 %826
      %v829 = vld [vmem:[#allocation2 + $0x38] sm:$0xf0]
      %v830 = vsel %vm338, %v827, %v829
      %831 = vst [vmem:[#allocation2 + $0x38] sm:$0xf0] %v830
      %v832 = vld [vmem:[%s138 + $0x18] sm:$0xf]
      %v834 = vunpack.c.l.b16 %v832
      %v835 = vpack.c.b16 %v834, %v834
      %v837 = vshrl.u32 %v835, 16
      %v839 = vrot.slane %v837, 3
      %v840 = vshll.u32 %v835, 16
      %v842 = vrot.slane %v840, 4
      %v843 = vor.u32 %v839, %v842
      %844 = vrot.lane.b32.xlu0 %v843, 64
      %v845 = vpop.permute.xlu0 %844
      %v847 = vld [vmem:[#allocation2 + $0x38] sm:$0xf0]
      %v848 = vsel %vm357, %v845, %v847
      %849 = vst [vmem:[#allocation2 + $0x38] sm:$0xf0] %v848
      %v850 = vld [vmem:[%s138 + $0x18] sm:$0xf]
      %v852 = vunpack.c.l.b16 %v850
      %v853 = vpack.c.b16 %v852, %v852
      %854 = vrot.lane.b32.xlu0 %v853, 96
      %v855 = vpop.permute.xlu0 %854
      %857 = vst.msk [vmem:[#allocation2 + $0x38] sm:$0xf0] %vm368, %v855
      %v858 = vld [vmem:[%s138 + $0x18] sm:$0xf]
      %v860 = vunpack.c.l.b16 %v858
      %v861 = vpack.c.b16 %v860, %v860
      %v863 = vshrl.u32 %v861, 16
      %v865 = vrot.slane %v863, 4
      %v866 = vshll.u32 %v861, 16
      %v868 = vrot.slane %v866, 5
      %v869 = vor.u32 %v865, %v868
      %v871 = vld [vmem:[#allocation2 + $0x40] sm:$0xf0]
      %v872 = vsel %vm383, %v869, %v871
      %873 = vst [vmem:[#allocation2 + $0x40] sm:$0xf0] %v872
      %v874 = vld [vmem:[%s138 + $0x14] sm:$0xf]
      %v876 = vunpack.c.l.b16 %v874
      %v877 = vpack.c.b16 %v876, %v876
      %v879 = vshrl.u32 %v877, 16
      %v881 = vrot.slane %v879, 7
      %v882 = vshll.u32 %v877, 16
      %v884 = vor.u32 %v881, %v882
      %v886 = vld [vmem:[#allocation2 + $0x48] sm:$0xf]
      %v887 = vsel %vm399, %v884, %v886
      %888 = vst [vmem:[#allocation2 + $0x48] sm:$0xf] %v887
      %v889 = vld [vmem:[%s138 + $0x14] sm:$0xf]
      %v891 = vunpack.c.l.b16 %v889
      %v892 = vpack.c.b16 %v891, %v891
      %893 = vrot.lane.b32.xlu0 %v892, 32
      %v894 = vpop.permute.xlu0 %893
      %896 = vst.msk [vmem:[#allocation2 + $0x48] sm:$0xf] %vm410, %v894
      %v897 = vld [vmem:[%s138 + $0x14] sm:$0xf]
      %v899 = vunpack.c.l.b16 %v897
      %v900 = vpack.c.b16 %v899, %v899
      %v902 = vshrl.u32 %v900, 16
      %v904 = vshll.u32 %v900, 16
      %v906 = vrot.slane %v904, 1
      %v907 = vor.u32 %v902, %v906
      %908 = vrot.lane.b32.xlu0 %v907, 64
      %v909 = vpop.permute.xlu0 %908
      %v911 = vld [vmem:[#allocation2 + $0x48] sm:$0xf]
      %v912 = vsel %vm426, %v909, %v911
      %913 = vst [vmem:[#allocation2 + $0x48] sm:$0xf] %v912
      %v914 = vld [vmem:[%s138 + $0x18] sm:$0xf]
      %v916 = vunpack.c.l.b16 %v914
      %v917 = vpack.c.b16 %v916, %v916
      %v919 = vshrl.u32 %v917, 16
      %v921 = vrot.slane %v919, 7
      %v922 = vshll.u32 %v917, 16
      %v924 = vor.u32 %v921, %v922
      %925 = vrot.lane.b32.xlu0 %v924, 96
      %v926 = vpop.permute.xlu0 %925
      %v928 = vld [vmem:[#allocation2 + $0x48] sm:$0xf]
      %v929 = vsel %vm174, %v926, %v928
      %930 = vst [vmem:[#allocation2 + $0x48] sm:$0xf] %v929
      %v931 = vld [vmem:[%s138 + $0x18] sm:$0xf]
      %932 = vst.msk [vmem:[#allocation2 + $0x50] sm:$0xf] %vm179, %v931
      %v933 = vld [vmem:[%s138 + $0x18] sm:$0xf]
      %v935 = vunpack.c.l.b16 %v933
      %v936 = vpack.c.b16 %v935, %v935
      %v938 = vshrl.u32 %v936, 16
      %v940 = vshll.u32 %v936, 16
      %v942 = vrot.slane %v940, 1
      %v943 = vor.u32 %v938, %v942
      %944 = vrot.lane.b32.xlu0 %v943, 32
      %v945 = vpop.permute.xlu0 %944
      %v947 = vld [vmem:[#allocation2 + $0x50] sm:$0xf]
      %v948 = vsel %vm197, %v945, %v947
      %949 = vst [vmem:[#allocation2 + $0x50] sm:$0xf] %v948
      %v950 = vld [vmem:[%s138 + $0x1c] sm:$0xf]
      %v952 = vunpack.c.l.b16 %v950
      %v953 = vpack.c.b16 %v952, %v952
      %v955 = vshrl.u32 %v953, 16
      %v957 = vrot.slane %v955, 7
      %v958 = vshll.u32 %v953, 16
      %v960 = vor.u32 %v957, %v958
      %961 = vrot.lane.b32.xlu0 %v960, 64
      %v962 = vpop.permute.xlu0 %961
      %v964 = vld [vmem:[#allocation2 + $0x50] sm:$0xf]
      %v965 = vsel %vm216, %v962, %v964
      %966 = vst [vmem:[#allocation2 + $0x50] sm:$0xf] %v965
      %v967 = vld [vmem:[%s138 + $0x1c] sm:$0xf]
      %v969 = vunpack.c.l.b16 %v967
      %v970 = vpack.c.b16 %v969, %v969
      %971 = vrot.lane.b32.xlu0 %v970, 96
      %v972 = vpop.permute.xlu0 %971
      %974 = vst.msk [vmem:[#allocation2 + $0x50] sm:$0xf] %vm227, %v972
      %v975 = vld [vmem:[%s138 + $0x1c] sm:$0xf]
      %v977 = vunpack.c.l.b16 %v975
      %v978 = vpack.c.b16 %v977, %v977
      %v980 = vshrl.u32 %v978, 16
      %v982 = vshll.u32 %v978, 16
      %v984 = vrot.slane %v982, 1
      %v985 = vor.u32 %v980, %v984
      %v987 = vld [vmem:[#allocation2 + $0x58] sm:$0xf]
      %v988 = vsel %vm242, %v985, %v987
      %989 = vst [vmem:[#allocation2 + $0x58] sm:$0xf] %v988
      %v990 = vld [vmem:[%s138 + $0x18] sm:$0xf]
      %v992 = vunpack.c.l.b16 %v990
      %v993 = vpack.c.b16 %v992, %v992
      %v995 = vshrl.u32 %v993, 16
      %v997 = vrot.slane %v995, 3
      %v998 = vshll.u32 %v993, 16
      %v1000 = vrot.slane %v998, 4
      %v1001 = vor.u32 %v997, %v1000
      %v1003 = vld [vmem:[#allocation2 + $0x48] sm:$0xf0]
      %v1004 = vsel %vm261, %v1001, %v1003
      %1005 = vst [vmem:[#allocation2 + $0x48] sm:$0xf0] %v1004
      %v1006 = vld [vmem:[%s138 + $0x18] sm:$0xf]
      %v1008 = vunpack.c.l.b16 %v1006
      %v1009 = vpack.c.b16 %v1008, %v1008
      %1010 = vrot.lane.b32.xlu0 %v1009, 32
      %v1011 = vpop.permute.xlu0 %1010
      %1013 = vst.msk [vmem:[#allocation2 + $0x48] sm:$0xf0] %vm272, %v1011
      %v1014 = vld [vmem:[%s138 + $0x18] sm:$0xf]
      %v1016 = vunpack.c.l.b16 %v1014
      %v1017 = vpack.c.b16 %v1016, %v1016
      %v1019 = vshrl.u32 %v1017, 16
      %v1021 = vrot.slane %v1019, 4
      %v1022 = vshll.u32 %v1017, 16
      %v1024 = vrot.slane %v1022, 5
      %v1025 = vor.u32 %v1021, %v1024
      %1026 = vrot.lane.b32.xlu0 %v1025, 64
      %v1027 = vpop.permute.xlu0 %1026
      %v1029 = vld [vmem:[#allocation2 + $0x48] sm:$0xf0]
      %v1030 = vsel %vm291, %v1027, %v1029
      %1031 = vst [vmem:[#allocation2 + $0x48] sm:$0xf0] %v1030
      %v1032 = vld [vmem:[%s138 + $0x1c] sm:$0xf]
      %v1034 = vunpack.c.l.b16 %v1032
      %v1035 = vpack.c.b16 %v1034, %v1034
      %v1037 = vshrl.u32 %v1035, 16
      %v1039 = vrot.slane %v1037, 3
      %v1040 = vshll.u32 %v1035, 16
      %v1042 = vrot.slane %v1040, 4
      %v1043 = vor.u32 %v1039, %v1042
      %1044 = vrot.lane.b32.xlu0 %v1043, 96
      %v1045 = vpop.permute.xlu0 %1044
      %v1047 = vld [vmem:[#allocation2 + $0x48] sm:$0xf0]
      %v1048 = vsel %vm311, %v1045, %v1047
      %1049 = vst [vmem:[#allocation2 + $0x48] sm:$0xf0] %v1048
      %v1050 = vld [vmem:[%s138 + $0x1c] sm:$0xf]
      %v1052 = vunpack.c.l.b16 %v1050
      %v1053 = vpack.c.b16 %v1052, %v1052
      %1055 = vst.msk [vmem:[#allocation2 + $0x50] sm:$0xf0] %vm320, %v1053
      %v1056 = vld [vmem:[%s138 + $0x1c] sm:$0xf]
      %v1058 = vunpack.c.l.b16 %v1056
      %v1059 = vpack.c.b16 %v1058, %v1058
      %v1061 = vshrl.u32 %v1059, 16
      %v1063 = vrot.slane %v1061, 4
      %v1064 = vshll.u32 %v1059, 16
      %v1066 = vrot.slane %v1064, 5
      %v1067 = vor.u32 %v1063, %v1066
      %1068 = vrot.lane.b32.xlu0 %v1067, 32
      %v1069 = vpop.permute.xlu0 %1068
      %v1071 = vld [vmem:[#allocation2 + $0x50] sm:$0xf0]
      %v1072 = vsel %vm338, %v1069, %v1071
      %1073 = vst [vmem:[#allocation2 + $0x50] sm:$0xf0] %v1072
      %v1074 = vld [vmem:[#allocation2] sm:$0xff]
      %v1075 = vld [vmem:[#allocation2 + $0x8] sm:$0xff]
      %v1076 = vld [vmem:[#allocation2 + $0x10] sm:$0xff]
      %v1077 = vld [vmem:[#allocation2 + $0x18] sm:$0xff]
      %v1078 = vld [vmem:[#allocation2 + $0x20] sm:$0xff]
      %v1079 = vld [vmem:[#allocation2 + $0x28] sm:$0xff]
      %v1080 = vld [vmem:[#allocation2 + $0x30] sm:$0xff]
      %v1081 = vld [vmem:[#allocation2 + $0x38] sm:$0xff]
      %v1082 = vld [vmem:[#allocation2 + $0x40] sm:$0xff]
      %v1083 = vld [vmem:[#allocation2 + $0x48] sm:$0xff]
      %v1084 = vld [vmem:[#allocation2 + $0x50] sm:$0xff]
      %v1085 = vld [vmem:[#allocation2 + $0x58] sm:$0xff]
      %v1086 = vld [vmem:[%s1] sm:$0xf]
      %v1087 = vld [vmem:[%s1 + $0x4] sm:$0xf]
      %v1088 = vld [vmem:[%s1 + $0x8] sm:$0xf]
      %v1089 = vld [vmem:[%s1 + $0xc] sm:$0xf]
      %v1090 = vld [vmem:[%s1 + $0x10] sm:$0xf]
      %v1091 = vld [vmem:[%s1 + $0x14] sm:$0xf]
      %v1092 = vld [vmem:[%s1 + $0x18] sm:$0xf]
      %v1093 = vld [vmem:[%s1 + $0x1c] sm:$0xf]
      %v1094 = vld [vmem:[%s1 + $0x20] sm:$0xf]
      %v1095 = vld [vmem:[%s1 + $0x24] sm:$0xf]
      %v1096 = vld [vmem:[%s1 + $0x28] sm:$0xf]
      %v1097 = vld [vmem:[%s1 + $0x2c] sm:$0xf]
      %v1098 = vld [vmem:[%s1 + $0x30] sm:$0xf]
      %v1099 = vld [vmem:[%s1 + $0x34] sm:$0xf]
      %v1100 = vld [vmem:[%s1 + $0x38] sm:$0xf]
      %v1101 = vld [vmem:[%s1 + $0x3c] sm:$0xf]
      %v1102 = vld [vmem:[%s1 + $0x40] sm:$0xf]
      %v1103 = vld [vmem:[%s1 + $0x44] sm:$0xf]
      %v1104 = vld [vmem:[%s1 + $0x48] sm:$0xf]
      %v1105 = vld [vmem:[%s1 + $0x4c] sm:$0xf]
      %v1106 = vld [vmem:[%s1 + $0x50] sm:$0xf]
      %v1107 = vld [vmem:[%s1 + $0x54] sm:$0xf]
      %v1108 = vld [vmem:[%s1 + $0x58] sm:$0xf]
      %v1109 = vld [vmem:[%s1 + $0x5c] sm:$0xf]
      %v1110 = vld [vmem:[%s1 + $0x60] sm:$0xf]
      %v1111 = vld [vmem:[%s1 + $0x64] sm:$0xf]
      %v1112 = vld [vmem:[%s1 + $0x68] sm:$0xf]
      %v1113 = vld [vmem:[%s1 + $0x6c] sm:$0xf]
      %v1114 = vld [vmem:[%s1 + $0x70] sm:$0xf]
      %v1115 = vld [vmem:[%s1 + $0x74] sm:$0xf]
      %v1116 = vld [vmem:[%s1 + $0x78] sm:$0xf]
      %v1117 = vld [vmem:[%s1 + $0x7c] sm:$0xf]
      %v1118 = vld [vmem:[%s1 + $0x80] sm:$0xf]
      %v1119 = vld [vmem:[%s1 + $0x84] sm:$0xf]
      %v1120 = vld [vmem:[%s1 + $0x88] sm:$0xf]
      %v1121 = vld [vmem:[%s1 + $0x8c] sm:$0xf]
      %v1158 = vunpack.c.l.b16 %v1086
      %v1159 = vunpack.c.l.b16 %v1087
      %v1160 = vunpack.c.l.b16 %v1088
      %v1161 = vunpack.c.l.b16 %v1089
      %v1162 = vunpack.c.l.b16 %v1090
      %v1163 = vunpack.c.l.b16 %v1091
      %v1164 = vunpack.c.l.b16 %v1092
      %v1165 = vunpack.c.l.b16 %v1093
      %v1166 = vunpack.c.l.b16 %v1094
      %v1167 = vunpack.c.l.b16 %v1095
      %v1168 = vunpack.c.l.b16 %v1096
      %v1169 = vunpack.c.l.b16 %v1097
      %v1170 = vunpack.c.l.b16 %v1098
      %v1171 = vunpack.c.l.b16 %v1099
      %v1172 = vunpack.c.l.b16 %v1100
      %v1173 = vunpack.c.l.b16 %v1101
      %v1174 = vunpack.c.l.b16 %v1102
      %v1175 = vunpack.c.l.b16 %v1103
      %v1176 = vunpack.c.l.b16 %v1104
      %v1177 = vunpack.c.l.b16 %v1105
      %v1178 = vunpack.c.l.b16 %v1106
      %v1179 = vunpack.c.l.b16 %v1107
      %v1180 = vunpack.c.l.b16 %v1108
      %v1181 = vunpack.c.l.b16 %v1109
      %v1182 = vunpack.c.l.b16 %v1110
      %v1183 = vunpack.c.l.b16 %v1111
      %v1184 = vunpack.c.l.b16 %v1112
      %v1185 = vunpack.c.l.b16 %v1113
      %v1186 = vunpack.c.l.b16 %v1114
      %v1187 = vunpack.c.l.b16 %v1115
      %v1188 = vunpack.c.l.b16 %v1116
      %v1189 = vunpack.c.l.b16 %v1117
      %v1190 = vunpack.c.l.b16 %v1118
      %v1191 = vunpack.c.l.b16 %v1119
      %v1192 = vunpack.c.l.b16 %v1120
      %v1193 = vunpack.c.l.b16 %v1121
      %v1194 = vpack.c.b16 %v1159, %v1158
      %v1195 = vpack.c.b16 %v1161, %v1160
      %v1196 = vpack.c.b16 %v1163, %v1162
      %v1197 = vpack.c.b16 %v1165, %v1164
      %v1198 = vpack.c.b16 %v1167, %v1166
      %v1199 = vpack.c.b16 %v1169, %v1168
      %v1200 = vpack.c.b16 %v1171, %v1170
      %v1201 = vpack.c.b16 %v1173, %v1172
      %v1202 = vpack.c.b16 %v1175, %v1174
      %v1203 = vpack.c.b16 %v1177, %v1176
      %v1204 = vpack.c.b16 %v1179, %v1178
      %v1205 = vpack.c.b16 %v1181, %v1180
      %v1206 = vpack.c.b16 %v1183, %v1182
      %v1207 = vpack.c.b16 %v1185, %v1184
      %v1208 = vpack.c.b16 %v1187, %v1186
      %v1209 = vpack.c.b16 %v1189, %v1188
      %v1210 = vpack.c.b16 %v1191, %v1190
      %v1211 = vpack.c.b16 %v1193, %v1192
      %v1231 = vsel %vm147, %v1076, 0
      %v1234 = vsel %vm147, %v1079, 0
      %v1237 = vsel %vm147, %v1082, 0
      %v1240 = vsel %vm147, %v1085, 0
      %1242 = vmatprep.subr.bf16.mxu0 0
      %1243 = vmatpush1.bf16.msra.mxu0 %v1194
      %1244 = vmatprep.subr.bf16.mxu0 0
      %1245 = vmatpush1.bf16.msra.mxu0 %v1195
      %1246 = vmatprep.subr.bf16.mxu0 0
      %1247 = vmatpush1.bf16.msra.mxu0 %v1196
      %1248 = vmatprep.subr.bf16.mxu0 0
      %1249 = vmatpush1.bf16.msra.mxu0 %v1197
      %1250 = vmatprep.subr.bf16.mxu0 0
      %1251 = vmatpush1.bf16.msra.mxu0 %v1198
      %1252 = vmatprep.subr.bf16.mxu0 0
      %1253 = vmatpush1.bf16.msra.mxu0 %v1199
      %1254 = vmatprep.subr.bf16.mxu0 0
      %1255 = vmatpush1.bf16.msra.mxu0 %v1200
      %1256 = vmatprep.subr.bf16.mxu0 0
      %1257 = vmatpush1.bf16.msra.mxu0 %v1201
      %1258 = vmatprep.subr.bf16.mxu0 0
      %1259 = vmatpush1.bf16.msra.mxu0 %v1202
      %1260 = vmatprep.subr.bf16.mxu0 0
      %1261 = vmatpush1.bf16.msra.mxu0 %v1203
      %1262 = vmatprep.subr.bf16.mxu0 0
      %1263 = vmatpush1.bf16.msra.mxu0 %v1204
      %1264 = vmatprep.subr.bf16.mxu0 0
      %1265 = vmatpush1.bf16.msra.mxu0 %v1205
      %1266 = vmatprep.subr.bf16.mxu0 0
      %1267 = vmatpush1.bf16.msra.mxu0 %v1206
      %1268 = vmatprep.subr.bf16.mxu0 0
      %1269 = vmatpush1.bf16.msra.mxu0 %v1207
      %1270 = vmatprep.subr.bf16.mxu0 0
      %1271 = vmatpush1.bf16.msra.mxu0 %v1208
      %1272 = vmatprep.subr.bf16.mxu0 0
      %1273 = vmatpush1.bf16.msra.mxu0 %v1209
      %1274 = vmatprep.mubr.bf16.mxu0 %v1075
      %1275 = vmatmul.mubr.bf16.gmra.mrb[0].mxu0 %v1074
      %v1276 = vpop.f32.mrb[0].mxu0
      %v1277 = vadd.f32 0.0, %v1276
      %v1278 = vpop.f32.mrb[0].mxu0
      %v1279 = vpop.f32.mrb[0].mxu0
      %v1280 = vadd.f32 0.0, %v1279
      %v1281 = vpop.f32.mrb[0].mxu0
      %1282 = vmatprep.mubr.bf16.mxu0 %v1078
      %1283 = vmatmul.mubr.bf16.gmra.mrb[0].mxu0 %v1077
      %v1284 = vpop.f32.mrb[0].mxu0
      %v1285 = vadd.f32 0.0, %v1284
      %v1286 = vpop.f32.mrb[0].mxu0
      %v1287 = vpop.f32.mrb[0].mxu0
      %v1288 = vadd.f32 0.0, %v1287
      %v1289 = vpop.f32.mrb[0].mxu0
      %1290 = vmatprep.mubr.bf16.mxu0 %v1081
      %1291 = vmatmul.mubr.bf16.gmra.mrb[0].mxu0 %v1080
      %v1292 = vpop.f32.mrb[0].mxu0
      %v1293 = vadd.f32 0.0, %v1292
      %v1294 = vpop.f32.mrb[0].mxu0
      %v1295 = vpop.f32.mrb[0].mxu0
      %v1296 = vadd.f32 0.0, %v1295
      %v1297 = vpop.f32.mrb[0].mxu0
      %1298 = vmatprep.mubr.bf16.mxu0 %v1084
      %1299 = vmatmul.mubr.bf16.gmra.mrb[0].mxu0 %v1083
      %v1300 = vpop.f32.mrb[0].mxu0
      %v1301 = vadd.f32 0.0, %v1300
      %v1302 = vpop.f32.mrb[0].mxu0
      %v1303 = vpop.f32.mrb[0].mxu0
      %v1304 = vadd.f32 0.0, %v1303
      %v1305 = vpop.f32.mrb[0].mxu0
      %1306 = vdwg.mxu0
      %1307 = vmatprep.subr.bf16.mxu0 0
      %1308 = vmatpush1.bf16.msra.mxu0 %v1210
      %1309 = vmatprep.subr.bf16.mxu0 0
      %1310 = vmatpush1.bf16.msra.mxu0 %v1211
      %1311 = vmatprep.subr.bf16.mxu0 0
      %1312 = vmatpush1.bf16.msra.mxu0 0
      %1313 = vmatprep.subr.bf16.mxu0 0
      %1314 = vmatpush1.bf16.msra.mxu0 0
      %1315 = vmatprep.subr.bf16.mxu0 0
      %1316 = vmatpush1.bf16.msra.mxu0 0
      %1317 = vmatprep.subr.bf16.mxu0 0
      %1318 = vmatpush1.bf16.msra.mxu0 0
      %1319 = vmatprep.subr.bf16.mxu0 0
      %1320 = vmatpush1.bf16.msra.mxu0 0
      %1321 = vmatprep.subr.bf16.mxu0 0
      %1322 = vmatpush1.bf16.msra.mxu0 0
      %1323 = vmatprep.subr.bf16.mxu0 0
      %1324 = vmatpush1.bf16.msra.mxu0 0
      %1325 = vmatprep.subr.bf16.mxu0 0
      %1326 = vmatpush1.bf16.msra.mxu0 0
      %1327 = vmatprep.subr.bf16.mxu0 0
      %1328 = vmatpush1.bf16.msra.mxu0 0
      %1329 = vmatprep.subr.bf16.mxu0 0
      %1330 = vmatpush1.bf16.msra.mxu0 0
      %1331 = vmatprep.subr.bf16.mxu0 0
      %1332 = vmatpush1.bf16.msra.mxu0 0
      %1333 = vmatprep.subr.bf16.mxu0 0
      %1334 = vmatpush1.bf16.msra.mxu0 0
      %1335 = vmatprep.subr.bf16.mxu0 0
      %1336 = vmatpush1.bf16.msra.mxu0 0
      %1337 = vmatprep.subr.bf16.mxu0 0
      %1338 = vmatpush1.bf16.msra.mxu0 0
      %1339 = vmatprep.mubr.bf16.mxu0 0
      %1340 = vmatmul.mubr.bf16.gmra.mrb[0].mxu0 %v1231
      %v1341 = vpop.f32.mrb[0].mxu0
      %v1342 = vadd.f32 %v1277, %v1341
      %v1343 = vpop.f32.mrb[0].mxu0
      %v1344 = vpop.f32.mrb[0].mxu0
      %v1345 = vadd.f32 %v1280, %v1344
      %v1346 = vpop.f32.mrb[0].mxu0
      %1347 = vmatprep.mubr.bf16.mxu0 0
      %1348 = vmatmul.mubr.bf16.gmra.mrb[0].mxu0 %v1234
      %v1349 = vpop.f32.mrb[0].mxu0
      %v1350 = vadd.f32 %v1285, %v1349
      %v1351 = vpop.f32.mrb[0].mxu0
      %v1352 = vpop.f32.mrb[0].mxu0
      %v1353 = vadd.f32 %v1288, %v1352
      %v1354 = vpop.f32.mrb[0].mxu0
      %1355 = vmatprep.mubr.bf16.mxu0 0
      %1356 = vmatmul.mubr.bf16.gmra.mrb[0].mxu0 %v1237
      %v1357 = vpop.f32.mrb[0].mxu0
      %v1358 = vadd.f32 %v1293, %v1357
      %v1359 = vpop.f32.mrb[0].mxu0
      %v1360 = vpop.f32.mrb[0].mxu0
      %v1361 = vadd.f32 %v1296, %v1360
      %v1362 = vpop.f32.mrb[0].mxu0
      %1363 = vmatprep.mubr.bf16.mxu0 0
      %1364 = vmatmul.mubr.bf16.gmra.mrb[0].mxu0 %v1240
      %v1365 = vpop.f32.mrb[0].mxu0
      %v1366 = vadd.f32 %v1301, %v1365
      %v1367 = vpop.f32.mrb[0].mxu0
      %v1368 = vpop.f32.mrb[0].mxu0
      %v1369 = vadd.f32 %v1304, %v1368
      %v1370 = vpop.f32.mrb[0].mxu0
      %1371 = vdwg.mxu0
      %v1372 = vsel %vm147, %v1342, 0.0
      %v1373 = vsel %vm147, %v1345, 0.0
      %v1374 = vadd.f32 %v1372, %v1373
      %v1375 = vsel %vm147, %v1350, 0.0
      %v1376 = vadd.f32 %v1374, %v1375
      %v1377 = vsel %vm147, %v1353, 0.0
      %v1378 = vadd.f32 %v1376, %v1377
      %v1379 = vsel %vm147, %v1358, 0.0
      %v1380 = vadd.f32 %v1378, %v1379
      %v1381 = vsel %vm147, %v1361, 0.0
      %v1382 = vadd.f32 %v1380, %v1381
      %v1383 = vsel %vm147, %v1366, 0.0
      %v1384 = vadd.f32 %v1382, %v1383
      %v1385 = vsel %vm147, %v1369, 0.0
      %v1386 = vadd.f32 %v1384, %v1385
      %v1387 = vrot.slane %v1386, 4
      %v1388 = vadd.f32 %v1386, %v1387
      %v1389 = vrot.slane %v1388, 2
      %v1390 = vadd.f32 %v1388, %v1389
      %v1391 = vrot.slane %v1390, 1
      %v1392 = vadd.f32 %v1390, %v1391
      %v1393 = vmul.f32 %v1392, 0.015625
      %v1394 = vsub.f32 %v1342, %v1393
      %v1395 = vsub.f32 %v1345, %v1393
      %v1396 = vsub.f32 %v1350, %v1393
      %v1397 = vsub.f32 %v1353, %v1393
      %v1398 = vsub.f32 %v1358, %v1393
      %v1399 = vsub.f32 %v1361, %v1393
      %v1400 = vsub.f32 %v1366, %v1393
      %v1401 = vsub.f32 %v1369, %v1393
      %v1402 = vmul.f32 %v1394, %v1394
      %v1403 = vmul.f32 %v1395, %v1395
      %v1404 = vmul.f32 %v1396, %v1396
      %v1405 = vmul.f32 %v1397, %v1397
      %v1406 = vmul.f32 %v1398, %v1398
      %v1407 = vmul.f32 %v1399, %v1399
      %v1408 = vmul.f32 %v1400, %v1400
      %v1409 = vmul.f32 %v1401, %v1401
      %v1410 = vsel %vm147, %v1402, 0.0
      %v1411 = vsel %vm147, %v1403, 0.0
      %v1412 = vadd.f32 %v1410, %v1411
      %v1413 = vsel %vm147, %v1404, 0.0
      %v1414 = vadd.f32 %v1412, %v1413
      %v1415 = vsel %vm147, %v1405, 0.0
      %v1416 = vadd.f32 %v1414, %v1415
      %v1417 = vsel %vm147, %v1406, 0.0
      %v1418 = vadd.f32 %v1416, %v1417
      %v1419 = vsel %vm147, %v1407, 0.0
      %v1420 = vadd.f32 %v1418, %v1419
      %v1421 = vsel %vm147, %v1408, 0.0
      %v1422 = vadd.f32 %v1420, %v1421
      %v1423 = vsel %vm147, %v1409, 0.0
      %v1424 = vadd.f32 %v1422, %v1423
      %v1425 = vrot.slane %v1424, 4
      %v1426 = vadd.f32 %v1424, %v1425
      %v1427 = vrot.slane %v1426, 2
      %v1428 = vadd.f32 %v1426, %v1427
      %v1429 = vrot.slane %v1428, 1
      %v1430 = vadd.f32 %v1428, %v1429
      %v1431 = vmul.f32 %v1430, 0.015625
      %v1432 = vadd.f32 %v1431, 1e-05
      %v1433 = vrsqrt.pop %v1432
      %v1434 = vmul.f32 %v1394, %v1433
      %v1435 = vmul.f32 %v1395, %v1433
      %v1436 = vmul.f32 %v1396, %v1433
      %v1437 = vmul.f32 %v1397, %v1433
      %v1438 = vmul.f32 %v1398, %v1433
      %v1439 = vmul.f32 %v1399, %v1433
      %v1440 = vmul.f32 %v1400, %v1433
      %v1441 = vmul.f32 %v1401, %v1433
      %vm1442 = vcmp.gt.f32.partialorder %v1434, 0.0
      %vm1443 = vcmp.gt.f32.partialorder %v1435, 0.0
      %vm1444 = vcmp.gt.f32.partialorder %v1436, 0.0
      %vm1445 = vcmp.gt.f32.partialorder %v1437, 0.0
      %vm1446 = vcmp.gt.f32.partialorder %v1438, 0.0
      %vm1447 = vcmp.gt.f32.partialorder %v1439, 0.0
      %vm1448 = vcmp.gt.f32.partialorder %v1440, 0.0
      %vm1449 = vcmp.gt.f32.partialorder %v1441, 0.0
      %v1450 = vmul.f32 %v1434, 0.2
      %v1451 = vmul.f32 %v1435, 0.2
      %v1452 = vmul.f32 %v1436, 0.2
      %v1453 = vmul.f32 %v1437, 0.2
      %v1454 = vmul.f32 %v1438, 0.2
      %v1455 = vmul.f32 %v1439, 0.2
      %v1456 = vmul.f32 %v1440, 0.2
      %v1457 = vmul.f32 %v1441, 0.2
      %v1458 = vsel %vm1442, %v1434, %v1450
      %v1459 = vsel %vm1443, %v1435, %v1451
      %v1460 = vsel %vm1444, %v1436, %v1452
      %v1461 = vsel %vm1445, %v1437, %v1453
      %v1462 = vsel %vm1446, %v1438, %v1454
      %v1463 = vsel %vm1447, %v1439, %v1455
      %v1464 = vsel %vm1448, %v1440, %v1456
      %v1465 = vsel %vm1449, %v1441, %v1457
      %v1466 = vpack.c.bf16 %v1459, %v1458
      %v1467 = vpack.c.bf16 %v1461, %v1460
      %v1468 = vpack.c.bf16 %v1463, %v1462
      %v1469 = vpack.c.bf16 %v1465, %v1464
      %v1474 = vunpack.c.l.b16 %v1466
      %v1475 = vunpack.c.h.b16 %v1466
      %v1476 = vunpack.c.l.b16 %v1467
      %v1477 = vunpack.c.h.b16 %v1467
      %v1478 = vunpack.c.l.b16 %v1468
      %v1479 = vunpack.c.h.b16 %v1468
      %v1480 = vunpack.c.l.b16 %v1469
      %v1481 = vunpack.c.h.b16 %v1469
      %v1482 = vpack.c.b16 %v1474, %v1474
      %v1483 = vpack.c.b16 %v1475, %v1475
      %v1484 = vpack.c.b16 %v1476, %v1476
      %v1485 = vpack.c.b16 %v1477, %v1477
      %v1486 = vpack.c.b16 %v1478, %v1478
      %v1487 = vpack.c.b16 %v1479, %v1479
      %v1488 = vpack.c.b16 %v1480, %v1480
      %v1489 = vpack.c.b16 %v1481, %v1481
      %1498 = vst.msk [vmem:[%s143] sm:$0xf] %vm179, %v1482
      %1499 = vst.msk [vmem:[%s143 + $0x4] sm:$0xf] %vm179, %v1483
      %1500 = vst.msk [vmem:[%s143 + $0x8] sm:$0xf] %vm179, %v1484
      %1501 = vst.msk [vmem:[%s143 + $0xc] sm:$0xf] %vm179, %v1485
      %1502 = vst.msk [vmem:[%s143 + $0x10] sm:$0xf] %vm179, %v1486
      %1503 = vst.msk [vmem:[%s143 + $0x14] sm:$0xf] %vm179, %v1487
      %1504 = vst.msk [vmem:[%s143 + $0x18] sm:$0xf] %vm179, %v1488
      %1505 = vst.msk [vmem:[%s143 + $0x1c] sm:$0xf] %vm179, %v1489
      %p1506 = scmp.lt.s32.totalorder %s13, 1
      %s1507 = scalar_select %p1506, %s13, 1
      %s1508 = smul.addr %s1507, 8
      %s1509 = smul.addr %s1508, 4
      %s1510 = scalar_lea.vmem %s2, %s1509
      // Predicated region
      $region29: #{trans_unet_down_forward.4} parent=27 // pred_check
        %p1511 = pneg %p78
      $region30: #{trans_unet_down_forward.4} parent=27 // pred_check_branch
        %1513 = sbr.rel (%p1511) target = $region32
      $region31: #{trans_unet_down_forward.4} parent=27 // pred_region
        _
      $region32: #{trans_unet_down_forward.4} parent=27 // pred_fallthru
        _
    $region28: #{trans_unet_down_forward.4} parent=5 // pred_fallthru
      _
    %p1514 = scmp.le.s32.totalorder 2, %s8
    // Predicated region
    $region33: #{trans_unet_down_forward.4} parent=5 // pred_check
      %p1515 = pneg %p1514
    $region34: #{trans_unet_down_forward.4} parent=5 // pred_check_branch
      %1517 = sbr.rel (%p1515) target = $region36
    $region35: #{trans_unet_down_forward.4} parent=5 // pred_region
      %s1518 = ssub.s32 %s8, 2
      // Predicated region
      $region37: #{trans_unet_down_forward.4} parent=35 // pred_check
        %p1519 = pneg %p84
      $region38: #{trans_unet_down_forward.4} parent=35 // pred_check_branch
        %1521 = sbr.rel (%p1519) target = $region40
      $region39: #{trans_unet_down_forward.4} parent=35 // pred_region
        %p1522 = scmp.lt.s32.totalorder %s14, 1
        %s1523 = scalar_select %p1522, %s14, 1
        %s1524 = smul.addr %s1523, 8
        %s1525 = smul.addr %s1524, 4
        %s1526 = scalar_lea.vmem %s2, %s1525
      $region40: #{trans_unet_down_forward.4} parent=35 // pred_fallthru
        _
    $region36: #{trans_unet_down_forward.4} parent=5 // pred_fallthru
      _
  $region6: #{trans_unet_down_forward.4} parent=0 // loop_footer
    %s12 = sadd.s32 1, %s8
  $region7: #{trans_unet_down_forward.4} parent=0 // loop_footer_branch
    %7 = sbr.rel target = $region3
  $region8: #{trans_unet_down_forward.4} parent=0 // loop_exit
    _

</llo_original>
